<compile_context>
chip_gen: v7x
topology: tpu7x:2x2x1
jax: 0.10.0
libtpu: 0.0.40
codegen_flags: <defaults>
</compile_context>

<pallas_src>
import math

import jax
import jax.numpy as jnp
from jax.experimental import pallas as pl
from jax.experimental.pallas import tpu as pltpu

# ----------------------------- model config ---------------------------------
C = 32             # out_channels
HEADS = 4          # heads  (C % HEADS == 0)
D = C // HEADS     # per-head dim
NUM_LAYERS = 2
ED_M, ED_P = 3, 5  # edge_feature_dims = (mol_edge_dim, prot_edge_dim)
FM, FP = 9, 11     # raw node feature dims (LazyLinear / -1 resolved here)

WSLAB = 2 * C      # weight-slab lane width (fused lin_l|lin_r block)
DLANES = 16        # data-slab lane width (>= node counts / feat dims / edge dims)
NEG = 1e30         # additive mask bias magnitude


def _pad8(r):
    return -(-r // 8) * 8


# --------------------------- parameter packing -------------------------------
def pack_params(params):
    """Pack every weight of the whole net into one [R, WSLAB] f32 slab.

    Each block starts at an 8-aligned row offset; layout[name] = (offset, rows)
    (static Python ints) is closed over by the kernel for static ref slicing."""
    blocks, layout = [], {}
    off = 0

    def add(name, arr):
        nonlocal off
        arr = jnp.asarray(arr, jnp.float32)
        r, c = arr.shape
        rp = _pad8(r)
        blocks.append(jnp.pad(arr, ((0, rp - r), (0, WSLAB - c))))
        layout[name] = (off, r)
        off += rp

    def add_gat(pre, p):
        in_dim = p["wl"].shape[0]
        in_pad = _pad8(in_dim)
        ed = p["we"].shape[0]
        # fused projection [in_pad, 2C] = [lin_l | lin_r]
        wlr = jnp.concatenate(
            [jnp.pad(p["wl"], ((0, in_pad - in_dim), (0, 0))),
             jnp.pad(p["wr"], ((0, in_pad - in_dim), (0, 0)))], axis=1)
        add(pre + "wlr", wlr)
        # all per-block biases in one row group: row0 = bl|br, row1 = bg|blin
        add(pre + "bias",
            jnp.concatenate(
                [jnp.concatenate([p["bl"], p["br"]], axis=1),
                 jnp.concatenate([p["bg"], p["blin"]], axis=1)], axis=0))
        # lin_edge padded to the data-slab lane width (K = DLANES matmul)
        add(pre + "we", jnp.pad(p["we"], ((0, DLANES - ed), (0, 0))))
        # attention folded with head expansion:
        #   att_rep[hD:(h+1)D, hD:(h+1)D] = att[h][:, None] (replicated columns)
        att_rep = jnp.zeros((C, C), jnp.float32)
        for h in range(HEADS):
            att_rep = att_rep.at[h * D:(h + 1) * D, h * D:(h + 1) * D].set(
                jnp.broadcast_to(p["att"][h][:, None], (D, D)))
        add(pre + "att", att_rep)
        add(pre + "wlin", p["wlin"])

    for i, lp in enumerate(params["mol"]):
        add_gat(f"mol{i}_", lp)
    for i, lp in enumerate(params["prot"]):
        add_gat(f"prot{i}_", lp)
    fin = params["fin"]
    add("fin_w1a", fin["w1"][:C])
    add("fin_w1b", fin["w1"][C:])
    add("fin_bw", jnp.concatenate([fin["b1"], fin["w2"].T], axis=0))  # row0=b1, row1=w2^T
    return jnp.concatenate(blocks, axis=0), layout


# ------------------------------ data packing ---------------------------------
def pack_data(mg_x, mg_mask, mg_eflat, ohm, pg_x, pg_mask, pg_eflat, ohp):
    """Pack all dense per-graph inputs into one [R, DLANES] f32 slab (1 DMA)."""
    blocks, layout = [], {}
    off = 0

    def add(name, arr):
        nonlocal off
        arr = jnp.asarray(arr, jnp.float32)
        r, c = arr.shape
        rp = _pad8(r)
        blocks.append(jnp.pad(arr, ((0, rp - r), (0, DLANES - c))))
        layout[name] = (off, r, c)
        off += rp

    add("mol_x", mg_x)
    add("mol_mask", mg_mask)
    add("mol_e", mg_eflat)
    add("mol_oh", ohm)
    add("prot_x", pg_x)
    add("prot_mask", pg_mask)
    add("prot_e", pg_eflat)
    add("prot_oh", ohp)
    return jnp.concatenate(blocks, axis=0), layout


# ------------------------------ fused kernel ---------------------------------
def _make_fused_kernel(p_layout, d_layout):
    def kernel(data_ref, prm_ref, out_ref, xm_s, xp_s):
        def ld(name, cols=WSLAB):          # static slab slice -> small VMEM load
            o, r = p_layout[name]
            return prm_ref[o:o + r, :cols]

        def dload(name, full=True):
            o, r, c = d_layout[name]
            return data_ref[o:o + r, :(DLANES if full else c)]

        def elu(v):
            return jnp.where(v > 0, v, jnp.exp(jnp.minimum(v, 0.0)) - 1.0)

        def gat_block(x, bias, eflat, pre):
            n = bias.shape[0]
            wlr = ld(pre + "wlr")          # [in_pad, 2C]  (lin_l | lin_r fused)
            brow = ld(pre + "bias")        # [2, 2C]: row0 = bl|br, row1 = bg|blin
            we = ld(pre + "we", C)         # [DLANES, C]
            att_rep = ld(pre + "att", C)   # [C, C] block-diag, head-replicated
            wlin = ld(pre + "wlin", C)     # [C, C]

            # single fused projection -> xl | xr
            xlr = jnp.dot(x, wlr, preferred_element_type=jnp.float32) + brow[0:1, :]
            xl, xr = xlr[:, :C], xlr[:, C:]
            ep = jnp.dot(eflat, we,
                         preferred_element_type=jnp.float32).reshape(n, n, C)

            # z[i, j, :] = x_r[i] + x_l[j] + lin_edge(e_{j->i}); LeakyReLU(0.2)
            z = xr[:, None, :] + xl[None, :, :] + ep
            z = jnp.maximum(z, 0.2 * z)

            # head-replicated logits (+ additive mask bias) and softmax over
            # sources, directly in the [n, n, C] layout (alpha == aexp)
            s = jnp.dot(z.reshape(n * n, C), att_rep,
                        preferred_element_type=jnp.float32).reshape(n, n, C)
            s = s + bias[:, :, None]
            m = jnp.max(s, axis=1, keepdims=True)
            p = jnp.exp(s - m)                            # masked -> exact 0
            den = jnp.sum(p, axis=1, keepdims=True)       # self-loop => > 0
            alpha = p * pl.reciprocal(den, approx=True)   # [n, n, C]

            gat = jnp.sum(alpha * xl[None, :, :], axis=1) + brow[1:2, :C]
            # residual block: x = gat + elu(Linear(gat))
            lin = jnp.dot(gat, wlin, preferred_element_type=jnp.float32) + brow[1:2, C:]
            return gat + elu(lin)

        # ------------------------- molecule chain ---------------------------
        xm = dload("mol_x")                                   # [NM, DLANES]
        mbias = (dload("mol_mask", full=False) - 1.0) * NEG   # [NM, NM] 0 / -1e30
        me = dload("mol_e")                                   # [NM*NM, DLANES]
        for i in range(NUM_LAYERS):
            xm_s[...] = gat_block(xm, mbias, me, f"mol{i}_")
            xm = xm_s[...]            # bound live ranges at block boundaries

        # ------------------------- protein chain ----------------------------
        # TODO(synk): v7x: run this chain on the second TensorCore in parallel.
        xp = dload("prot_x")
        pbias = (dload("prot_mask", full=False) - 1.0) * NEG
        pe = dload("prot_e")
        for i in range(NUM_LAYERS):
            xp_s[...] = gat_block(xp, pbias, pe, f"prot{i}_")
            xp = xp_s[...]

        # global_add_pool (one-hot matmul) + final MLP head
        mg_pool = jnp.dot(dload("mol_oh", full=False), xm,
                          preferred_element_type=jnp.float32)     # [B, C]
        pg_pool = jnp.dot(dload("prot_oh", full=False), xp,
                          preferred_element_type=jnp.float32)     # [B, C]
        bw = ld("fin_bw", C)                                      # row0=b1, row1=w2^T
        h = (jnp.dot(mg_pool, ld("fin_w1a", C), preferred_element_type=jnp.float32)
             + jnp.dot(pg_pool, ld("fin_w1b", C), preferred_element_type=jnp.float32)
             + bw[0:1, :])
        h = elu(h)
        y = jnp.sum(h * bw[1:2, :], axis=-1, keepdims=True)   # Linear(C->1, no bias)
        out_ref[...] = 1.0 / (1.0 + jnp.exp(-y))              # exact sigmoid ([B,1])

    return kernel


# ------------------------------ wrapper --------------------------------------
_VMEM = pl.BlockSpec(memory_space=pltpu.MemorySpace.VMEM)


def graphnn_forward(data, slab, d_layout, p_layout, nm, npn, batch):
    return pl.pallas_call(
        _make_fused_kernel(p_layout, d_layout),
        out_shape=jax.ShapeDtypeStruct((batch, 1), jnp.float32),
        in_specs=[_VMEM, _VMEM],
        out_specs=_VMEM,
        scratch_shapes=[pltpu.VMEM((nm, C), jnp.float32),
                        pltpu.VMEM((npn, C), jnp.float32)],
    )(data, slab)


# ------------------------- plain-JAX glue helpers ----------------------------
def densify_graph(edge_index, edge_attr, num_nodes):
    """Dense adjacency mask + dense edge-attribute slab, with PyG-style self
    loops (fill_value='mean' = mean of incoming edge attrs per target node)."""
    src, dst = edge_index[0], edge_index[1]
    ed = edge_attr.shape[1]
    counts = jnp.zeros((num_nodes,), jnp.float32).at[dst].add(1.0)
    sums = jnp.zeros((num_nodes, ed), jnp.float32).at[dst].add(edge_attr)
    loop_attr = sums / jnp.maximum(counts[:, None], 1.0)   # 0 if no incoming edges

    mask = jnp.zeros((num_nodes, num_nodes), jnp.float32).at[dst, src].set(1.0)
    mask = jnp.maximum(mask, jnp.eye(num_nodes, dtype=jnp.float32))   # add self loops

    dense = jnp.zeros((num_nodes, num_nodes, ed), jnp.float32).at[dst, src].set(edge_attr)
    diag = jnp.arange(num_nodes)
    dense = dense.at[diag, diag].set(loop_attr)
    return mask, dense.reshape(num_nodes * num_nodes, ed)


def ring_edges(sizes):
    src, dst = [], []
    off = 0
    for n in sizes:
        for k in range(n):
            a, b = off + k, off + (k + 1) % n
            src += [a, b]
            dst += [b, a]
        off += n
    return jnp.array([src, dst], dtype=jnp.int32)


def make_gat_layer_params(key, in_dim, edge_dim):
    ks = jax.random.split(key, 9)

    def w(k, shp, fan):
        return jax.random.normal(k, shp, jnp.float32) * (1.0 / math.sqrt(fan))

    return dict(
        wl=w(ks[0], (in_dim, C), in_dim), bl=w(ks[1], (1, C), C),
        wr=w(ks[2], (in_dim, C), in_dim), br=w(ks[3], (1, C), C),
        we=w(ks[4], (edge_dim, C), edge_dim),
        att=w(ks[5], (HEADS, D), D),
        bg=w(ks[6], (1, C), C),
        wlin=w(ks[7], (C, C), C), blin=w(ks[8], (1, C), C),
    )


# --------------------------- pure-JAX reference ------------------------------
def gat_block_ref(x, mask, eflat, p):
    n = x.shape[0]
    xl = x @ p["wl"] + p["bl"]
    xr = x @ p["wr"] + p["br"]
    ep = (eflat @ p["we"]).reshape(n, n, C)
    z = xr[:, None, :] + xl[None, :, :] + ep
    z = jnp.where(z > 0, z, 0.2 * z)
    score = jnp.sum(z.reshape(n, n, HEADS, D) * p["att"].reshape(1, 1, HEADS, D), -1)
    m3 = mask[:, :, None] > 0
    score = jnp.where(m3, score, -1e30)
    score = score - score.max(axis=1, keepdims=True)
    pexp = jnp.where(m3, jnp.exp(score), 0.0)
    alpha = pexp / pexp.sum(axis=1, keepdims=True)
    out = jnp.einsum("ijh,jhd->ihd", alpha, xl.reshape(n, HEADS, D)).reshape(n, C)
    gat = out + p["bg"]
    lin = gat @ p["wlin"] + p["blin"]
    return gat + jnp.where(lin > 0, lin, jnp.exp(jnp.minimum(lin, 0.0)) - 1.0)


def forward_ref(mg_x, mg_mask, mg_eflat, pg_x, pg_mask, pg_eflat, ohm, ohp, params):
    x, y = mg_x, pg_x
    for lp in params["mol"]:
        x = gat_block_ref(x, mg_mask, mg_eflat, lp)
    for lp in params["prot"]:
        y = gat_block_ref(y, pg_mask, pg_eflat, lp)
    xx = jnp.concatenate([ohm @ x, ohp @ y], axis=-1)
    h = xx @ params["fin"]["w1"] + params["fin"]["b1"]
    h = jnp.where(h > 0, h, jnp.exp(jnp.minimum(h, 0.0)) - 1.0)
    return jax.nn.sigmoid(h @ params["fin"]["w2"])


# ------------------------------------ main -----------------------------------
if __name__ == "__main__":
    key = jax.random.PRNGKey(0)
    k_data, k_mol, k_prot, k_fin = jax.random.split(key, 4)

    # two molecule graphs (9 + 7 nodes) and two protein graphs (5 + 3 nodes)
    mg_sizes, pg_sizes = (9, 7), (5, 3)
    NM, NP, B = sum(mg_sizes), sum(pg_sizes), 2
    assert max(NM, NP, FM, FP, ED_M, ED_P) <= DLANES

    kd = jax.random.split(k_data, 4)
    mg_x = jax.random.normal(kd[0], (NM, FM), jnp.float32)
    pg_x = jax.random.normal(kd[1], (NP, FP), jnp.float32)
    mg_edge_index = ring_edges(mg_sizes)
    pg_edge_index = ring_edges(pg_sizes)
    mg_edge_attr = jax.random.normal(kd[2], (mg_edge_index.shape[1], ED_M), jnp.float32)
    pg_edge_attr = jax.random.normal(kd[3], (pg_edge_index.shape[1], ED_P), jnp.float32)
    mg_batch = jnp.array(sum(([g] * s for g, s in enumerate(mg_sizes)), []), jnp.int32)
    pg_batch = jnp.array(sum(([g] * s for g, s in enumerate(pg_sizes)), []), jnp.int32)

    # dense message-passing structures (glue)
    mg_mask, mg_eflat = densify_graph(mg_edge_index, mg_edge_attr, NM)
    pg_mask, pg_eflat = densify_graph(pg_edge_index, pg_edge_attr, NP)
    ohm = jax.nn.one_hot(mg_batch, B, dtype=jnp.float32).T   # [B, NM] for global_add_pool
    ohp = jax.nn.one_hot(pg_batch, B, dtype=jnp.float32).T   # [B, NP]

    # deterministic parameter init (synthetic; no checkpoint load)
    mol_keys = jax.random.split(k_mol, NUM_LAYERS)
    prot_keys = jax.random.split(k_prot, NUM_LAYERS)
    params = dict(
        mol=[make_gat_layer_params(mol_keys[i], FM if i == 0 else C, ED_M)
             for i in range(NUM_LAYERS)],
        prot=[make_gat_layer_params(prot_keys[i], FP if i == 0 else C, ED_P)
              for i in range(NUM_LAYERS)],
    )
    kf = jax.random.split(k_fin, 3)
    params["fin"] = dict(
        w1=jax.random.normal(kf[0], (2 * C, C), jnp.float32) / math.sqrt(2 * C),
        b1=jax.random.normal(kf[1], (1, C), jnp.float32) / math.sqrt(C),
        w2=jax.random.normal(kf[2], (C, 1), jnp.float32) / math.sqrt(C),
    )

    # kernel-side inputs: one packed parameter slab + one packed data slab
    slab, p_layout = pack_params(params)
    data, d_layout = pack_data(mg_x, mg_mask, mg_eflat, ohm,
                               pg_x, pg_mask, pg_eflat, ohp)

    out = graphnn_forward(data, slab, d_layout, p_layout, NM, NP, B)
    out = jax.block_until_ready(out)

    ref = forward_ref(mg_x, mg_mask, mg_eflat, pg_x, pg_mask, pg_eflat,
                      ohm, ohp, params)
    assert out.shape == (B, 1)
    # tolerance accounts for the approx-reciprocal (EUP fast path) used for the
    # softmax denominators vs. the exact-divide reference (sigmoid is exact now)
    assert bool(jnp.max(jnp.abs(out - ref)) < 2e-2), "kernel/reference mismatch"

    print("KERNEL_OK")
</pallas_src>

<mosaic_0001>
module attributes {stable_mosaic.version = 11 : i64} {
  func.func @kernel(%arg0: memref<384x16xf32, #tpu.memory_space<vmem>>, %arg1: memref<520x64xf32, #tpu.memory_space<vmem>>, %arg2: memref<2x1xf32, #tpu.memory_space<vmem>>, %arg3: memref<16x32xf32, #tpu.memory_space<vmem>>, %arg4: memref<8x32xf32, #tpu.memory_space<vmem>>) attributes {dimension_semantics = [], scalar_prefetch = 0 : i64, scratch_operands = 2 : i64, tpu.core_type = #tpu.core_type<tc>} {
    %c0 = arith.constant 0 : index
    %c0_0 = arith.constant 0 : index
    %0 = vector.load %arg0[%c0, %c0_0] : memref<384x16xf32, #tpu.memory_space<vmem>>, vector<16x16xf32>
    %c16 = arith.constant 16 : index
    %c0_1 = arith.constant 0 : index
    %1 = vector.load %arg0[%c16, %c0_1] : memref<384x16xf32, #tpu.memory_space<vmem>>, vector<16x16xf32>
    %cst = arith.constant 1.000000e+00 : f32
    %2 = vector.broadcast %cst : f32 to vector<16x16xf32>
    %3 = arith.subf %1, %2 : vector<16x16xf32>
    %cst_2 = arith.constant 1.000000e+30 : f32
    %4 = vector.broadcast %cst_2 : f32 to vector<16x16xf32>
    %5 = arith.mulf %3, %4 : vector<16x16xf32>
    %c32 = arith.constant 32 : index
    %c0_3 = arith.constant 0 : index
    %6 = vector.load %arg0[%c32, %c0_3] : memref<384x16xf32, #tpu.memory_space<vmem>>, vector<256x16xf32>
    %c0_4 = arith.constant 0 : index
    %c0_5 = arith.constant 0 : index
    %7 = vector.load %arg1[%c0_4, %c0_5] : memref<520x64xf32, #tpu.memory_space<vmem>>, vector<16x64xf32>
    %c16_6 = arith.constant 16 : index
    %c0_7 = arith.constant 0 : index
    %8 = vector.load %arg1[%c16_6, %c0_7] : memref<520x64xf32, #tpu.memory_space<vmem>>, vector<2x64xf32>
    %c24 = arith.constant 24 : index
    %c0_8 = arith.constant 0 : index
    %9 = vector.load %arg1[%c24, %c0_8] : memref<520x64xf32, #tpu.memory_space<vmem>>, vector<16x32xf32>
    %c40 = arith.constant 40 : index
    %c0_9 = arith.constant 0 : index
    %10 = vector.load %arg1[%c40, %c0_9] : memref<520x64xf32, #tpu.memory_space<vmem>>, vector<32x32xf32>
    %c72 = arith.constant 72 : index
    %c0_10 = arith.constant 0 : index
    %11 = vector.load %arg1[%c72, %c0_10] : memref<520x64xf32, #tpu.memory_space<vmem>>, vector<32x32xf32>
    %cst_11 = arith.constant dense<0.000000e+00> : vector<16x64xf32>
    %12 = tpu.matmul %0, %7, %cst_11 {dimension_numbers = #tpu.dot_dimension_numbers<[1], [0], [0], [1], [0, 0, 1, 1], [], []>} : vector<16x16xf32>, vector<16x64xf32>, vector<16x64xf32> -> vector<16x64xf32>
    %13 = vector.extract_strided_slice %8 {offsets = [0, 0], sizes = [1, 64], strides = [1, 1]} : vector<2x64xf32> to vector<1x64xf32>
    %14 = vector.broadcast %13 : vector<1x64xf32> to vector<16x64xf32>
    %15 = arith.addf %12, %14 : vector<16x64xf32>
    %16 = vector.extract_strided_slice %15 {offsets = [0, 0], sizes = [16, 32], strides = [1, 1]} : vector<16x64xf32> to vector<16x32xf32>
    %17 = vector.extract_strided_slice %15 {offsets = [0, 32], sizes = [16, 32], strides = [1, 1]} : vector<16x64xf32> to vector<16x32xf32>
    %cst_12 = arith.constant dense<0.000000e+00> : vector<256x32xf32>
    %18 = tpu.matmul %6, %9, %cst_12 {dimension_numbers = #tpu.dot_dimension_numbers<[1], [0], [0], [1], [0, 0, 1, 1], [], []>} : vector<256x16xf32>, vector<16x32xf32>, vector<256x32xf32> -> vector<256x32xf32>
    %19 = vector.shape_cast %18 : vector<256x32xf32> to vector<16x16x32xf32>
    %20 = vector.shape_cast %17 : vector<16x32xf32> to vector<16x1x32xf32>
    %21 = vector.shape_cast %16 : vector<16x32xf32> to vector<1x16x32xf32>
    %22 = vector.broadcast %20 : vector<16x1x32xf32> to vector<16x16x32xf32>
    %23 = vector.broadcast %21 : vector<1x16x32xf32> to vector<16x16x32xf32>
    %24 = arith.addf %22, %23 : vector<16x16x32xf32>
    %25 = arith.addf %24, %19 : vector<16x16x32xf32>
    %cst_13 = arith.constant 2.000000e-01 : f32
    %26 = vector.broadcast %cst_13 : f32 to vector<16x16x32xf32>
    %27 = arith.mulf %26, %25 : vector<16x16x32xf32>
    %28 = arith.maximumf %25, %27 : vector<16x16x32xf32>
    %29 = vector.shape_cast %28 : vector<16x16x32xf32> to vector<256x32xf32>
    %cst_14 = arith.constant dense<0.000000e+00> : vector<256x32xf32>
    %30 = tpu.matmul %29, %10, %cst_14 {dimension_numbers = #tpu.dot_dimension_numbers<[1], [0], [0], [1], [0, 0, 1, 1], [], []>} : vector<256x32xf32>, vector<32x32xf32>, vector<256x32xf32> -> vector<256x32xf32>
    %31 = vector.shape_cast %30 : vector<256x32xf32> to vector<16x16x32xf32>
    %32 = vector.shape_cast %5 : vector<16x16xf32> to vector<16x16x1xf32>
    %33 = vector.broadcast %32 : vector<16x16x1xf32> to vector<16x16x32xf32>
    %34 = arith.addf %31, %33 : vector<16x16x32xf32>
    %cst_15 = arith.constant dense<0xFF800000> : vector<16x32xf32>
    %35 = vector.multi_reduction <maximumf>, %34, %cst_15 [1] : vector<16x16x32xf32> to vector<16x32xf32>
    %36 = vector.shape_cast %35 : vector<16x32xf32> to vector<16x1x32xf32>
    %37 = vector.broadcast %36 : vector<16x1x32xf32> to vector<16x16x32xf32>
    %38 = arith.subf %34, %37 : vector<16x16x32xf32>
    %39 = math.exp %38 : vector<16x16x32xf32>
    %cst_16 = arith.constant dense<0.000000e+00> : vector<16x32xf32>
    %40 = vector.multi_reduction <add>, %39, %cst_16 [1] : vector<16x16x32xf32> to vector<16x32xf32>
    %41 = vector.shape_cast %40 : vector<16x32xf32> to vector<16x1x32xf32>
    %42 = tpu.reciprocal %41 {approx = true} : vector<16x1x32xf32> -> vector<16x1x32xf32>
    %43 = vector.broadcast %42 : vector<16x1x32xf32> to vector<16x16x32xf32>
    %44 = arith.mulf %39, %43 : vector<16x16x32xf32>
    %45 = vector.shape_cast %16 : vector<16x32xf32> to vector<1x16x32xf32>
    %46 = vector.broadcast %45 : vector<1x16x32xf32> to vector<16x16x32xf32>
    %47 = arith.mulf %44, %46 : vector<16x16x32xf32>
    %cst_17 = arith.constant dense<0.000000e+00> : vector<16x32xf32>
    %48 = vector.multi_reduction <add>, %47, %cst_17 [1] : vector<16x16x32xf32> to vector<16x32xf32>
    %49 = vector.extract_strided_slice %8 {offsets = [1, 0], sizes = [1, 32], strides = [1, 1]} : vector<2x64xf32> to vector<1x32xf32>
    %50 = vector.broadcast %49 : vector<1x32xf32> to vector<16x32xf32>
    %51 = arith.addf %48, %50 : vector<16x32xf32>
    %cst_18 = arith.constant dense<0.000000e+00> : vector<16x32xf32>
    %52 = tpu.matmul %51, %11, %cst_18 {dimension_numbers = #tpu.dot_dimension_numbers<[1], [0], [0], [1], [0, 0, 1, 1], [], []>} : vector<16x32xf32>, vector<32x32xf32>, vector<16x32xf32> -> vector<16x32xf32>
    %53 = vector.extract_strided_slice %8 {offsets = [1, 32], sizes = [1, 32], strides = [1, 1]} : vector<2x64xf32> to vector<1x32xf32>
    %54 = vector.broadcast %53 : vector<1x32xf32> to vector<16x32xf32>
    %55 = arith.addf %52, %54 : vector<16x32xf32>
    %cst_19 = arith.constant 0.000000e+00 : f32
    %56 = vector.broadcast %cst_19 : f32 to vector<16x32xf32>
    %57 = arith.cmpf ogt, %55, %56 : vector<16x32xf32>
    %cst_20 = arith.constant 0.000000e+00 : f32
    %58 = vector.broadcast %cst_20 : f32 to vector<16x32xf32>
    %59 = arith.minimumf %55, %58 : vector<16x32xf32>
    %60 = math.exp %59 : vector<16x32xf32>
    %cst_21 = arith.constant 1.000000e+00 : f32
    %61 = vector.broadcast %cst_21 : f32 to vector<16x32xf32>
    %62 = arith.subf %60, %61 : vector<16x32xf32>
    %63 = arith.select %57, %55, %62 : vector<16x32xi1>, vector<16x32xf32>
    %64 = arith.addf %51, %63 : vector<16x32xf32>
    %c0_22 = arith.constant 0 : index
    %c0_23 = arith.constant 0 : index
    %65 = vector.load %arg3[%c0_22, %c0_23] : memref<16x32xf32, #tpu.memory_space<vmem>>, vector<16x32xf32>
    tpu.vector_store %arg3[%c0_22, %c0_23], %64 {strides = array<i32>} : memref<16x32xf32, #tpu.memory_space<vmem>>, vector<16x32xf32>,
    %c0_24 = arith.constant 0 : index
    %c0_25 = arith.constant 0 : index
    %66 = vector.load %arg3[%c0_24, %c0_25] : memref<16x32xf32, #tpu.memory_space<vmem>>, vector<16x32xf32>
    %c104 = arith.constant 104 : index
    %c0_26 = arith.constant 0 : index
    %67 = vector.load %arg1[%c104, %c0_26] : memref<520x64xf32, #tpu.memory_space<vmem>>, vector<32x64xf32>
    %c136 = arith.constant 136 : index
    %c0_27 = arith.constant 0 : index
    %68 = vector.load %arg1[%c136, %c0_27] : memref<520x64xf32, #tpu.memory_space<vmem>>, vector<2x64xf32>
    %c144 = arith.constant 144 : index
    %c0_28 = arith.constant 0 : index
    %69 = vector.load %arg1[%c144, %c0_28] : memref<520x64xf32, #tpu.memory_space<vmem>>, vector<16x32xf32>
    %c160 = arith.constant 160 : index
    %c0_29 = arith.constant 0 : index
    %70 = vector.load %arg1[%c160, %c0_29] : memref<520x64xf32, #tpu.memory_space<vmem>>, vector<32x32xf32>
    %c192 = arith.constant 192 : index
    %c0_30 = arith.constant 0 : index
    %71 = vector.load %arg1[%c192, %c0_30] : memref<520x64xf32, #tpu.memory_space<vmem>>, vector<32x32xf32>
    %cst_31 = arith.constant dense<0.000000e+00> : vector<16x64xf32>
    %72 = tpu.matmul %66, %67, %cst_31 {dimension_numbers = #tpu.dot_dimension_numbers<[1], [0], [0], [1], [0, 0, 1, 1], [], []>} : vector<16x32xf32>, vector<32x64xf32>, vector<16x64xf32> -> vector<16x64xf32>
    %73 = vector.extract_strided_slice %68 {offsets = [0, 0], sizes = [1, 64], strides = [1, 1]} : vector<2x64xf32> to vector<1x64xf32>
    %74 = vector.broadcast %73 : vector<1x64xf32> to vector<16x64xf32>
    %75 = arith.addf %72, %74 : vector<16x64xf32>
    %76 = vector.extract_strided_slice %75 {offsets = [0, 0], sizes = [16, 32], strides = [1, 1]} : vector<16x64xf32> to vector<16x32xf32>
    %77 = vector.extract_strided_slice %75 {offsets = [0, 32], sizes = [16, 32], strides = [1, 1]} : vector<16x64xf32> to vector<16x32xf32>
    %cst_32 = arith.constant dense<0.000000e+00> : vector<256x32xf32>
    %78 = tpu.matmul %6, %69, %cst_32 {dimension_numbers = #tpu.dot_dimension_numbers<[1], [0], [0], [1], [0, 0, 1, 1], [], []>} : vector<256x16xf32>, vector<16x32xf32>, vector<256x32xf32> -> vector<256x32xf32>
    %79 = vector.shape_cast %78 : vector<256x32xf32> to vector<16x16x32xf32>
    %80 = vector.shape_cast %77 : vector<16x32xf32> to vector<16x1x32xf32>
    %81 = vector.shape_cast %76 : vector<16x32xf32> to vector<1x16x32xf32>
    %82 = vector.broadcast %80 : vector<16x1x32xf32> to vector<16x16x32xf32>
    %83 = vector.broadcast %81 : vector<1x16x32xf32> to vector<16x16x32xf32>
    %84 = arith.addf %82, %83 : vector<16x16x32xf32>
    %85 = arith.addf %84, %79 : vector<16x16x32xf32>
    %cst_33 = arith.constant 2.000000e-01 : f32
    %86 = vector.broadcast %cst_33 : f32 to vector<16x16x32xf32>
    %87 = arith.mulf %86, %85 : vector<16x16x32xf32>
    %88 = arith.maximumf %85, %87 : vector<16x16x32xf32>
    %89 = vector.shape_cast %88 : vector<16x16x32xf32> to vector<256x32xf32>
    %cst_34 = arith.constant dense<0.000000e+00> : vector<256x32xf32>
    %90 = tpu.matmul %89, %70, %cst_34 {dimension_numbers = #tpu.dot_dimension_numbers<[1], [0], [0], [1], [0, 0, 1, 1], [], []>} : vector<256x32xf32>, vector<32x32xf32>, vector<256x32xf32> -> vector<256x32xf32>
    %91 = vector.shape_cast %90 : vector<256x32xf32> to vector<16x16x32xf32>
    %92 = vector.shape_cast %5 : vector<16x16xf32> to vector<16x16x1xf32>
    %93 = vector.broadcast %92 : vector<16x16x1xf32> to vector<16x16x32xf32>
    %94 = arith.addf %91, %93 : vector<16x16x32xf32>
    %cst_35 = arith.constant dense<0xFF800000> : vector<16x32xf32>
    %95 = vector.multi_reduction <maximumf>, %94, %cst_35 [1] : vector<16x16x32xf32> to vector<16x32xf32>
    %96 = vector.shape_cast %95 : vector<16x32xf32> to vector<16x1x32xf32>
    %97 = vector.broadcast %96 : vector<16x1x32xf32> to vector<16x16x32xf32>
    %98 = arith.subf %94, %97 : vector<16x16x32xf32>
    %99 = math.exp %98 : vector<16x16x32xf32>
    %cst_36 = arith.constant dense<0.000000e+00> : vector<16x32xf32>
    %100 = vector.multi_reduction <add>, %99, %cst_36 [1] : vector<16x16x32xf32> to vector<16x32xf32>
    %101 = vector.shape_cast %100 : vector<16x32xf32> to vector<16x1x32xf32>
    %102 = tpu.reciprocal %101 {approx = true} : vector<16x1x32xf32> -> vector<16x1x32xf32>
    %103 = vector.broadcast %102 : vector<16x1x32xf32> to vector<16x16x32xf32>
    %104 = arith.mulf %99, %103 : vector<16x16x32xf32>
    %105 = vector.shape_cast %76 : vector<16x32xf32> to vector<1x16x32xf32>
    %106 = vector.broadcast %105 : vector<1x16x32xf32> to vector<16x16x32xf32>
    %107 = arith.mulf %104, %106 : vector<16x16x32xf32>
    %cst_37 = arith.constant dense<0.000000e+00> : vector<16x32xf32>
    %108 = vector.multi_reduction <add>, %107, %cst_37 [1] : vector<16x16x32xf32> to vector<16x32xf32>
    %109 = vector.extract_strided_slice %68 {offsets = [1, 0], sizes = [1, 32], strides = [1, 1]} : vector<2x64xf32> to vector<1x32xf32>
    %110 = vector.broadcast %109 : vector<1x32xf32> to vector<16x32xf32>
    %111 = arith.addf %108, %110 : vector<16x32xf32>
    %cst_38 = arith.constant dense<0.000000e+00> : vector<16x32xf32>
    %112 = tpu.matmul %111, %71, %cst_38 {dimension_numbers = #tpu.dot_dimension_numbers<[1], [0], [0], [1], [0, 0, 1, 1], [], []>} : vector<16x32xf32>, vector<32x32xf32>, vector<16x32xf32> -> vector<16x32xf32>
    %113 = vector.extract_strided_slice %68 {offsets = [1, 32], sizes = [1, 32], strides = [1, 1]} : vector<2x64xf32> to vector<1x32xf32>
    %114 = vector.broadcast %113 : vector<1x32xf32> to vector<16x32xf32>
    %115 = arith.addf %112, %114 : vector<16x32xf32>
    %cst_39 = arith.constant 0.000000e+00 : f32
    %116 = vector.broadcast %cst_39 : f32 to vector<16x32xf32>
    %117 = arith.cmpf ogt, %115, %116 : vector<16x32xf32>
    %cst_40 = arith.constant 0.000000e+00 : f32
    %118 = vector.broadcast %cst_40 : f32 to vector<16x32xf32>
    %119 = arith.minimumf %115, %118 : vector<16x32xf32>
    %120 = math.exp %119 : vector<16x32xf32>
    %cst_41 = arith.constant 1.000000e+00 : f32
    %121 = vector.broadcast %cst_41 : f32 to vector<16x32xf32>
    %122 = arith.subf %120, %121 : vector<16x32xf32>
    %123 = arith.select %117, %115, %122 : vector<16x32xi1>, vector<16x32xf32>
    %124 = arith.addf %111, %123 : vector<16x32xf32>
    %c0_42 = arith.constant 0 : index
    %c0_43 = arith.constant 0 : index
    %125 = vector.load %arg3[%c0_42, %c0_43] : memref<16x32xf32, #tpu.memory_space<vmem>>, vector<16x32xf32>
    tpu.vector_store %arg3[%c0_42, %c0_43], %124 {strides = array<i32>} : memref<16x32xf32, #tpu.memory_space<vmem>>, vector<16x32xf32>,
    %c0_44 = arith.constant 0 : index
    %c0_45 = arith.constant 0 : index
    %126 = vector.load %arg3[%c0_44, %c0_45] : memref<16x32xf32, #tpu.memory_space<vmem>>, vector<16x32xf32>
    %c296 = arith.constant 296 : index
    %c0_46 = arith.constant 0 : index
    %127 = vector.load %arg0[%c296, %c0_46] : memref<384x16xf32, #tpu.memory_space<vmem>>, vector<8x16xf32>
    %c304 = arith.constant 304 : index
    %c0_47 = arith.constant 0 : index
    %128 = vector.load %arg0[%c304, %c0_47] : memref<384x16xf32, #tpu.memory_space<vmem>>, vector<8x8xf32>
    %cst_48 = arith.constant 1.000000e+00 : f32
    %129 = vector.broadcast %cst_48 : f32 to vector<8x8xf32>
    %130 = arith.subf %128, %129 : vector<8x8xf32>
    %cst_49 = arith.constant 1.000000e+30 : f32
    %131 = vector.broadcast %cst_49 : f32 to vector<8x8xf32>
    %132 = arith.mulf %130, %131 : vector<8x8xf32>
    %c312 = arith.constant 312 : index
    %c0_50 = arith.constant 0 : index
    %133 = vector.load %arg0[%c312, %c0_50] : memref<384x16xf32, #tpu.memory_space<vmem>>, vector<64x16xf32>
    %c224 = arith.constant 224 : index
    %c0_51 = arith.constant 0 : index
    %134 = vector.load %arg1[%c224, %c0_51] : memref<520x64xf32, #tpu.memory_space<vmem>>, vector<16x64xf32>
    %c240 = arith.constant 240 : index
    %c0_52 = arith.constant 0 : index
    %135 = vector.load %arg1[%c240, %c0_52] : memref<520x64xf32, #tpu.memory_space<vmem>>, vector<2x64xf32>
    %c248 = arith.constant 248 : index
    %c0_53 = arith.constant 0 : index
    %136 = vector.load %arg1[%c248, %c0_53] : memref<520x64xf32, #tpu.memory_space<vmem>>, vector<16x32xf32>
    %c264 = arith.constant 264 : index
    %c0_54 = arith.constant 0 : index
    %137 = vector.load %arg1[%c264, %c0_54] : memref<520x64xf32, #tpu.memory_space<vmem>>, vector<32x32xf32>
    %c296_55 = arith.constant 296 : index
    %c0_56 = arith.constant 0 : index
    %138 = vector.load %arg1[%c296_55, %c0_56] : memref<520x64xf32, #tpu.memory_space<vmem>>, vector<32x32xf32>
    %cst_57 = arith.constant dense<0.000000e+00> : vector<8x64xf32>
    %139 = tpu.matmul %127, %134, %cst_57 {dimension_numbers = #tpu.dot_dimension_numbers<[1], [0], [0], [1], [0, 0, 1, 1], [], []>} : vector<8x16xf32>, vector<16x64xf32>, vector<8x64xf32> -> vector<8x64xf32>
    %140 = vector.extract_strided_slice %135 {offsets = [0, 0], sizes = [1, 64], strides = [1, 1]} : vector<2x64xf32> to vector<1x64xf32>
    %141 = vector.broadcast %140 : vector<1x64xf32> to vector<8x64xf32>
    %142 = arith.addf %139, %141 : vector<8x64xf32>
    %143 = vector.extract_strided_slice %142 {offsets = [0, 0], sizes = [8, 32], strides = [1, 1]} : vector<8x64xf32> to vector<8x32xf32>
    %144 = vector.extract_strided_slice %142 {offsets = [0, 32], sizes = [8, 32], strides = [1, 1]} : vector<8x64xf32> to vector<8x32xf32>
    %cst_58 = arith.constant dense<0.000000e+00> : vector<64x32xf32>
    %145 = tpu.matmul %133, %136, %cst_58 {dimension_numbers = #tpu.dot_dimension_numbers<[1], [0], [0], [1], [0, 0, 1, 1], [], []>} : vector<64x16xf32>, vector<16x32xf32>, vector<64x32xf32> -> vector<64x32xf32>
    %146 = vector.shape_cast %145 : vector<64x32xf32> to vector<8x8x32xf32>
    %147 = vector.shape_cast %144 : vector<8x32xf32> to vector<8x1x32xf32>
    %148 = vector.shape_cast %143 : vector<8x32xf32> to vector<1x8x32xf32>
    %149 = vector.broadcast %147 : vector<8x1x32xf32> to vector<8x8x32xf32>
    %150 = vector.broadcast %148 : vector<1x8x32xf32> to vector<8x8x32xf32>
    %151 = arith.addf %149, %150 : vector<8x8x32xf32>
    %152 = arith.addf %151, %146 : vector<8x8x32xf32>
    %cst_59 = arith.constant 2.000000e-01 : f32
    %153 = vector.broadcast %cst_59 : f32 to vector<8x8x32xf32>
    %154 = arith.mulf %153, %152 : vector<8x8x32xf32>
    %155 = arith.maximumf %152, %154 : vector<8x8x32xf32>
    %156 = vector.shape_cast %155 : vector<8x8x32xf32> to vector<64x32xf32>
    %cst_60 = arith.constant dense<0.000000e+00> : vector<64x32xf32>
    %157 = tpu.matmul %156, %137, %cst_60 {dimension_numbers = #tpu.dot_dimension_numbers<[1], [0], [0], [1], [0, 0, 1, 1], [], []>} : vector<64x32xf32>, vector<32x32xf32>, vector<64x32xf32> -> vector<64x32xf32>
    %158 = vector.shape_cast %157 : vector<64x32xf32> to vector<8x8x32xf32>
    %159 = vector.shape_cast %132 : vector<8x8xf32> to vector<8x8x1xf32>
    %160 = vector.broadcast %159 : vector<8x8x1xf32> to vector<8x8x32xf32>
    %161 = arith.addf %158, %160 : vector<8x8x32xf32>
    %cst_61 = arith.constant dense<0xFF800000> : vector<8x32xf32>
    %162 = vector.multi_reduction <maximumf>, %161, %cst_61 [1] : vector<8x8x32xf32> to vector<8x32xf32>
    %163 = vector.shape_cast %162 : vector<8x32xf32> to vector<8x1x32xf32>
    %164 = vector.broadcast %163 : vector<8x1x32xf32> to vector<8x8x32xf32>
    %165 = arith.subf %161, %164 : vector<8x8x32xf32>
    %166 = math.exp %165 : vector<8x8x32xf32>
    %cst_62 = arith.constant dense<0.000000e+00> : vector<8x32xf32>
    %167 = vector.multi_reduction <add>, %166, %cst_62 [1] : vector<8x8x32xf32> to vector<8x32xf32>
    %168 = vector.shape_cast %167 : vector<8x32xf32> to vector<8x1x32xf32>
    %169 = tpu.reciprocal %168 {approx = true} : vector<8x1x32xf32> -> vector<8x1x32xf32>
    %170 = vector.broadcast %169 : vector<8x1x32xf32> to vector<8x8x32xf32>
    %171 = arith.mulf %166, %170 : vector<8x8x32xf32>
    %172 = vector.shape_cast %143 : vector<8x32xf32> to vector<1x8x32xf32>
    %173 = vector.broadcast %172 : vector<1x8x32xf32> to vector<8x8x32xf32>
    %174 = arith.mulf %171, %173 : vector<8x8x32xf32>
    %cst_63 = arith.constant dense<0.000000e+00> : vector<8x32xf32>
    %175 = vector.multi_reduction <add>, %174, %cst_63 [1] : vector<8x8x32xf32> to vector<8x32xf32>
    %176 = vector.extract_strided_slice %135 {offsets = [1, 0], sizes = [1, 32], strides = [1, 1]} : vector<2x64xf32> to vector<1x32xf32>
    %177 = vector.broadcast %176 : vector<1x32xf32> to vector<8x32xf32>
    %178 = arith.addf %175, %177 : vector<8x32xf32>
    %cst_64 = arith.constant dense<0.000000e+00> : vector<8x32xf32>
    %179 = tpu.matmul %178, %138, %cst_64 {dimension_numbers = #tpu.dot_dimension_numbers<[1], [0], [0], [1], [0, 0, 1, 1], [], []>} : vector<8x32xf32>, vector<32x32xf32>, vector<8x32xf32> -> vector<8x32xf32>
    %180 = vector.extract_strided_slice %135 {offsets = [1, 32], sizes = [1, 32], strides = [1, 1]} : vector<2x64xf32> to vector<1x32xf32>
    %181 = vector.broadcast %180 : vector<1x32xf32> to vector<8x32xf32>
    %182 = arith.addf %179, %181 : vector<8x32xf32>
    %cst_65 = arith.constant 0.000000e+00 : f32
    %183 = vector.broadcast %cst_65 : f32 to vector<8x32xf32>
    %184 = arith.cmpf ogt, %182, %183 : vector<8x32xf32>
    %cst_66 = arith.constant 0.000000e+00 : f32
    %185 = vector.broadcast %cst_66 : f32 to vector<8x32xf32>
    %186 = arith.minimumf %182, %185 : vector<8x32xf32>
    %187 = math.exp %186 : vector<8x32xf32>
    %cst_67 = arith.constant 1.000000e+00 : f32
    %188 = vector.broadcast %cst_67 : f32 to vector<8x32xf32>
    %189 = arith.subf %187, %188 : vector<8x32xf32>
    %190 = arith.select %184, %182, %189 : vector<8x32xi1>, vector<8x32xf32>
    %191 = arith.addf %178, %190 : vector<8x32xf32>
    %c0_68 = arith.constant 0 : index
    %c0_69 = arith.constant 0 : index
    %192 = vector.load %arg4[%c0_68, %c0_69] : memref<8x32xf32, #tpu.memory_space<vmem>>, vector<8x32xf32>
    tpu.vector_store %arg4[%c0_68, %c0_69], %191 {strides = array<i32>} : memref<8x32xf32, #tpu.memory_space<vmem>>, vector<8x32xf32>,
    %c0_70 = arith.constant 0 : index
    %c0_71 = arith.constant 0 : index
    %193 = vector.load %arg4[%c0_70, %c0_71] : memref<8x32xf32, #tpu.memory_space<vmem>>, vector<8x32xf32>
    %c328 = arith.constant 328 : index
    %c0_72 = arith.constant 0 : index
    %194 = vector.load %arg1[%c328, %c0_72] : memref<520x64xf32, #tpu.memory_space<vmem>>, vector<32x64xf32>
    %c360 = arith.constant 360 : index
    %c0_73 = arith.constant 0 : index
    %195 = vector.load %arg1[%c360, %c0_73] : memref<520x64xf32, #tpu.memory_space<vmem>>, vector<2x64xf32>
    %c368 = arith.constant 368 : index
    %c0_74 = arith.constant 0 : index
    %196 = vector.load %arg1[%c368, %c0_74] : memref<520x64xf32, #tpu.memory_space<vmem>>, vector<16x32xf32>
    %c384 = arith.constant 384 : index
    %c0_75 = arith.constant 0 : index
    %197 = vector.load %arg1[%c384, %c0_75] : memref<520x64xf32, #tpu.memory_space<vmem>>, vector<32x32xf32>
    %c416 = arith.constant 416 : index
    %c0_76 = arith.constant 0 : index
    %198 = vector.load %arg1[%c416, %c0_76] : memref<520x64xf32, #tpu.memory_space<vmem>>, vector<32x32xf32>
    %cst_77 = arith.constant dense<0.000000e+00> : vector<8x64xf32>
    %199 = tpu.matmul %193, %194, %cst_77 {dimension_numbers = #tpu.dot_dimension_numbers<[1], [0], [0], [1], [0, 0, 1, 1], [], []>} : vector<8x32xf32>, vector<32x64xf32>, vector<8x64xf32> -> vector<8x64xf32>
    %200 = vector.extract_strided_slice %195 {offsets = [0, 0], sizes = [1, 64], strides = [1, 1]} : vector<2x64xf32> to vector<1x64xf32>
    %201 = vector.broadcast %200 : vector<1x64xf32> to vector<8x64xf32>
    %202 = arith.addf %199, %201 : vector<8x64xf32>
    %203 = vector.extract_strided_slice %202 {offsets = [0, 0], sizes = [8, 32], strides = [1, 1]} : vector<8x64xf32> to vector<8x32xf32>
    %204 = vector.extract_strided_slice %202 {offsets = [0, 32], sizes = [8, 32], strides = [1, 1]} : vector<8x64xf32> to vector<8x32xf32>
    %cst_78 = arith.constant dense<0.000000e+00> : vector<64x32xf32>
    %205 = tpu.matmul %133, %196, %cst_78 {dimension_numbers = #tpu.dot_dimension_numbers<[1], [0], [0], [1], [0, 0, 1, 1], [], []>} : vector<64x16xf32>, vector<16x32xf32>, vector<64x32xf32> -> vector<64x32xf32>
    %206 = vector.shape_cast %205 : vector<64x32xf32> to vector<8x8x32xf32>
    %207 = vector.shape_cast %204 : vector<8x32xf32> to vector<8x1x32xf32>
    %208 = vector.shape_cast %203 : vector<8x32xf32> to vector<1x8x32xf32>
    %209 = vector.broadcast %207 : vector<8x1x32xf32> to vector<8x8x32xf32>
    %210 = vector.broadcast %208 : vector<1x8x32xf32> to vector<8x8x32xf32>
    %211 = arith.addf %209, %210 : vector<8x8x32xf32>
    %212 = arith.addf %211, %206 : vector<8x8x32xf32>
    %cst_79 = arith.constant 2.000000e-01 : f32
    %213 = vector.broadcast %cst_79 : f32 to vector<8x8x32xf32>
    %214 = arith.mulf %213, %212 : vector<8x8x32xf32>
    %215 = arith.maximumf %212, %214 : vector<8x8x32xf32>
    %216 = vector.shape_cast %215 : vector<8x8x32xf32> to vector<64x32xf32>
    %cst_80 = arith.constant dense<0.000000e+00> : vector<64x32xf32>
    %217 = tpu.matmul %216, %197, %cst_80 {dimension_numbers = #tpu.dot_dimension_numbers<[1], [0], [0], [1], [0, 0, 1, 1], [], []>} : vector<64x32xf32>, vector<32x32xf32>, vector<64x32xf32> -> vector<64x32xf32>
    %218 = vector.shape_cast %217 : vector<64x32xf32> to vector<8x8x32xf32>
    %219 = vector.shape_cast %132 : vector<8x8xf32> to vector<8x8x1xf32>
    %220 = vector.broadcast %219 : vector<8x8x1xf32> to vector<8x8x32xf32>
    %221 = arith.addf %218, %220 : vector<8x8x32xf32>
    %cst_81 = arith.constant dense<0xFF800000> : vector<8x32xf32>
    %222 = vector.multi_reduction <maximumf>, %221, %cst_81 [1] : vector<8x8x32xf32> to vector<8x32xf32>
    %223 = vector.shape_cast %222 : vector<8x32xf32> to vector<8x1x32xf32>
    %224 = vector.broadcast %223 : vector<8x1x32xf32> to vector<8x8x32xf32>
    %225 = arith.subf %221, %224 : vector<8x8x32xf32>
    %226 = math.exp %225 : vector<8x8x32xf32>
    %cst_82 = arith.constant dense<0.000000e+00> : vector<8x32xf32>
    %227 = vector.multi_reduction <add>, %226, %cst_82 [1] : vector<8x8x32xf32> to vector<8x32xf32>
    %228 = vector.shape_cast %227 : vector<8x32xf32> to vector<8x1x32xf32>
    %229 = tpu.reciprocal %228 {approx = true} : vector<8x1x32xf32> -> vector<8x1x32xf32>
    %230 = vector.broadcast %229 : vector<8x1x32xf32> to vector<8x8x32xf32>
    %231 = arith.mulf %226, %230 : vector<8x8x32xf32>
    %232 = vector.shape_cast %203 : vector<8x32xf32> to vector<1x8x32xf32>
    %233 = vector.broadcast %232 : vector<1x8x32xf32> to vector<8x8x32xf32>
    %234 = arith.mulf %231, %233 : vector<8x8x32xf32>
    %cst_83 = arith.constant dense<0.000000e+00> : vector<8x32xf32>
    %235 = vector.multi_reduction <add>, %234, %cst_83 [1] : vector<8x8x32xf32> to vector<8x32xf32>
    %236 = vector.extract_strided_slice %195 {offsets = [1, 0], sizes = [1, 32], strides = [1, 1]} : vector<2x64xf32> to vector<1x32xf32>
    %237 = vector.broadcast %236 : vector<1x32xf32> to vector<8x32xf32>
    %238 = arith.addf %235, %237 : vector<8x32xf32>
    %cst_84 = arith.constant dense<0.000000e+00> : vector<8x32xf32>
    %239 = tpu.matmul %238, %198, %cst_84 {dimension_numbers = #tpu.dot_dimension_numbers<[1], [0], [0], [1], [0, 0, 1, 1], [], []>} : vector<8x32xf32>, vector<32x32xf32>, vector<8x32xf32> -> vector<8x32xf32>
    %240 = vector.extract_strided_slice %195 {offsets = [1, 32], sizes = [1, 32], strides = [1, 1]} : vector<2x64xf32> to vector<1x32xf32>
    %241 = vector.broadcast %240 : vector<1x32xf32> to vector<8x32xf32>
    %242 = arith.addf %239, %241 : vector<8x32xf32>
    %cst_85 = arith.constant 0.000000e+00 : f32
    %243 = vector.broadcast %cst_85 : f32 to vector<8x32xf32>
    %244 = arith.cmpf ogt, %242, %243 : vector<8x32xf32>
    %cst_86 = arith.constant 0.000000e+00 : f32
    %245 = vector.broadcast %cst_86 : f32 to vector<8x32xf32>
    %246 = arith.minimumf %242, %245 : vector<8x32xf32>
    %247 = math.exp %246 : vector<8x32xf32>
    %cst_87 = arith.constant 1.000000e+00 : f32
    %248 = vector.broadcast %cst_87 : f32 to vector<8x32xf32>
    %249 = arith.subf %247, %248 : vector<8x32xf32>
    %250 = arith.select %244, %242, %249 : vector<8x32xi1>, vector<8x32xf32>
    %251 = arith.addf %238, %250 : vector<8x32xf32>
    %c0_88 = arith.constant 0 : index
    %c0_89 = arith.constant 0 : index
    %252 = vector.load %arg4[%c0_88, %c0_89] : memref<8x32xf32, #tpu.memory_space<vmem>>, vector<8x32xf32>
    tpu.vector_store %arg4[%c0_88, %c0_89], %251 {strides = array<i32>} : memref<8x32xf32, #tpu.memory_space<vmem>>, vector<8x32xf32>,
    %c0_90 = arith.constant 0 : index
    %c0_91 = arith.constant 0 : index
    %253 = vector.load %arg4[%c0_90, %c0_91] : memref<8x32xf32, #tpu.memory_space<vmem>>, vector<8x32xf32>
    %c288 = arith.constant 288 : index
    %c0_92 = arith.constant 0 : index
    %254 = vector.load %arg0[%c288, %c0_92] : memref<384x16xf32, #tpu.memory_space<vmem>>, vector<2x16xf32>
    %cst_93 = arith.constant dense<0.000000e+00> : vector<2x32xf32>
    %255 = tpu.matmul %254, %126, %cst_93 {dimension_numbers = #tpu.dot_dimension_numbers<[1], [0], [0], [1], [0, 0, 1, 1], [], []>} : vector<2x16xf32>, vector<16x32xf32>, vector<2x32xf32> -> vector<2x32xf32>
    %c376 = arith.constant 376 : index
    %c0_94 = arith.constant 0 : index
    %256 = vector.load %arg0[%c376, %c0_94] : memref<384x16xf32, #tpu.memory_space<vmem>>, vector<2x8xf32>
    %cst_95 = arith.constant dense<0.000000e+00> : vector<2x32xf32>
    %257 = tpu.matmul %256, %253, %cst_95 {dimension_numbers = #tpu.dot_dimension_numbers<[1], [0], [0], [1], [0, 0, 1, 1], [], []>} : vector<2x8xf32>, vector<8x32xf32>, vector<2x32xf32> -> vector<2x32xf32>
    %c512 = arith.constant 512 : index
    %c0_96 = arith.constant 0 : index
    %258 = vector.load %arg1[%c512, %c0_96] : memref<520x64xf32, #tpu.memory_space<vmem>>, vector<2x32xf32>
    %c448 = arith.constant 448 : index
    %c0_97 = arith.constant 0 : index
    %259 = vector.load %arg1[%c448, %c0_97] : memref<520x64xf32, #tpu.memory_space<vmem>>, vector<32x32xf32>
    %cst_98 = arith.constant dense<0.000000e+00> : vector<2x32xf32>
    %260 = tpu.matmul %255, %259, %cst_98 {dimension_numbers = #tpu.dot_dimension_numbers<[1], [0], [0], [1], [0, 0, 1, 1], [], []>} : vector<2x32xf32>, vector<32x32xf32>, vector<2x32xf32> -> vector<2x32xf32>
    %c480 = arith.constant 480 : index
    %c0_99 = arith.constant 0 : index
    %261 = vector.load %arg1[%c480, %c0_99] : memref<520x64xf32, #tpu.memory_space<vmem>>, vector<32x32xf32>
    %cst_100 = arith.constant dense<0.000000e+00> : vector<2x32xf32>
    %262 = tpu.matmul %257, %261, %cst_100 {dimension_numbers = #tpu.dot_dimension_numbers<[1], [0], [0], [1], [0, 0, 1, 1], [], []>} : vector<2x32xf32>, vector<32x32xf32>, vector<2x32xf32> -> vector<2x32xf32>
    %263 = arith.addf %260, %262 : vector<2x32xf32>
    %264 = vector.extract_strided_slice %258 {offsets = [0, 0], sizes = [1, 32], strides = [1, 1]} : vector<2x32xf32> to vector<1x32xf32>
    %265 = vector.broadcast %264 : vector<1x32xf32> to vector<2x32xf32>
    %266 = arith.addf %263, %265 : vector<2x32xf32>
    %cst_101 = arith.constant 0.000000e+00 : f32
    %267 = vector.broadcast %cst_101 : f32 to vector<2x32xf32>
    %268 = arith.cmpf ogt, %266, %267 : vector<2x32xf32>
    %cst_102 = arith.constant 0.000000e+00 : f32
    %269 = vector.broadcast %cst_102 : f32 to vector<2x32xf32>
    %270 = arith.minimumf %266, %269 : vector<2x32xf32>
    %271 = math.exp %270 : vector<2x32xf32>
    %cst_103 = arith.constant 1.000000e+00 : f32
    %272 = vector.broadcast %cst_103 : f32 to vector<2x32xf32>
    %273 = arith.subf %271, %272 : vector<2x32xf32>
    %274 = arith.select %268, %266, %273 : vector<2x32xi1>, vector<2x32xf32>
    %275 = vector.extract_strided_slice %258 {offsets = [1, 0], sizes = [1, 32], strides = [1, 1]} : vector<2x32xf32> to vector<1x32xf32>
    %276 = vector.broadcast %275 : vector<1x32xf32> to vector<2x32xf32>
    %277 = arith.mulf %274, %276 : vector<2x32xf32>
    %cst_104 = arith.constant dense<0.000000e+00> : vector<2xf32>
    %278 = vector.multi_reduction <add>, %277, %cst_104 [1] : vector<2x32xf32> to vector<2xf32>
    %279 = vector.shape_cast %278 : vector<2xf32> to vector<2x1xf32>
    %cst_105 = arith.constant 0.000000e+00 : f32
    %280 = vector.broadcast %cst_105 : f32 to vector<2x1xf32>
    %281 = arith.subf %280, %279 : vector<2x1xf32>
    %282 = math.exp %281 : vector<2x1xf32>
    %cst_106 = arith.constant 1.000000e+00 : f32
    %283 = vector.broadcast %cst_106 : f32 to vector<2x1xf32>
    %284 = arith.addf %283, %282 : vector<2x1xf32>
    %cst_107 = arith.constant 1.000000e+00 : f32
    %285 = vector.broadcast %cst_107 : f32 to vector<2x1xf32>
    %286 = arith.divf %285, %284 : vector<2x1xf32>
    %c0_108 = arith.constant 0 : index
    %c0_109 = arith.constant 0 : index
    %287 = vector.load %arg2[%c0_108, %c0_109] : memref<2x1xf32, #tpu.memory_space<vmem>>, vector<2x1xf32>
    tpu.vector_store %arg2[%c0_108, %c0_109], %286 {strides = array<i32>} : memref<2x1xf32, #tpu.memory_space<vmem>>, vector<2x1xf32>,
    return
  }
}

</mosaic_0001>

<llo_original>
// kernel: tpu_custom_call.1
$region0: #{tpu_custom_call.1}
  #allocation0 [shape = 'u32[]', space=smem, size = 0x4, offset = 0x4, fixed_abs, tag = 'smem constant byte address 0x4 - core index']
  #allocation1 [shape = 'u32[144,128]{1,0:T(1,128)}', space=vmem, size = 0x12000, scoped, tag = 'internal scratch']
  #allocation2 [shape = 'f32[16,32]{1,0:T(8,128)}', space=vmem, size = 0x2000, scoped, tag = 'scratch operand']
  #allocation3 [shape = 'f32[8,32]{1,0:T(8,128)}', space=vmem, size = 0x1000, scoped, tag = 'scratch operand']
  %s0 = inlined_call_operand.vmem [shape: f32[384,16], index: 0, kind: input, shape index: {}]
  %s1 = inlined_call_operand.vmem [shape: f32[520,64], index: 1, kind: input, shape index: {}]
  %s2 = inlined_call_operand.vmem [shape: f32[2,1], index: 2, kind: output, shape index: {}]
  %s3 = sld [smem:[#allocation0]]
  $region18: #{tpu_custom_call.1} parent=0
    _
  %s5 = ssub.s32 1, %s3
  %s6 = scalar_select 0, %s5, %s3
  // Predicated region
  $region2: #{tpu_custom_call.1} parent=0 // pred_check
    _
  $region3: #{tpu_custom_call.1} parent=0 // pred_check_branch
    %8 = sbr.rel (0) target = $region5
  $region4: #{tpu_custom_call.1} parent=0 // pred_region
    _
  $region5: #{tpu_custom_call.1} parent=0 // pred_fallthru
    _
  // Predicated region
  $region6: #{tpu_custom_call.1} parent=0 // pred_check
    _
  $region7: #{tpu_custom_call.1} parent=0 // pred_check_branch
    %10 = sbr.rel (0) target = $region9
  $region8: #{tpu_custom_call.1} parent=0 // pred_region
    _
  $region9: #{tpu_custom_call.1} parent=0 // pred_fallthru
    _
  %v11 = vld [vmem:[%s0] sm:$0xff]
  %v12 = vld [vmem:[%s0 + $0x8] sm:$0xff]
  %v13 = vld [vmem:[%s0 + $0x10] sm:$0xff]
  %v14 = vld [vmem:[%s0 + $0x18] sm:$0xff]
  %v15 = vsub.f32 %v13, 1.0
  %v16 = vsub.f32 %v14, 1.0
  %v17 = vmul.f32 %v15, 1e+30
  %v18 = vmul.f32 %v16, 1e+30
  %v19 = vld [vmem:[%s0 + $0x20] sm:$0xff]
  %v20 = vld [vmem:[%s0 + $0x28] sm:$0xff]
  %v21 = vld [vmem:[%s0 + $0x30] sm:$0xff]
  %v22 = vld [vmem:[%s0 + $0x38] sm:$0xff]
  %v23 = vld [vmem:[%s0 + $0x40] sm:$0xff]
  %v24 = vld [vmem:[%s0 + $0x48] sm:$0xff]
  %v25 = vld [vmem:[%s0 + $0x50] sm:$0xff]
  %v26 = vld [vmem:[%s0 + $0x58] sm:$0xff]
  %v27 = vld [vmem:[%s0 + $0x60] sm:$0xff]
  %v28 = vld [vmem:[%s0 + $0x68] sm:$0xff]
  %v29 = vld [vmem:[%s0 + $0x70] sm:$0xff]
  %v30 = vld [vmem:[%s0 + $0x78] sm:$0xff]
  %v31 = vld [vmem:[%s0 + $0x80] sm:$0xff]
  %v32 = vld [vmem:[%s0 + $0x88] sm:$0xff]
  %v33 = vld [vmem:[%s0 + $0x90] sm:$0xff]
  %v34 = vld [vmem:[%s0 + $0x98] sm:$0xff]
  %v35 = vld [vmem:[%s0 + $0xa0] sm:$0xff]
  %v36 = vld [vmem:[%s0 + $0xa8] sm:$0xff]
  %v37 = vld [vmem:[%s0 + $0xb0] sm:$0xff]
  %v38 = vld [vmem:[%s0 + $0xb8] sm:$0xff]
  %v39 = vld [vmem:[%s0 + $0xc0] sm:$0xff]
  %v40 = vld [vmem:[%s0 + $0xc8] sm:$0xff]
  %v41 = vld [vmem:[%s0 + $0xd0] sm:$0xff]
  %v42 = vld [vmem:[%s0 + $0xd8] sm:$0xff]
  %v43 = vld [vmem:[%s0 + $0xe0] sm:$0xff]
  %v44 = vld [vmem:[%s0 + $0xe8] sm:$0xff]
  %v45 = vld [vmem:[%s0 + $0xf0] sm:$0xff]
  %v46 = vld [vmem:[%s0 + $0xf8] sm:$0xff]
  %v47 = vld [vmem:[%s0 + $0x100] sm:$0xff]
  %v48 = vld [vmem:[%s0 + $0x108] sm:$0xff]
  %v49 = vld [vmem:[%s0 + $0x110] sm:$0xff]
  %v50 = vld [vmem:[%s0 + $0x118] sm:$0xff]
  %v51 = vld [vmem:[%s1] sm:$0xff]
  %v52 = vld [vmem:[%s1 + $0x8] sm:$0xff]
  %v53 = vld [vmem:[%s1 + $0x10] sm:$0x3]
  %v54 = vld [vmem:[%s1 + $0x18] sm:$0xff]
  %v55 = vld [vmem:[%s1 + $0x20] sm:$0xff]
  %v56 = vld [vmem:[%s1 + $0x28] sm:$0xff]
  %v57 = vld [vmem:[%s1 + $0x30] sm:$0xff]
  %v58 = vld [vmem:[%s1 + $0x38] sm:$0xff]
  %v59 = vld [vmem:[%s1 + $0x40] sm:$0xff]
  %v60 = vld [vmem:[%s1 + $0x48] sm:$0xff]
  %v61 = vld [vmem:[%s1 + $0x50] sm:$0xff]
  %v62 = vld [vmem:[%s1 + $0x58] sm:$0xff]
  %v63 = vld [vmem:[%s1 + $0x60] sm:$0xff]
  %v64 = vlaneseq
  %v65 = vshrl.u32 %v64, 7
  %v66 = vsub.s32 0, %v65
  %v67 = vrot.slane %v53, %v66
  %vm68 = vcmask 130048
  %v70 = vsel %vm68, %v11, 0
  %v73 = vsel %vm68, %v12, 0
  %75 = vmatprep.subr.mxu0 0.0
  %76 = vmatpush1.msra.mxu0 %v51
  %77 = vmatprep.subr.mxu0 0.0
  %78 = vmatpush1.msra.mxu0 %v52
  %79 = vmatprep.subr.mxu0 0.0
  %80 = vmatpush1.msra.mxu0 0.0
  %81 = vmatprep.subr.mxu0 0.0
  %82 = vmatpush1.msra.mxu0 0.0
  %83 = vmatprep.subr.mxu0 0.0
  %84 = vmatpush1.msra.mxu0 0.0
  %85 = vmatprep.subr.mxu0 0.0
  %86 = vmatpush1.msra.mxu0 0.0
  %87 = vmatprep.subr.mxu0 0.0
  %88 = vmatpush1.msra.mxu0 0.0
  %89 = vmatprep.subr.mxu0 0.0
  %90 = vmatpush1.msra.mxu0 0.0
  %91 = vmatprep.subr.mxu0 0.0
  %92 = vmatpush1.msra.mxu0 0.0
  %93 = vmatprep.subr.mxu0 0.0
  %94 = vmatpush1.msra.mxu0 0.0
  %95 = vmatprep.subr.mxu0 0.0
  %96 = vmatpush1.msra.mxu0 0.0
  %97 = vmatprep.subr.mxu0 0.0
  %98 = vmatpush1.msra.mxu0 0.0
  %99 = vmatprep.subr.mxu0 0.0
  %100 = vmatpush1.msra.mxu0 0.0
  %101 = vmatprep.subr.mxu0 0.0
  %102 = vmatpush1.msra.mxu0 0.0
  %103 = vmatprep.subr.mxu0 0.0
  %104 = vmatpush1.msra.mxu0 0.0
  %105 = vmatprep.subr.mxu0 0.0
  %106 = vmatpush1.msra.mxu0 0.0
  %107 = vmatprep.subr.mxu0 0.0
  %108 = vmatpush1.msra.mxu0 0.0
  %109 = vmatprep.subr.mxu0 0.0
  %110 = vmatpush1.msra.mxu0 0.0
  %111 = vmatprep.subr.mxu0 0.0
  %112 = vmatpush1.msra.mxu0 0.0
  %113 = vmatprep.subr.mxu0 0.0
  %114 = vmatpush1.msra.mxu0 0.0
  %115 = vmatprep.subr.mxu0 0.0
  %116 = vmatpush1.msra.mxu0 0.0
  %117 = vmatprep.subr.mxu0 0.0
  %118 = vmatpush1.msra.mxu0 0.0
  %119 = vmatprep.subr.mxu0 0.0
  %120 = vmatpush1.msra.mxu0 0.0
  %121 = vmatprep.subr.mxu0 0.0
  %122 = vmatpush1.msra.mxu0 0.0
  %123 = vmatprep.subr.mxu0 0.0
  %124 = vmatpush1.msra.mxu0 0.0
  %125 = vmatprep.subr.mxu0 0.0
  %126 = vmatpush1.msra.mxu0 0.0
  %127 = vmatprep.subr.mxu0 0.0
  %128 = vmatpush1.msra.mxu0 0.0
  %129 = vmatprep.subr.mxu0 0.0
  %130 = vmatpush1.msra.mxu0 0.0
  %131 = vmatprep.subr.mxu0 0.0
  %132 = vmatpush1.msra.mxu0 0.0
  %133 = vmatprep.subr.mxu0 0.0
  %134 = vmatpush1.msra.mxu0 0.0
  %135 = vmatprep.subr.mxu0 0.0
  %136 = vmatpush1.msra.mxu0 0.0
  %137 = vmatprep.subr.mxu0 0.0
  %138 = vmatpush1.msra.mxu0 0.0
  %139 = vmatprep.mubr.f32.mxu0 0.0
  %140 = vmatmul.mubr.f32.gmra.mrb[0].mxu0 %v70
  %v141 = vpop.f32.mrb[0].mxu0
  %v142 = vadd.f32 %v67, %v141
  %v143 = vpop.f32.mrb[0].mxu0
  %144 = vmatprep.mubr.f32.mxu0 0.0
  %145 = vmatmul.mubr.f32.gmra.mrb[0].mxu0 %v73
  %v146 = vpop.f32.mrb[0].mxu0
  %v147 = vadd.f32 %v67, %v146
  %v148 = vpop.f32.mrb[0].mxu0
  %149 = vdwg.mxu0
  %v151 = vsel %vm68, %v19, 0
  %v154 = vsel %vm68, %v20, 0
  %v157 = vsel %vm68, %v21, 0
  %v160 = vsel %vm68, %v22, 0
  %v163 = vsel %vm68, %v23, 0
  %v166 = vsel %vm68, %v24, 0
  %v169 = vsel %vm68, %v25, 0
  %v172 = vsel %vm68, %v26, 0
  %v175 = vsel %vm68, %v27, 0
  %v178 = vsel %vm68, %v28, 0
  %v181 = vsel %vm68, %v29, 0
  %v184 = vsel %vm68, %v30, 0
  %v187 = vsel %vm68, %v31, 0
  %v190 = vsel %vm68, %v32, 0
  %v193 = vsel %vm68, %v33, 0
  %v196 = vsel %vm68, %v34, 0
  %v199 = vsel %vm68, %v35, 0
  %v202 = vsel %vm68, %v36, 0
  %v205 = vsel %vm68, %v37, 0
  %v208 = vsel %vm68, %v38, 0
  %v211 = vsel %vm68, %v39, 0
  %v214 = vsel %vm68, %v40, 0
  %v217 = vsel %vm68, %v41, 0
  %v220 = vsel %vm68, %v42, 0
  %v223 = vsel %vm68, %v43, 0
  %v226 = vsel %vm68, %v44, 0
  %v229 = vsel %vm68, %v45, 0
  %v232 = vsel %vm68, %v46, 0
  %v235 = vsel %vm68, %v47, 0
  %v238 = vsel %vm68, %v48, 0
  %v241 = vsel %vm68, %v49, 0
  %v244 = vsel %vm68, %v50, 0
  %246 = vmatprep.subr.mxu0 0.0
  %247 = vmatpush1.msra.mxu0 %v54
  %248 = vmatprep.subr.mxu0 0.0
  %249 = vmatpush1.msra.mxu0 %v55
  %250 = vmatprep.subr.mxu0 0.0
  %251 = vmatpush1.msra.mxu0 0.0
  %252 = vmatprep.subr.mxu0 0.0
  %253 = vmatpush1.msra.mxu0 0.0
  %254 = vmatprep.subr.mxu0 0.0
  %255 = vmatpush1.msra.mxu0 0.0
  %256 = vmatprep.subr.mxu0 0.0
  %257 = vmatpush1.msra.mxu0 0.0
  %258 = vmatprep.subr.mxu0 0.0
  %259 = vmatpush1.msra.mxu0 0.0
  %260 = vmatprep.subr.mxu0 0.0
  %261 = vmatpush1.msra.mxu0 0.0
  %262 = vmatprep.subr.mxu0 0.0
  %263 = vmatpush1.msra.mxu0 0.0
  %264 = vmatprep.subr.mxu0 0.0
  %265 = vmatpush1.msra.mxu0 0.0
  %266 = vmatprep.subr.mxu0 0.0
  %267 = vmatpush1.msra.mxu0 0.0
  %268 = vmatprep.subr.mxu0 0.0
  %269 = vmatpush1.msra.mxu0 0.0
  %270 = vmatprep.subr.mxu0 0.0
  %271 = vmatpush1.msra.mxu0 0.0
  %272 = vmatprep.subr.mxu0 0.0
  %273 = vmatpush1.msra.mxu0 0.0
  %274 = vmatprep.subr.mxu0 0.0
  %275 = vmatpush1.msra.mxu0 0.0
  %276 = vmatprep.subr.mxu0 0.0
  %277 = vmatpush1.msra.mxu0 0.0
  %278 = vmatprep.subr.mxu0 0.0
  %279 = vmatpush1.msra.mxu0 0.0
  %280 = vmatprep.subr.mxu0 0.0
  %281 = vmatpush1.msra.mxu0 0.0
  %282 = vmatprep.subr.mxu0 0.0
  %283 = vmatpush1.msra.mxu0 0.0
  %284 = vmatprep.subr.mxu0 0.0
  %285 = vmatpush1.msra.mxu0 0.0
  %286 = vmatprep.subr.mxu0 0.0
  %287 = vmatpush1.msra.mxu0 0.0
  %288 = vmatprep.subr.mxu0 0.0
  %289 = vmatpush1.msra.mxu0 0.0
  %290 = vmatprep.subr.mxu0 0.0
  %291 = vmatpush1.msra.mxu0 0.0
  %292 = vmatprep.subr.mxu0 0.0
  %293 = vmatpush1.msra.mxu0 0.0
  %294 = vmatprep.subr.mxu0 0.0
  %295 = vmatpush1.msra.mxu0 0.0
  %296 = vmatprep.subr.mxu0 0.0
  %297 = vmatpush1.msra.mxu0 0.0
  %298 = vmatprep.subr.mxu0 0.0
  %299 = vmatpush1.msra.mxu0 0.0
  %300 = vmatprep.subr.mxu0 0.0
  %301 = vmatpush1.msra.mxu0 0.0
  %302 = vmatprep.subr.mxu0 0.0
  %303 = vmatpush1.msra.mxu0 0.0
  %304 = vmatprep.subr.mxu0 0.0
  %305 = vmatpush1.msra.mxu0 0.0
  %306 = vmatprep.subr.mxu0 0.0
  %307 = vmatpush1.msra.mxu0 0.0
  %308 = vmatprep.subr.mxu0 0.0
  %309 = vmatpush1.msra.mxu0 0.0
  %310 = vmatprep.mubr.f32.mxu0 0.0
  %311 = vmatmul.mubr.f32.gmra.mrb[0].mxu0 %v151
  %v312 = vpop.f32.mrb[0].mxu0
  %v313 = vadd.f32 0.0, %v312
  %v314 = vpop.f32.mrb[0].mxu0
  %315 = vmatprep.mubr.f32.mxu0 0.0
  %316 = vmatmul.mubr.f32.gmra.mrb[0].mxu0 %v154
  %v317 = vpop.f32.mrb[0].mxu0
  %v318 = vadd.f32 0.0, %v317
  %v319 = vpop.f32.mrb[0].mxu0
  %320 = vmatprep.mubr.f32.mxu0 0.0
  %321 = vmatmul.mubr.f32.gmra.mrb[0].mxu0 %v157
  %v322 = vpop.f32.mrb[0].mxu0
  %v323 = vadd.f32 0.0, %v322
  %v324 = vpop.f32.mrb[0].mxu0
  %325 = vmatprep.mubr.f32.mxu0 0.0
  %326 = vmatmul.mubr.f32.gmra.mrb[0].mxu0 %v160
  %v327 = vpop.f32.mrb[0].mxu0
  %v328 = vadd.f32 0.0, %v327
  %v329 = vpop.f32.mrb[0].mxu0
  %330 = vmatprep.mubr.f32.mxu0 0.0
  %331 = vmatmul.mubr.f32.gmra.mrb[0].mxu0 %v163
  %v332 = vpop.f32.mrb[0].mxu0
  %v333 = vadd.f32 0.0, %v332
  %v334 = vpop.f32.mrb[0].mxu0
  %335 = vmatprep.mubr.f32.mxu0 0.0
  %336 = vmatmul.mubr.f32.gmra.mrb[0].mxu0 %v166
  %v337 = vpop.f32.mrb[0].mxu0
  %v338 = vadd.f32 0.0, %v337
  %v339 = vpop.f32.mrb[0].mxu0
  %340 = vmatprep.mubr.f32.mxu0 0.0
  %341 = vmatmul.mubr.f32.gmra.mrb[0].mxu0 %v169
  %v342 = vpop.f32.mrb[0].mxu0
  %v343 = vadd.f32 0.0, %v342
  %v344 = vpop.f32.mrb[0].mxu0
  %345 = vmatprep.mubr.f32.mxu0 0.0
  %346 = vmatmul.mubr.f32.gmra.mrb[0].mxu0 %v172
  %v347 = vpop.f32.mrb[0].mxu0
  %v348 = vadd.f32 0.0, %v347
  %v349 = vpop.f32.mrb[0].mxu0
  %350 = vmatprep.mubr.f32.mxu0 0.0
  %351 = vmatmul.mubr.f32.gmra.mrb[0].mxu0 %v175
  %v352 = vpop.f32.mrb[0].mxu0
  %v353 = vadd.f32 0.0, %v352
  %v354 = vpop.f32.mrb[0].mxu0
  %355 = vmatprep.mubr.f32.mxu0 0.0
  %356 = vmatmul.mubr.f32.gmra.mrb[0].mxu0 %v178
  %v357 = vpop.f32.mrb[0].mxu0
  %v358 = vadd.f32 0.0, %v357
  %v359 = vpop.f32.mrb[0].mxu0
  %360 = vmatprep.mubr.f32.mxu0 0.0
  %361 = vmatmul.mubr.f32.gmra.mrb[0].mxu0 %v181
  %v362 = vpop.f32.mrb[0].mxu0
  %v363 = vadd.f32 0.0, %v362
  %v364 = vpop.f32.mrb[0].mxu0
  %365 = vmatprep.mubr.f32.mxu0 0.0
  %366 = vmatmul.mubr.f32.gmra.mrb[0].mxu0 %v184
  %v367 = vpop.f32.mrb[0].mxu0
  %v368 = vadd.f32 0.0, %v367
  %v369 = vpop.f32.mrb[0].mxu0
  %370 = vmatprep.mubr.f32.mxu0 0.0
  %371 = vmatmul.mubr.f32.gmra.mrb[0].mxu0 %v187
  %v372 = vpop.f32.mrb[0].mxu0
  %v373 = vadd.f32 0.0, %v372
  %v374 = vpop.f32.mrb[0].mxu0
  %375 = vmatprep.mubr.f32.mxu0 0.0
  %376 = vmatmul.mubr.f32.gmra.mrb[0].mxu0 %v190
  %v377 = vpop.f32.mrb[0].mxu0
  %v378 = vadd.f32 0.0, %v377
  %v379 = vpop.f32.mrb[0].mxu0
  %380 = vmatprep.mubr.f32.mxu0 0.0
  %381 = vmatmul.mubr.f32.gmra.mrb[0].mxu0 %v193
  %v382 = vpop.f32.mrb[0].mxu0
  %v383 = vadd.f32 0.0, %v382
  %v384 = vpop.f32.mrb[0].mxu0
  %385 = vmatprep.mubr.f32.mxu0 0.0
  %386 = vmatmul.mubr.f32.gmra.mrb[0].mxu0 %v196
  %v387 = vpop.f32.mrb[0].mxu0
  %v388 = vadd.f32 0.0, %v387
  %v389 = vpop.f32.mrb[0].mxu0
  %390 = vmatprep.mubr.f32.mxu0 0.0
  %391 = vmatmul.mubr.f32.gmra.mrb[0].mxu0 %v199
  %v392 = vpop.f32.mrb[0].mxu0
  %v393 = vadd.f32 0.0, %v392
  %v394 = vpop.f32.mrb[0].mxu0
  %395 = vmatprep.mubr.f32.mxu0 0.0
  %396 = vmatmul.mubr.f32.gmra.mrb[0].mxu0 %v202
  %v397 = vpop.f32.mrb[0].mxu0
  %v398 = vadd.f32 0.0, %v397
  %v399 = vpop.f32.mrb[0].mxu0
  %400 = vmatprep.mubr.f32.mxu0 0.0
  %401 = vmatmul.mubr.f32.gmra.mrb[0].mxu0 %v205
  %v402 = vpop.f32.mrb[0].mxu0
  %v403 = vadd.f32 0.0, %v402
  %v404 = vpop.f32.mrb[0].mxu0
  %405 = vmatprep.mubr.f32.mxu0 0.0
  %406 = vmatmul.mubr.f32.gmra.mrb[0].mxu0 %v208
  %v407 = vpop.f32.mrb[0].mxu0
  %v408 = vadd.f32 0.0, %v407
  %v409 = vpop.f32.mrb[0].mxu0
  %410 = vmatprep.mubr.f32.mxu0 0.0
  %411 = vmatmul.mubr.f32.gmra.mrb[0].mxu0 %v211
  %v412 = vpop.f32.mrb[0].mxu0
  %v413 = vadd.f32 0.0, %v412
  %v414 = vpop.f32.mrb[0].mxu0
  %415 = vmatprep.mubr.f32.mxu0 0.0
  %416 = vmatmul.mubr.f32.gmra.mrb[0].mxu0 %v214
  %v417 = vpop.f32.mrb[0].mxu0
  %v418 = vadd.f32 0.0, %v417
  %v419 = vpop.f32.mrb[0].mxu0
  %420 = vmatprep.mubr.f32.mxu0 0.0
  %421 = vmatmul.mubr.f32.gmra.mrb[0].mxu0 %v217
  %v422 = vpop.f32.mrb[0].mxu0
  %v423 = vadd.f32 0.0, %v422
  %v424 = vpop.f32.mrb[0].mxu0
  %425 = vmatprep.mubr.f32.mxu0 0.0
  %426 = vmatmul.mubr.f32.gmra.mrb[0].mxu0 %v220
  %v427 = vpop.f32.mrb[0].mxu0
  %v428 = vadd.f32 0.0, %v427
  %v429 = vpop.f32.mrb[0].mxu0
  %430 = vmatprep.mubr.f32.mxu0 0.0
  %431 = vmatmul.mubr.f32.gmra.mrb[0].mxu0 %v223
  %v432 = vpop.f32.mrb[0].mxu0
  %v433 = vadd.f32 0.0, %v432
  %v434 = vpop.f32.mrb[0].mxu0
  %435 = vmatprep.mubr.f32.mxu0 0.0
  %436 = vmatmul.mubr.f32.gmra.mrb[0].mxu0 %v226
  %v437 = vpop.f32.mrb[0].mxu0
  %v438 = vadd.f32 0.0, %v437
  %v439 = vpop.f32.mrb[0].mxu0
  %440 = vmatprep.mubr.f32.mxu0 0.0
  %441 = vmatmul.mubr.f32.gmra.mrb[0].mxu0 %v229
  %v442 = vpop.f32.mrb[0].mxu0
  %v443 = vadd.f32 0.0, %v442
  %v444 = vpop.f32.mrb[0].mxu0
  %445 = vmatprep.mubr.f32.mxu0 0.0
  %446 = vmatmul.mubr.f32.gmra.mrb[0].mxu0 %v232
  %v447 = vpop.f32.mrb[0].mxu0
  %v448 = vadd.f32 0.0, %v447
  %v449 = vpop.f32.mrb[0].mxu0
  %450 = vmatprep.mubr.f32.mxu0 0.0
  %451 = vmatmul.mubr.f32.gmra.mrb[0].mxu0 %v235
  %v452 = vpop.f32.mrb[0].mxu0
  %v453 = vadd.f32 0.0, %v452
  %v454 = vpop.f32.mrb[0].mxu0
  %455 = vmatprep.mubr.f32.mxu0 0.0
  %456 = vmatmul.mubr.f32.gmra.mrb[0].mxu0 %v238
  %v457 = vpop.f32.mrb[0].mxu0
  %v458 = vadd.f32 0.0, %v457
  %v459 = vpop.f32.mrb[0].mxu0
  %460 = vmatprep.mubr.f32.mxu0 0.0
  %461 = vmatmul.mubr.f32.gmra.mrb[0].mxu0 %v241
  %v462 = vpop.f32.mrb[0].mxu0
  %v463 = vadd.f32 0.0, %v462
  %v464 = vpop.f32.mrb[0].mxu0
  %465 = vmatprep.mubr.f32.mxu0 0.0
  %466 = vmatmul.mubr.f32.gmra.mrb[0].mxu0 %v244
  %v467 = vpop.f32.mrb[0].mxu0
  %v468 = vadd.f32 0.0, %v467
  %v469 = vpop.f32.mrb[0].mxu0
  %470 = vdwg.mxu0
  %v473 = vcombine.high %v142, %v142
  %v475 = vunpack.c.l.s4 1966171168
  %v476 = vunpack.c.0.s8 %v475
  %v477 = vlaneseq
  %v478 = vshrl.u32 %v477, 7
  %v479 = vsub.s32 %v476, %v478
  %v480 = vrot.slane %v142, %v479
  %v482 = vunpack.c.l.s4 1966171168
  %v483 = vunpack.c.0.s8 %v482
  %v484 = vlaneseq
  %v485 = vshrl.u32 %v484, 7
  %v486 = vsub.s32 %v483, %v485
  %v487 = vrot.slane %v473, %v486
  %v488 = vcombine.high %v480, %v480
  %v489 = vcombine.high %v487, %v487
  %v491 = vunpack.c.l.s4 1966171168
  %v492 = vunpack.c.0.s8 %v491
  %v493 = vlaneseq
  %v494 = vshrl.u32 %v493, 7
  %v495 = vsub.s32 %v492, %v494
  %v496 = vrot.slane %v480, %v495
  %v498 = vunpack.c.l.s4 1966171168
  %v499 = vunpack.c.0.s8 %v498
  %v500 = vlaneseq
  %v501 = vshrl.u32 %v500, 7
  %v502 = vsub.s32 %v499, %v501
  %v503 = vrot.slane %v487, %v502
  %v505 = vunpack.c.l.s4 1966171168
  %v506 = vunpack.c.0.s8 %v505
  %v507 = vlaneseq
  %v508 = vshrl.u32 %v507, 7
  %v509 = vsub.s32 %v506, %v508
  %v510 = vrot.slane %v488, %v509
  %v512 = vunpack.c.l.s4 1966171168
  %v513 = vunpack.c.0.s8 %v512
  %v514 = vlaneseq
  %v515 = vshrl.u32 %v514, 7
  %v516 = vsub.s32 %v513, %v515
  %v517 = vrot.slane %v489, %v516
  %v518 = vcombine.high %v496, %v496
  %v519 = vcombine.high %v503, %v503
  %v520 = vcombine.high %v510, %v510
  %v521 = vcombine.high %v517, %v517
  %v522 = vcombine.high %v147, %v147
  %v524 = vunpack.c.l.s4 1966171168
  %v525 = vunpack.c.0.s8 %v524
  %v526 = vlaneseq
  %v527 = vshrl.u32 %v526, 7
  %v528 = vsub.s32 %v525, %v527
  %v529 = vrot.slane %v147, %v528
  %v531 = vunpack.c.l.s4 1966171168
  %v532 = vunpack.c.0.s8 %v531
  %v533 = vlaneseq
  %v534 = vshrl.u32 %v533, 7
  %v535 = vsub.s32 %v532, %v534
  %v536 = vrot.slane %v522, %v535
  %v537 = vcombine.high %v529, %v529
  %v538 = vcombine.high %v536, %v536
  %v540 = vunpack.c.l.s4 1966171168
  %v541 = vunpack.c.0.s8 %v540
  %v542 = vlaneseq
  %v543 = vshrl.u32 %v542, 7
  %v544 = vsub.s32 %v541, %v543
  %v545 = vrot.slane %v529, %v544
  %v547 = vunpack.c.l.s4 1966171168
  %v548 = vunpack.c.0.s8 %v547
  %v549 = vlaneseq
  %v550 = vshrl.u32 %v549, 7
  %v551 = vsub.s32 %v548, %v550
  %v552 = vrot.slane %v536, %v551
  %v554 = vunpack.c.l.s4 1966171168
  %v555 = vunpack.c.0.s8 %v554
  %v556 = vlaneseq
  %v557 = vshrl.u32 %v556, 7
  %v558 = vsub.s32 %v555, %v557
  %v559 = vrot.slane %v537, %v558
  %v561 = vunpack.c.l.s4 1966171168
  %v562 = vunpack.c.0.s8 %v561
  %v563 = vlaneseq
  %v564 = vshrl.u32 %v563, 7
  %v565 = vsub.s32 %v562, %v564
  %v566 = vrot.slane %v538, %v565
  %v567 = vcombine.high %v545, %v545
  %v568 = vcombine.high %v552, %v552
  %v569 = vcombine.high %v559, %v559
  %v570 = vcombine.high %v566, %v566
  %v571 = vlaneseq
  %v572 = vshrl.u32 %v571, 7
  %v573 = vsub.s32 0, %v572
  %v574 = vrot.slane %v496, %v573
  %v575 = vlaneseq
  %v576 = vshrl.u32 %v575, 7
  %v577 = vsub.s32 0, %v576
  %v578 = vrot.slane %v510, %v577
  %v579 = vlaneseq
  %v580 = vshrl.u32 %v579, 7
  %v581 = vsub.s32 0, %v580
  %v582 = vrot.slane %v518, %v581
  %v583 = vlaneseq
  %v584 = vshrl.u32 %v583, 7
  %v585 = vsub.s32 0, %v584
  %v586 = vrot.slane %v520, %v585
  %v587 = vlaneseq
  %v588 = vshrl.u32 %v587, 7
  %v589 = vsub.s32 0, %v588
  %v590 = vrot.slane %v503, %v589
  %v591 = vlaneseq
  %v592 = vshrl.u32 %v591, 7
  %v593 = vsub.s32 0, %v592
  %v594 = vrot.slane %v517, %v593
  %v595 = vlaneseq
  %v596 = vshrl.u32 %v595, 7
  %v597 = vsub.s32 0, %v596
  %v598 = vrot.slane %v519, %v597
  %v599 = vlaneseq
  %v600 = vshrl.u32 %v599, 7
  %v601 = vsub.s32 0, %v600
  %v602 = vrot.slane %v521, %v601
  %v603 = vlaneseq
  %v604 = vshrl.u32 %v603, 7
  %v605 = vsub.s32 0, %v604
  %v606 = vrot.slane %v545, %v605
  %v607 = vlaneseq
  %v608 = vshrl.u32 %v607, 7
  %v609 = vsub.s32 0, %v608
  %v610 = vrot.slane %v559, %v609
  %v611 = vlaneseq
  %v612 = vshrl.u32 %v611, 7
  %v613 = vsub.s32 0, %v612
  %v614 = vrot.slane %v567, %v613
  %v615 = vlaneseq
  %v616 = vshrl.u32 %v615, 7
  %v617 = vsub.s32 0, %v616
  %v618 = vrot.slane %v569, %v617
  %v619 = vlaneseq
  %v620 = vshrl.u32 %v619, 7
  %v621 = vsub.s32 0, %v620
  %v622 = vrot.slane %v552, %v621
  %v623 = vlaneseq
  %v624 = vshrl.u32 %v623, 7
  %v625 = vsub.s32 0, %v624
  %v626 = vrot.slane %v566, %v625
  %v627 = vlaneseq
  %v628 = vshrl.u32 %v627, 7
  %v629 = vsub.s32 0, %v628
  %v630 = vrot.slane %v568, %v629
  %v631 = vlaneseq
  %v632 = vshrl.u32 %v631, 7
  %v633 = vsub.s32 0, %v632
  %v634 = vrot.slane %v570, %v633
  %651 = vrot.lane.b32.xlu0 %v142, 32
  %v652 = vpop.permute.xlu0 %651
  %653 = vrot.lane.b32.xlu0 %v147, 32
  %v654 = vpop.permute.xlu0 %653
  %v657 = vadd.f32 %v574, %v652
  %v658 = vadd.f32 %v574, %v654
  %v659 = vadd.f32 %v578, %v652
  %v660 = vadd.f32 %v578, %v654
  %v661 = vadd.f32 %v582, %v652
  %v662 = vadd.f32 %v582, %v654
  %v663 = vadd.f32 %v586, %v652
  %v664 = vadd.f32 %v586, %v654
  %v665 = vadd.f32 %v590, %v652
  %v666 = vadd.f32 %v590, %v654
  %v667 = vadd.f32 %v594, %v652
  %v668 = vadd.f32 %v594, %v654
  %v669 = vadd.f32 %v598, %v652
  %v670 = vadd.f32 %v598, %v654
  %v671 = vadd.f32 %v602, %v652
  %v672 = vadd.f32 %v602, %v654
  %v673 = vadd.f32 %v606, %v652
  %v674 = vadd.f32 %v606, %v654
  %v675 = vadd.f32 %v610, %v652
  %v676 = vadd.f32 %v610, %v654
  %v677 = vadd.f32 %v614, %v652
  %v678 = vadd.f32 %v614, %v654
  %v679 = vadd.f32 %v618, %v652
  %v680 = vadd.f32 %v618, %v654
  %v681 = vadd.f32 %v622, %v652
  %v682 = vadd.f32 %v622, %v654
  %v683 = vadd.f32 %v626, %v652
  %v684 = vadd.f32 %v626, %v654
  %v685 = vadd.f32 %v630, %v652
  %v686 = vadd.f32 %v630, %v654
  %v687 = vadd.f32 %v634, %v652
  %v688 = vadd.f32 %v634, %v654
  %721 = vrot.lane.b32.xlu0 %v313, 32
  %v722 = vpop.permute.xlu0 %721
  %723 = vrot.lane.b32.xlu0 %v318, 32
  %v724 = vpop.permute.xlu0 %723
  %725 = vrot.lane.b32.xlu0 %v323, 32
  %v726 = vpop.permute.xlu0 %725
  %727 = vrot.lane.b32.xlu0 %v328, 32
  %v728 = vpop.permute.xlu0 %727
  %729 = vrot.lane.b32.xlu0 %v333, 32
  %v730 = vpop.permute.xlu0 %729
  %731 = vrot.lane.b32.xlu0 %v338, 32
  %v732 = vpop.permute.xlu0 %731
  %733 = vrot.lane.b32.xlu0 %v343, 32
  %v734 = vpop.permute.xlu0 %733
  %735 = vrot.lane.b32.xlu0 %v348, 32
  %v736 = vpop.permute.xlu0 %735
  %737 = vrot.lane.b32.xlu0 %v353, 32
  %v738 = vpop.permute.xlu0 %737
  %739 = vrot.lane.b32.xlu0 %v358, 32
  %v740 = vpop.permute.xlu0 %739
  %741 = vrot.lane.b32.xlu0 %v363, 32
  %v742 = vpop.permute.xlu0 %741
  %743 = vrot.lane.b32.xlu0 %v368, 32
  %v744 = vpop.permute.xlu0 %743
  %745 = vrot.lane.b32.xlu0 %v373, 32
  %v746 = vpop.permute.xlu0 %745
  %747 = vrot.lane.b32.xlu0 %v378, 32
  %v748 = vpop.permute.xlu0 %747
  %749 = vrot.lane.b32.xlu0 %v383, 32
  %v750 = vpop.permute.xlu0 %749
  %751 = vrot.lane.b32.xlu0 %v388, 32
  %v752 = vpop.permute.xlu0 %751
  %753 = vrot.lane.b32.xlu0 %v393, 32
  %v754 = vpop.permute.xlu0 %753
  %755 = vrot.lane.b32.xlu0 %v398, 32
  %v756 = vpop.permute.xlu0 %755
  %757 = vrot.lane.b32.xlu0 %v403, 32
  %v758 = vpop.permute.xlu0 %757
  %759 = vrot.lane.b32.xlu0 %v408, 32
  %v760 = vpop.permute.xlu0 %759
  %761 = vrot.lane.b32.xlu0 %v413, 32
  %v762 = vpop.permute.xlu0 %761
  %763 = vrot.lane.b32.xlu0 %v418, 32
  %v764 = vpop.permute.xlu0 %763
  %765 = vrot.lane.b32.xlu0 %v423, 32
  %v766 = vpop.permute.xlu0 %765
  %767 = vrot.lane.b32.xlu0 %v428, 32
  %v768 = vpop.permute.xlu0 %767
  %769 = vrot.lane.b32.xlu0 %v433, 32
  %v770 = vpop.permute.xlu0 %769
  %771 = vrot.lane.b32.xlu0 %v438, 32
  %v772 = vpop.permute.xlu0 %771
  %773 = vrot.lane.b32.xlu0 %v443, 32
  %v774 = vpop.permute.xlu0 %773
  %775 = vrot.lane.b32.xlu0 %v448, 32
  %v776 = vpop.permute.xlu0 %775
  %777 = vrot.lane.b32.xlu0 %v453, 32
  %v778 = vpop.permute.xlu0 %777
  %779 = vrot.lane.b32.xlu0 %v458, 32
  %v780 = vpop.permute.xlu0 %779
  %781 = vrot.lane.b32.xlu0 %v463, 32
  %v782 = vpop.permute.xlu0 %781
  %783 = vrot.lane.b32.xlu0 %v468, 32
  %v784 = vpop.permute.xlu0 %783
  %v817 = vadd.f32 %v657, %v722
  %v818 = vadd.f32 %v658, %v724
  %v819 = vadd.f32 %v659, %v726
  %v820 = vadd.f32 %v660, %v728
  %v821 = vadd.f32 %v661, %v730
  %v822 = vadd.f32 %v662, %v732
  %v823 = vadd.f32 %v663, %v734
  %v824 = vadd.f32 %v664, %v736
  %v825 = vadd.f32 %v665, %v738
  %v826 = vadd.f32 %v666, %v740
  %v827 = vadd.f32 %v667, %v742
  %v828 = vadd.f32 %v668, %v744
  %v829 = vadd.f32 %v669, %v746
  %v830 = vadd.f32 %v670, %v748
  %v831 = vadd.f32 %v671, %v750
  %v832 = vadd.f32 %v672, %v752
  %v833 = vadd.f32 %v673, %v754
  %v834 = vadd.f32 %v674, %v756
  %v835 = vadd.f32 %v675, %v758
  %v836 = vadd.f32 %v676, %v760
  %v837 = vadd.f32 %v677, %v762
  %v838 = vadd.f32 %v678, %v764
  %v839 = vadd.f32 %v679, %v766
  %v840 = vadd.f32 %v680, %v768
  %v841 = vadd.f32 %v681, %v770
  %v842 = vadd.f32 %v682, %v772
  %v843 = vadd.f32 %v683, %v774
  %v844 = vadd.f32 %v684, %v776
  %v845 = vadd.f32 %v685, %v778
  %v846 = vadd.f32 %v686, %v780
  %v847 = vadd.f32 %v687, %v782
  %v848 = vadd.f32 %v688, %v784
  %v849 = vmul.f32 %v817, 0.2
  %v850 = vmul.f32 %v818, 0.2
  %v851 = vmul.f32 %v819, 0.2
  %v852 = vmul.f32 %v820, 0.2
  %v853 = vmul.f32 %v821, 0.2
  %v854 = vmul.f32 %v822, 0.2
  %v855 = vmul.f32 %v823, 0.2
  %v856 = vmul.f32 %v824, 0.2
  %v857 = vmul.f32 %v825, 0.2
  %v858 = vmul.f32 %v826, 0.2
  %v859 = vmul.f32 %v827, 0.2
  %v860 = vmul.f32 %v828, 0.2
  %v861 = vmul.f32 %v829, 0.2
  %v862 = vmul.f32 %v830, 0.2
  %v863 = vmul.f32 %v831, 0.2
  %v864 = vmul.f32 %v832, 0.2
  %v865 = vmul.f32 %v833, 0.2
  %v866 = vmul.f32 %v834, 0.2
  %v867 = vmul.f32 %v835, 0.2
  %v868 = vmul.f32 %v836, 0.2
  %v869 = vmul.f32 %v837, 0.2
  %v870 = vmul.f32 %v838, 0.2
  %v871 = vmul.f32 %v839, 0.2
  %v872 = vmul.f32 %v840, 0.2
  %v873 = vmul.f32 %v841, 0.2
  %v874 = vmul.f32 %v842, 0.2
  %v875 = vmul.f32 %v843, 0.2
  %v876 = vmul.f32 %v844, 0.2
  %v877 = vmul.f32 %v845, 0.2
  %v878 = vmul.f32 %v846, 0.2
  %v879 = vmul.f32 %v847, 0.2
  %v880 = vmul.f32 %v848, 0.2
  %v881 = vmax.f32 %v817, %v849
  %v882 = vmax.f32 %v818, %v850
  %v883 = vmax.f32 %v819, %v851
  %v884 = vmax.f32 %v820, %v852
  %v885 = vmax.f32 %v821, %v853
  %v886 = vmax.f32 %v822, %v854
  %v887 = vmax.f32 %v823, %v855
  %v888 = vmax.f32 %v824, %v856
  %v889 = vmax.f32 %v825, %v857
  %v890 = vmax.f32 %v826, %v858
  %v891 = vmax.f32 %v827, %v859
  %v892 = vmax.f32 %v828, %v860
  %v893 = vmax.f32 %v829, %v861
  %v894 = vmax.f32 %v830, %v862
  %v895 = vmax.f32 %v831, %v863
  %v896 = vmax.f32 %v832, %v864
  %v897 = vmax.f32 %v833, %v865
  %v898 = vmax.f32 %v834, %v866
  %v899 = vmax.f32 %v835, %v867
  %v900 = vmax.f32 %v836, %v868
  %v901 = vmax.f32 %v837, %v869
  %v902 = vmax.f32 %v838, %v870
  %v903 = vmax.f32 %v839, %v871
  %v904 = vmax.f32 %v840, %v872
  %v905 = vmax.f32 %v841, %v873
  %v906 = vmax.f32 %v842, %v874
  %v907 = vmax.f32 %v843, %v875
  %v908 = vmax.f32 %v844, %v876
  %v909 = vmax.f32 %v845, %v877
  %v910 = vmax.f32 %v846, %v878
  %v911 = vmax.f32 %v847, %v879
  %v912 = vmax.f32 %v848, %v880
  %945 = vrot.lane.b32.xlu0 %v881, 96
  %v946 = vpop.permute.xlu0 %945
  %947 = vrot.lane.b32.xlu0 %v882, 96
  %v948 = vpop.permute.xlu0 %947
  %949 = vrot.lane.b32.xlu0 %v883, 96
  %v950 = vpop.permute.xlu0 %949
  %951 = vrot.lane.b32.xlu0 %v884, 96
  %v952 = vpop.permute.xlu0 %951
  %953 = vrot.lane.b32.xlu0 %v885, 96
  %v954 = vpop.permute.xlu0 %953
  %955 = vrot.lane.b32.xlu0 %v886, 96
  %v956 = vpop.permute.xlu0 %955
  %957 = vrot.lane.b32.xlu0 %v887, 96
  %v958 = vpop.permute.xlu0 %957
  %959 = vrot.lane.b32.xlu0 %v888, 96
  %v960 = vpop.permute.xlu0 %959
  %961 = vrot.lane.b32.xlu0 %v889, 96
  %v962 = vpop.permute.xlu0 %961
  %963 = vrot.lane.b32.xlu0 %v890, 96
  %v964 = vpop.permute.xlu0 %963
  %965 = vrot.lane.b32.xlu0 %v891, 96
  %v966 = vpop.permute.xlu0 %965
  %967 = vrot.lane.b32.xlu0 %v892, 96
  %v968 = vpop.permute.xlu0 %967
  %969 = vrot.lane.b32.xlu0 %v893, 96
  %v970 = vpop.permute.xlu0 %969
  %971 = vrot.lane.b32.xlu0 %v894, 96
  %v972 = vpop.permute.xlu0 %971
  %973 = vrot.lane.b32.xlu0 %v895, 96
  %v974 = vpop.permute.xlu0 %973
  %975 = vrot.lane.b32.xlu0 %v896, 96
  %v976 = vpop.permute.xlu0 %975
  %977 = vrot.lane.b32.xlu0 %v897, 96
  %v978 = vpop.permute.xlu0 %977
  %979 = vrot.lane.b32.xlu0 %v898, 96
  %v980 = vpop.permute.xlu0 %979
  %981 = vrot.lane.b32.xlu0 %v899, 96
  %v982 = vpop.permute.xlu0 %981
  %983 = vrot.lane.b32.xlu0 %v900, 96
  %v984 = vpop.permute.xlu0 %983
  %985 = vrot.lane.b32.xlu0 %v901, 96
  %v986 = vpop.permute.xlu0 %985
  %987 = vrot.lane.b32.xlu0 %v902, 96
  %v988 = vpop.permute.xlu0 %987
  %989 = vrot.lane.b32.xlu0 %v903, 96
  %v990 = vpop.permute.xlu0 %989
  %991 = vrot.lane.b32.xlu0 %v904, 96
  %v992 = vpop.permute.xlu0 %991
  %993 = vrot.lane.b32.xlu0 %v905, 96
  %v994 = vpop.permute.xlu0 %993
  %995 = vrot.lane.b32.xlu0 %v906, 96
  %v996 = vpop.permute.xlu0 %995
  %997 = vrot.lane.b32.xlu0 %v907, 96
  %v998 = vpop.permute.xlu0 %997
  %999 = vrot.lane.b32.xlu0 %v908, 96
  %v1000 = vpop.permute.xlu0 %999
  %1001 = vrot.lane.b32.xlu0 %v909, 96
  %v1002 = vpop.permute.xlu0 %1001
  %1003 = vrot.lane.b32.xlu0 %v910, 96
  %v1004 = vpop.permute.xlu0 %1003
  %1005 = vrot.lane.b32.xlu0 %v911, 96
  %v1006 = vpop.permute.xlu0 %1005
  %1007 = vrot.lane.b32.xlu0 %v912, 96
  %v1008 = vpop.permute.xlu0 %1007
  %vm1009 = vcmask 261120
  %v1010 = vsel %vm1009, %v946, 0
  %v1012 = vsel %vm1009, %v948, 0
  %v1014 = vsel %vm1009, %v950, 0
  %v1016 = vsel %vm1009, %v952, 0
  %v1018 = vsel %vm1009, %v954, 0
  %v1020 = vsel %vm1009, %v956, 0
  %v1022 = vsel %vm1009, %v958, 0
  %v1024 = vsel %vm1009, %v960, 0
  %v1026 = vsel %vm1009, %v962, 0
  %v1028 = vsel %vm1009, %v964, 0
  %v1030 = vsel %vm1009, %v966, 0
  %v1032 = vsel %vm1009, %v968, 0
  %v1034 = vsel %vm1009, %v970, 0
  %v1036 = vsel %vm1009, %v972, 0
  %v1038 = vsel %vm1009, %v974, 0
  %v1040 = vsel %vm1009, %v976, 0
  %v1042 = vsel %vm1009, %v978, 0
  %v1044 = vsel %vm1009, %v980, 0
  %v1046 = vsel %vm1009, %v982, 0
  %v1048 = vsel %vm1009, %v984, 0
  %v1050 = vsel %vm1009, %v986, 0
  %v1052 = vsel %vm1009, %v988, 0
  %v1054 = vsel %vm1009, %v990, 0
  %v1056 = vsel %vm1009, %v992, 0
  %v1058 = vsel %vm1009, %v994, 0
  %v1060 = vsel %vm1009, %v996, 0
  %v1062 = vsel %vm1009, %v998, 0
  %v1064 = vsel %vm1009, %v1000, 0
  %v1066 = vsel %vm1009, %v1002, 0
  %v1068 = vsel %vm1009, %v1004, 0
  %v1070 = vsel %vm1009, %v1006, 0
  %v1072 = vsel %vm1009, %v1008, 0
  %1074 = vmatprep.subr.mxu0 0.0
  %1075 = vmatpush1.msra.mxu0 %v56
  %1076 = vmatprep.subr.mxu0 0.0
  %1077 = vmatpush1.msra.mxu0 %v57
  %1078 = vmatprep.subr.mxu0 0.0
  %1079 = vmatpush1.msra.mxu0 %v58
  %1080 = vmatprep.subr.mxu0 0.0
  %1081 = vmatpush1.msra.mxu0 %v59
  %1082 = vmatprep.subr.mxu0 0.0
  %1083 = vmatpush1.msra.mxu0 0.0
  %1084 = vmatprep.subr.mxu0 0.0
  %1085 = vmatpush1.msra.mxu0 0.0
  %1086 = vmatprep.subr.mxu0 0.0
  %1087 = vmatpush1.msra.mxu0 0.0
  %1088 = vmatprep.subr.mxu0 0.0
  %1089 = vmatpush1.msra.mxu0 0.0
  %1090 = vmatprep.subr.mxu0 0.0
  %1091 = vmatpush1.msra.mxu0 0.0
  %1092 = vmatprep.subr.mxu0 0.0
  %1093 = vmatpush1.msra.mxu0 0.0
  %1094 = vmatprep.subr.mxu0 0.0
  %1095 = vmatpush1.msra.mxu0 0.0
  %1096 = vmatprep.subr.mxu0 0.0
  %1097 = vmatpush1.msra.mxu0 0.0
  %1098 = vmatprep.subr.mxu0 0.0
  %1099 = vmatpush1.msra.mxu0 0.0
  %1100 = vmatprep.subr.mxu0 0.0
  %1101 = vmatpush1.msra.mxu0 0.0
  %1102 = vmatprep.subr.mxu0 0.0
  %1103 = vmatpush1.msra.mxu0 0.0
  %1104 = vmatprep.subr.mxu0 0.0
  %1105 = vmatpush1.msra.mxu0 0.0
  %1106 = vmatprep.subr.mxu0 0.0
  %1107 = vmatpush1.msra.mxu0 0.0
  %1108 = vmatprep.subr.mxu0 0.0
  %1109 = vmatpush1.msra.mxu0 0.0
  %1110 = vmatprep.subr.mxu0 0.0
  %1111 = vmatpush1.msra.mxu0 0.0
  %1112 = vmatprep.subr.mxu0 0.0
  %1113 = vmatpush1.msra.mxu0 0.0
  %1114 = vmatprep.subr.mxu0 0.0
  %1115 = vmatpush1.msra.mxu0 0.0
  %1116 = vmatprep.subr.mxu0 0.0
  %1117 = vmatpush1.msra.mxu0 0.0
  %1118 = vmatprep.subr.mxu0 0.0
  %1119 = vmatpush1.msra.mxu0 0.0
  %1120 = vmatprep.subr.mxu0 0.0
  %1121 = vmatpush1.msra.mxu0 0.0
  %1122 = vmatprep.subr.mxu0 0.0
  %1123 = vmatpush1.msra.mxu0 0.0
  %1124 = vmatprep.subr.mxu0 0.0
  %1125 = vmatpush1.msra.mxu0 0.0
  %1126 = vmatprep.subr.mxu0 0.0
  %1127 = vmatpush1.msra.mxu0 0.0
  %1128 = vmatprep.subr.mxu0 0.0
  %1129 = vmatpush1.msra.mxu0 0.0
  %1130 = vmatprep.subr.mxu0 0.0
  %1131 = vmatpush1.msra.mxu0 0.0
  %1132 = vmatprep.subr.mxu0 0.0
  %1133 = vmatpush1.msra.mxu0 0.0
  %1134 = vmatprep.subr.mxu0 0.0
  %1135 = vmatpush1.msra.mxu0 0.0
  %1136 = vmatprep.subr.mxu0 0.0
  %1137 = vmatpush1.msra.mxu0 0.0
  %1138 = vmatprep.mubr.f32.mxu0 0.0
  %1139 = vmatmul.mubr.f32.gmra.mrb[0].mxu0 %v1010
  %v1140 = vpop.f32.mrb[0].mxu0
  %v1141 = vadd.f32 0.0, %v1140
  %v1142 = vpop.f32.mrb[0].mxu0
  %1143 = vmatprep.mubr.f32.mxu0 0.0
  %1144 = vmatmul.mubr.f32.gmra.mrb[0].mxu0 %v1012
  %v1145 = vpop.f32.mrb[0].mxu0
  %v1146 = vadd.f32 0.0, %v1145
  %v1147 = vpop.f32.mrb[0].mxu0
  %1148 = vmatprep.mubr.f32.mxu0 0.0
  %1149 = vmatmul.mubr.f32.gmra.mrb[0].mxu0 %v1014
  %v1150 = vpop.f32.mrb[0].mxu0
  %v1151 = vadd.f32 0.0, %v1150
  %v1152 = vpop.f32.mrb[0].mxu0
  %1153 = vmatprep.mubr.f32.mxu0 0.0
  %1154 = vmatmul.mubr.f32.gmra.mrb[0].mxu0 %v1016
  %v1155 = vpop.f32.mrb[0].mxu0
  %v1156 = vadd.f32 0.0, %v1155
  %v1157 = vpop.f32.mrb[0].mxu0
  %1158 = vmatprep.mubr.f32.mxu0 0.0
  %1159 = vmatmul.mubr.f32.gmra.mrb[0].mxu0 %v1018
  %v1160 = vpop.f32.mrb[0].mxu0
  %v1161 = vadd.f32 0.0, %v1160
  %v1162 = vpop.f32.mrb[0].mxu0
  %1163 = vmatprep.mubr.f32.mxu0 0.0
  %1164 = vmatmul.mubr.f32.gmra.mrb[0].mxu0 %v1020
  %v1165 = vpop.f32.mrb[0].mxu0
  %v1166 = vadd.f32 0.0, %v1165
  %v1167 = vpop.f32.mrb[0].mxu0
  %1168 = vmatprep.mubr.f32.mxu0 0.0
  %1169 = vmatmul.mubr.f32.gmra.mrb[0].mxu0 %v1022
  %v1170 = vpop.f32.mrb[0].mxu0
  %v1171 = vadd.f32 0.0, %v1170
  %v1172 = vpop.f32.mrb[0].mxu0
  %1173 = vmatprep.mubr.f32.mxu0 0.0
  %1174 = vmatmul.mubr.f32.gmra.mrb[0].mxu0 %v1024
  %v1175 = vpop.f32.mrb[0].mxu0
  %v1176 = vadd.f32 0.0, %v1175
  %v1177 = vpop.f32.mrb[0].mxu0
  %1178 = vmatprep.mubr.f32.mxu0 0.0
  %1179 = vmatmul.mubr.f32.gmra.mrb[0].mxu0 %v1026
  %v1180 = vpop.f32.mrb[0].mxu0
  %v1181 = vadd.f32 0.0, %v1180
  %v1182 = vpop.f32.mrb[0].mxu0
  %1183 = vmatprep.mubr.f32.mxu0 0.0
  %1184 = vmatmul.mubr.f32.gmra.mrb[0].mxu0 %v1028
  %v1185 = vpop.f32.mrb[0].mxu0
  %v1186 = vadd.f32 0.0, %v1185
  %v1187 = vpop.f32.mrb[0].mxu0
  %1188 = vmatprep.mubr.f32.mxu0 0.0
  %1189 = vmatmul.mubr.f32.gmra.mrb[0].mxu0 %v1030
  %v1190 = vpop.f32.mrb[0].mxu0
  %v1191 = vadd.f32 0.0, %v1190
  %v1192 = vpop.f32.mrb[0].mxu0
  %1193 = vmatprep.mubr.f32.mxu0 0.0
  %1194 = vmatmul.mubr.f32.gmra.mrb[0].mxu0 %v1032
  %v1195 = vpop.f32.mrb[0].mxu0
  %v1196 = vadd.f32 0.0, %v1195
  %v1197 = vpop.f32.mrb[0].mxu0
  %1198 = vmatprep.mubr.f32.mxu0 0.0
  %1199 = vmatmul.mubr.f32.gmra.mrb[0].mxu0 %v1034
  %v1200 = vpop.f32.mrb[0].mxu0
  %v1201 = vadd.f32 0.0, %v1200
  %v1202 = vpop.f32.mrb[0].mxu0
  %1203 = vmatprep.mubr.f32.mxu0 0.0
  %1204 = vmatmul.mubr.f32.gmra.mrb[0].mxu0 %v1036
  %v1205 = vpop.f32.mrb[0].mxu0
  %v1206 = vadd.f32 0.0, %v1205
  %v1207 = vpop.f32.mrb[0].mxu0
  %1208 = vmatprep.mubr.f32.mxu0 0.0
  %1209 = vmatmul.mubr.f32.gmra.mrb[0].mxu0 %v1038
  %v1210 = vpop.f32.mrb[0].mxu0
  %v1211 = vadd.f32 0.0, %v1210
  %v1212 = vpop.f32.mrb[0].mxu0
  %1213 = vmatprep.mubr.f32.mxu0 0.0
  %1214 = vmatmul.mubr.f32.gmra.mrb[0].mxu0 %v1040
  %v1215 = vpop.f32.mrb[0].mxu0
  %v1216 = vadd.f32 0.0, %v1215
  %v1217 = vpop.f32.mrb[0].mxu0
  %1218 = vmatprep.mubr.f32.mxu0 0.0
  %1219 = vmatmul.mubr.f32.gmra.mrb[0].mxu0 %v1042
  %v1220 = vpop.f32.mrb[0].mxu0
  %v1221 = vadd.f32 0.0, %v1220
  %v1222 = vpop.f32.mrb[0].mxu0
  %1223 = vmatprep.mubr.f32.mxu0 0.0
  %1224 = vmatmul.mubr.f32.gmra.mrb[0].mxu0 %v1044
  %v1225 = vpop.f32.mrb[0].mxu0
  %v1226 = vadd.f32 0.0, %v1225
  %v1227 = vpop.f32.mrb[0].mxu0
  %1228 = vmatprep.mubr.f32.mxu0 0.0
  %1229 = vmatmul.mubr.f32.gmra.mrb[0].mxu0 %v1046
  %v1230 = vpop.f32.mrb[0].mxu0
  %v1231 = vadd.f32 0.0, %v1230
  %v1232 = vpop.f32.mrb[0].mxu0
  %1233 = vmatprep.mubr.f32.mxu0 0.0
  %1234 = vmatmul.mubr.f32.gmra.mrb[0].mxu0 %v1048
  %v1235 = vpop.f32.mrb[0].mxu0
  %v1236 = vadd.f32 0.0, %v1235
  %v1237 = vpop.f32.mrb[0].mxu0
  %1238 = vmatprep.mubr.f32.mxu0 0.0
  %1239 = vmatmul.mubr.f32.gmra.mrb[0].mxu0 %v1050
  %v1240 = vpop.f32.mrb[0].mxu0
  %v1241 = vadd.f32 0.0, %v1240
  %v1242 = vpop.f32.mrb[0].mxu0
  %1243 = vmatprep.mubr.f32.mxu0 0.0
  %1244 = vmatmul.mubr.f32.gmra.mrb[0].mxu0 %v1052
  %v1245 = vpop.f32.mrb[0].mxu0
  %v1246 = vadd.f32 0.0, %v1245
  %v1247 = vpop.f32.mrb[0].mxu0
  %1248 = vmatprep.mubr.f32.mxu0 0.0
  %1249 = vmatmul.mubr.f32.gmra.mrb[0].mxu0 %v1054
  %v1250 = vpop.f32.mrb[0].mxu0
  %v1251 = vadd.f32 0.0, %v1250
  %v1252 = vpop.f32.mrb[0].mxu0
  %1253 = vmatprep.mubr.f32.mxu0 0.0
  %1254 = vmatmul.mubr.f32.gmra.mrb[0].mxu0 %v1056
  %v1255 = vpop.f32.mrb[0].mxu0
  %v1256 = vadd.f32 0.0, %v1255
  %v1257 = vpop.f32.mrb[0].mxu0
  %1258 = vmatprep.mubr.f32.mxu0 0.0
  %1259 = vmatmul.mubr.f32.gmra.mrb[0].mxu0 %v1058
  %v1260 = vpop.f32.mrb[0].mxu0
  %v1261 = vadd.f32 0.0, %v1260
  %v1262 = vpop.f32.mrb[0].mxu0
  %1263 = vmatprep.mubr.f32.mxu0 0.0
  %1264 = vmatmul.mubr.f32.gmra.mrb[0].mxu0 %v1060
  %v1265 = vpop.f32.mrb[0].mxu0
  %v1266 = vadd.f32 0.0, %v1265
  %v1267 = vpop.f32.mrb[0].mxu0
  %1268 = vmatprep.mubr.f32.mxu0 0.0
  %1269 = vmatmul.mubr.f32.gmra.mrb[0].mxu0 %v1062
  %v1270 = vpop.f32.mrb[0].mxu0
  %v1271 = vadd.f32 0.0, %v1270
  %v1272 = vpop.f32.mrb[0].mxu0
  %1273 = vmatprep.mubr.f32.mxu0 0.0
  %1274 = vmatmul.mubr.f32.gmra.mrb[0].mxu0 %v1064
  %v1275 = vpop.f32.mrb[0].mxu0
  %v1276 = vadd.f32 0.0, %v1275
  %v1277 = vpop.f32.mrb[0].mxu0
  %1278 = vmatprep.mubr.f32.mxu0 0.0
  %1279 = vmatmul.mubr.f32.gmra.mrb[0].mxu0 %v1066
  %v1280 = vpop.f32.mrb[0].mxu0
  %v1281 = vadd.f32 0.0, %v1280
  %v1282 = vpop.f32.mrb[0].mxu0
  %1283 = vmatprep.mubr.f32.mxu0 0.0
  %1284 = vmatmul.mubr.f32.gmra.mrb[0].mxu0 %v1068
  %v1285 = vpop.f32.mrb[0].mxu0
  %v1286 = vadd.f32 0.0, %v1285
  %v1287 = vpop.f32.mrb[0].mxu0
  %1288 = vmatprep.mubr.f32.mxu0 0.0
  %1289 = vmatmul.mubr.f32.gmra.mrb[0].mxu0 %v1070
  %v1290 = vpop.f32.mrb[0].mxu0
  %v1291 = vadd.f32 0.0, %v1290
  %v1292 = vpop.f32.mrb[0].mxu0
  %1293 = vmatprep.mubr.f32.mxu0 0.0
  %1294 = vmatmul.mubr.f32.gmra.mrb[0].mxu0 %v1072
  %v1295 = vpop.f32.mrb[0].mxu0
  %v1296 = vadd.f32 0.0, %v1295
  %v1297 = vpop.f32.mrb[0].mxu0
  %1298 = vdwg.mxu0
  %v1299 = vlaneseq
  %v1300 = vshrl.u32 %v1299, 7
  %v1301 = vsub.s32 0, %v1300
  %v1302 = vrot.slane %v17, %v1301
  %1304 = vbcast.lane.b32.xlu0 %v1302, 256
  %v1305 = vpop.permute.xlu0 %1304
  %s1307 = sor.u32 256, 8
  %1308 = vbcast.lane.b32.xlu0 %v1302, %s1307
  %v1309 = vpop.permute.xlu0 %1308
  %v1310 = vlaneseq
  %v1311 = vshrl.u32 %v1310, 7
  %v1312 = vsub.s32 1, %v1311
  %v1313 = vrot.slane %v17, %v1312
  %1315 = vbcast.lane.b32.xlu0 %v1313, 256
  %v1316 = vpop.permute.xlu0 %1315
  %s1318 = sor.u32 256, 8
  %1319 = vbcast.lane.b32.xlu0 %v1313, %s1318
  %v1320 = vpop.permute.xlu0 %1319
  %v1321 = vlaneseq
  %v1322 = vshrl.u32 %v1321, 7
  %v1323 = vsub.s32 2, %v1322
  %v1324 = vrot.slane %v17, %v1323
  %1326 = vbcast.lane.b32.xlu0 %v1324, 256
  %v1327 = vpop.permute.xlu0 %1326
  %s1329 = sor.u32 256, 8
  %1330 = vbcast.lane.b32.xlu0 %v1324, %s1329
  %v1331 = vpop.permute.xlu0 %1330
  %v1332 = vlaneseq
  %v1333 = vshrl.u32 %v1332, 7
  %v1334 = vsub.s32 3, %v1333
  %v1335 = vrot.slane %v17, %v1334
  %1337 = vbcast.lane.b32.xlu0 %v1335, 256
  %v1338 = vpop.permute.xlu0 %1337
  %s1340 = sor.u32 256, 8
  %1341 = vbcast.lane.b32.xlu0 %v1335, %s1340
  %v1342 = vpop.permute.xlu0 %1341
  %v1343 = vlaneseq
  %v1344 = vshrl.u32 %v1343, 7
  %v1345 = vsub.s32 4, %v1344
  %v1346 = vrot.slane %v17, %v1345
  %1348 = vbcast.lane.b32.xlu0 %v1346, 256
  %v1349 = vpop.permute.xlu0 %1348
  %s1351 = sor.u32 256, 8
  %1352 = vbcast.lane.b32.xlu0 %v1346, %s1351
  %v1353 = vpop.permute.xlu0 %1352
  %v1354 = vlaneseq
  %v1355 = vshrl.u32 %v1354, 7
  %v1356 = vsub.s32 5, %v1355
  %v1357 = vrot.slane %v17, %v1356
  %1359 = vbcast.lane.b32.xlu0 %v1357, 256
  %v1360 = vpop.permute.xlu0 %1359
  %s1362 = sor.u32 256, 8
  %1363 = vbcast.lane.b32.xlu0 %v1357, %s1362
  %v1364 = vpop.permute.xlu0 %1363
  %v1365 = vlaneseq
  %v1366 = vshrl.u32 %v1365, 7
  %v1367 = vsub.s32 6, %v1366
  %v1368 = vrot.slane %v17, %v1367
  %1370 = vbcast.lane.b32.xlu0 %v1368, 256
  %v1371 = vpop.permute.xlu0 %1370
  %s1373 = sor.u32 256, 8
  %1374 = vbcast.lane.b32.xlu0 %v1368, %s1373
  %v1375 = vpop.permute.xlu0 %1374
  %v1376 = vlaneseq
  %v1377 = vshrl.u32 %v1376, 7
  %v1378 = vsub.s32 7, %v1377
  %v1379 = vrot.slane %v17, %v1378
  %1381 = vbcast.lane.b32.xlu0 %v1379, 256
  %v1382 = vpop.permute.xlu0 %1381
  %s1384 = sor.u32 256, 8
  %1385 = vbcast.lane.b32.xlu0 %v1379, %s1384
  %v1386 = vpop.permute.xlu0 %1385
  %v1387 = vlaneseq
  %v1388 = vshrl.u32 %v1387, 7
  %v1389 = vsub.s32 0, %v1388
  %v1390 = vrot.slane %v18, %v1389
  %1392 = vbcast.lane.b32.xlu0 %v1390, 256
  %v1393 = vpop.permute.xlu0 %1392
  %s1395 = sor.u32 256, 8
  %1396 = vbcast.lane.b32.xlu0 %v1390, %s1395
  %v1397 = vpop.permute.xlu0 %1396
  %v1398 = vlaneseq
  %v1399 = vshrl.u32 %v1398, 7
  %v1400 = vsub.s32 1, %v1399
  %v1401 = vrot.slane %v18, %v1400
  %1403 = vbcast.lane.b32.xlu0 %v1401, 256
  %v1404 = vpop.permute.xlu0 %1403
  %s1406 = sor.u32 256, 8
  %1407 = vbcast.lane.b32.xlu0 %v1401, %s1406
  %v1408 = vpop.permute.xlu0 %1407
  %v1409 = vlaneseq
  %v1410 = vshrl.u32 %v1409, 7
  %v1411 = vsub.s32 2, %v1410
  %v1412 = vrot.slane %v18, %v1411
  %1414 = vbcast.lane.b32.xlu0 %v1412, 256
  %v1415 = vpop.permute.xlu0 %1414
  %s1417 = sor.u32 256, 8
  %1418 = vbcast.lane.b32.xlu0 %v1412, %s1417
  %v1419 = vpop.permute.xlu0 %1418
  %v1420 = vlaneseq
  %v1421 = vshrl.u32 %v1420, 7
  %v1422 = vsub.s32 3, %v1421
  %v1423 = vrot.slane %v18, %v1422
  %1425 = vbcast.lane.b32.xlu0 %v1423, 256
  %v1426 = vpop.permute.xlu0 %1425
  %s1428 = sor.u32 256, 8
  %1429 = vbcast.lane.b32.xlu0 %v1423, %s1428
  %v1430 = vpop.permute.xlu0 %1429
  %v1431 = vlaneseq
  %v1432 = vshrl.u32 %v1431, 7
  %v1433 = vsub.s32 4, %v1432
  %v1434 = vrot.slane %v18, %v1433
  %1436 = vbcast.lane.b32.xlu0 %v1434, 256
  %v1437 = vpop.permute.xlu0 %1436
  %s1439 = sor.u32 256, 8
  %1440 = vbcast.lane.b32.xlu0 %v1434, %s1439
  %v1441 = vpop.permute.xlu0 %1440
  %v1442 = vlaneseq
  %v1443 = vshrl.u32 %v1442, 7
  %v1444 = vsub.s32 5, %v1443
  %v1445 = vrot.slane %v18, %v1444
  %1447 = vbcast.lane.b32.xlu0 %v1445, 256
  %v1448 = vpop.permute.xlu0 %1447
  %s1450 = sor.u32 256, 8
  %1451 = vbcast.lane.b32.xlu0 %v1445, %s1450
  %v1452 = vpop.permute.xlu0 %1451
  %v1453 = vlaneseq
  %v1454 = vshrl.u32 %v1453, 7
  %v1455 = vsub.s32 6, %v1454
  %v1456 = vrot.slane %v18, %v1455
  %1458 = vbcast.lane.b32.xlu0 %v1456, 256
  %v1459 = vpop.permute.xlu0 %1458
  %s1461 = sor.u32 256, 8
  %1462 = vbcast.lane.b32.xlu0 %v1456, %s1461
  %v1463 = vpop.permute.xlu0 %1462
  %v1464 = vlaneseq
  %v1465 = vshrl.u32 %v1464, 7
  %v1466 = vsub.s32 7, %v1465
  %v1467 = vrot.slane %v18, %v1466
  %1469 = vbcast.lane.b32.xlu0 %v1467, 256
  %v1470 = vpop.permute.xlu0 %1469
  %s1472 = sor.u32 256, 8
  %1473 = vbcast.lane.b32.xlu0 %v1467, %s1472
  %v1474 = vpop.permute.xlu0 %1473
  %v1475 = vadd.f32 %v1141, %v1305
  %v1476 = vadd.f32 %v1146, %v1309
  %v1477 = vadd.f32 %v1151, %v1316
  %v1478 = vadd.f32 %v1156, %v1320
  %v1479 = vadd.f32 %v1161, %v1327
  %v1480 = vadd.f32 %v1166, %v1331
  %v1481 = vadd.f32 %v1171, %v1338
  %v1482 = vadd.f32 %v1176, %v1342
  %v1483 = vadd.f32 %v1181, %v1349
  %v1484 = vadd.f32 %v1186, %v1353
  %v1485 = vadd.f32 %v1191, %v1360
  %v1486 = vadd.f32 %v1196, %v1364
  %v1487 = vadd.f32 %v1201, %v1371
  %v1488 = vadd.f32 %v1206, %v1375
  %v1489 = vadd.f32 %v1211, %v1382
  %v1490 = vadd.f32 %v1216, %v1386
  %v1491 = vadd.f32 %v1221, %v1393
  %v1492 = vadd.f32 %v1226, %v1397
  %v1493 = vadd.f32 %v1231, %v1404
  %v1494 = vadd.f32 %v1236, %v1408
  %v1495 = vadd.f32 %v1241, %v1415
  %v1496 = vadd.f32 %v1246, %v1419
  %v1497 = vadd.f32 %v1251, %v1426
  %v1498 = vadd.f32 %v1256, %v1430
  %v1499 = vadd.f32 %v1261, %v1437
  %v1500 = vadd.f32 %v1266, %v1441
  %v1501 = vadd.f32 %v1271, %v1448
  %v1502 = vadd.f32 %v1276, %v1452
  %v1503 = vadd.f32 %v1281, %v1459
  %v1504 = vadd.f32 %v1286, %v1463
  %v1505 = vadd.f32 %v1291, %v1470
  %v1506 = vadd.f32 %v1296, %v1474
  %v1507 = vsel %vm1009, %v1475, -inf
  %v1508 = vsel %vm1009, %v1476, -inf
  %v1509 = vmax.f32 %v1507, %v1508
  %v1510 = vrot.slane %v1509, 4
  %v1511 = vmax.f32 %v1509, %v1510
  %v1512 = vrot.slane %v1511, 2
  %v1513 = vmax.f32 %v1511, %v1512
  %v1514 = vrot.slane %v1513, 1
  %v1515 = vmax.f32 %v1513, %v1514
  %v1516 = vsel %vm1009, %v1477, -inf
  %v1517 = vsel %vm1009, %v1478, -inf
  %v1518 = vmax.f32 %v1516, %v1517
  %v1519 = vrot.slane %v1518, 4
  %v1520 = vmax.f32 %v1518, %v1519
  %v1521 = vrot.slane %v1520, 2
  %v1522 = vmax.f32 %v1520, %v1521
  %v1523 = vrot.slane %v1522, 1
  %v1524 = vmax.f32 %v1522, %v1523
  %v1525 = vsel %vm1009, %v1479, -inf
  %v1526 = vsel %vm1009, %v1480, -inf
  %v1527 = vmax.f32 %v1525, %v1526
  %v1528 = vrot.slane %v1527, 4
  %v1529 = vmax.f32 %v1527, %v1528
  %v1530 = vrot.slane %v1529, 2
  %v1531 = vmax.f32 %v1529, %v1530
  %v1532 = vrot.slane %v1531, 1
  %v1533 = vmax.f32 %v1531, %v1532
  %v1534 = vsel %vm1009, %v1481, -inf
  %v1535 = vsel %vm1009, %v1482, -inf
  %v1536 = vmax.f32 %v1534, %v1535
  %v1537 = vrot.slane %v1536, 4
  %v1538 = vmax.f32 %v1536, %v1537
  %v1539 = vrot.slane %v1538, 2
  %v1540 = vmax.f32 %v1538, %v1539
  %v1541 = vrot.slane %v1540, 1
  %v1542 = vmax.f32 %v1540, %v1541
  %v1543 = vsel %vm1009, %v1483, -inf
  %v1544 = vsel %vm1009, %v1484, -inf
  %v1545 = vmax.f32 %v1543, %v1544
  %v1546 = vrot.slane %v1545, 4
  %v1547 = vmax.f32 %v1545, %v1546
  %v1548 = vrot.slane %v1547, 2
  %v1549 = vmax.f32 %v1547, %v1548
  %v1550 = vrot.slane %v1549, 1
  %v1551 = vmax.f32 %v1549, %v1550
  %v1552 = vsel %vm1009, %v1485, -inf
  %v1553 = vsel %vm1009, %v1486, -inf
  %v1554 = vmax.f32 %v1552, %v1553
  %v1555 = vrot.slane %v1554, 4
  %v1556 = vmax.f32 %v1554, %v1555
  %v1557 = vrot.slane %v1556, 2
  %v1558 = vmax.f32 %v1556, %v1557
  %v1559 = vrot.slane %v1558, 1
  %v1560 = vmax.f32 %v1558, %v1559
  %v1561 = vsel %vm1009, %v1487, -inf
  %v1562 = vsel %vm1009, %v1488, -inf
  %v1563 = vmax.f32 %v1561, %v1562
  %v1564 = vrot.slane %v1563, 4
  %v1565 = vmax.f32 %v1563, %v1564
  %v1566 = vrot.slane %v1565, 2
  %v1567 = vmax.f32 %v1565, %v1566
  %v1568 = vrot.slane %v1567, 1
  %v1569 = vmax.f32 %v1567, %v1568
  %v1570 = vsel %vm1009, %v1489, -inf
  %v1571 = vsel %vm1009, %v1490, -inf
  %v1572 = vmax.f32 %v1570, %v1571
  %v1573 = vrot.slane %v1572, 4
  %v1574 = vmax.f32 %v1572, %v1573
  %v1575 = vrot.slane %v1574, 2
  %v1576 = vmax.f32 %v1574, %v1575
  %v1577 = vrot.slane %v1576, 1
  %v1578 = vmax.f32 %v1576, %v1577
  %v1579 = vsel %vm1009, %v1491, -inf
  %v1580 = vsel %vm1009, %v1492, -inf
  %v1581 = vmax.f32 %v1579, %v1580
  %v1582 = vrot.slane %v1581, 4
  %v1583 = vmax.f32 %v1581, %v1582
  %v1584 = vrot.slane %v1583, 2
  %v1585 = vmax.f32 %v1583, %v1584
  %v1586 = vrot.slane %v1585, 1
  %v1587 = vmax.f32 %v1585, %v1586
  %v1588 = vsel %vm1009, %v1493, -inf
  %v1589 = vsel %vm1009, %v1494, -inf
  %v1590 = vmax.f32 %v1588, %v1589
  %v1591 = vrot.slane %v1590, 4
  %v1592 = vmax.f32 %v1590, %v1591
  %v1593 = vrot.slane %v1592, 2
  %v1594 = vmax.f32 %v1592, %v1593
  %v1595 = vrot.slane %v1594, 1
  %v1596 = vmax.f32 %v1594, %v1595
  %v1597 = vsel %vm1009, %v1495, -inf
  %v1598 = vsel %vm1009, %v1496, -inf
  %v1599 = vmax.f32 %v1597, %v1598
  %v1600 = vrot.slane %v1599, 4
  %v1601 = vmax.f32 %v1599, %v1600
  %v1602 = vrot.slane %v1601, 2
  %v1603 = vmax.f32 %v1601, %v1602
  %v1604 = vrot.slane %v1603, 1
  %v1605 = vmax.f32 %v1603, %v1604
  %v1606 = vsel %vm1009, %v1497, -inf
  %v1607 = vsel %vm1009, %v1498, -inf
  %v1608 = vmax.f32 %v1606, %v1607
  %v1609 = vrot.slane %v1608, 4
  %v1610 = vmax.f32 %v1608, %v1609
  %v1611 = vrot.slane %v1610, 2
  %v1612 = vmax.f32 %v1610, %v1611
  %v1613 = vrot.slane %v1612, 1
  %v1614 = vmax.f32 %v1612, %v1613
  %v1615 = vsel %vm1009, %v1499, -inf
  %v1616 = vsel %vm1009, %v1500, -inf
  %v1617 = vmax.f32 %v1615, %v1616
  %v1618 = vrot.slane %v1617, 4
  %v1619 = vmax.f32 %v1617, %v1618
  %v1620 = vrot.slane %v1619, 2
  %v1621 = vmax.f32 %v1619, %v1620
  %v1622 = vrot.slane %v1621, 1
  %v1623 = vmax.f32 %v1621, %v1622
  %v1624 = vsel %vm1009, %v1501, -inf
  %v1625 = vsel %vm1009, %v1502, -inf
  %v1626 = vmax.f32 %v1624, %v1625
  %v1627 = vrot.slane %v1626, 4
  %v1628 = vmax.f32 %v1626, %v1627
  %v1629 = vrot.slane %v1628, 2
  %v1630 = vmax.f32 %v1628, %v1629
  %v1631 = vrot.slane %v1630, 1
  %v1632 = vmax.f32 %v1630, %v1631
  %v1633 = vsel %vm1009, %v1503, -inf
  %v1634 = vsel %vm1009, %v1504, -inf
  %v1635 = vmax.f32 %v1633, %v1634
  %v1636 = vrot.slane %v1635, 4
  %v1637 = vmax.f32 %v1635, %v1636
  %v1638 = vrot.slane %v1637, 2
  %v1639 = vmax.f32 %v1637, %v1638
  %v1640 = vrot.slane %v1639, 1
  %v1641 = vmax.f32 %v1639, %v1640
  %v1642 = vsel %vm1009, %v1505, -inf
  %v1643 = vsel %vm1009, %v1506, -inf
  %v1644 = vmax.f32 %v1642, %v1643
  %v1645 = vrot.slane %v1644, 4
  %v1646 = vmax.f32 %v1644, %v1645
  %v1647 = vrot.slane %v1646, 2
  %v1648 = vmax.f32 %v1646, %v1647
  %v1649 = vrot.slane %v1648, 1
  %v1650 = vmax.f32 %v1648, %v1649
  %v1651 = vsub.f32 %v1475, %v1515
  %v1652 = vsub.f32 %v1476, %v1515
  %v1653 = vsub.f32 %v1477, %v1524
  %v1654 = vsub.f32 %v1478, %v1524
  %v1655 = vsub.f32 %v1479, %v1533
  %v1656 = vsub.f32 %v1480, %v1533
  %v1657 = vsub.f32 %v1481, %v1542
  %v1658 = vsub.f32 %v1482, %v1542
  %v1659 = vsub.f32 %v1483, %v1551
  %v1660 = vsub.f32 %v1484, %v1551
  %v1661 = vsub.f32 %v1485, %v1560
  %v1662 = vsub.f32 %v1486, %v1560
  %v1663 = vsub.f32 %v1487, %v1569
  %v1664 = vsub.f32 %v1488, %v1569
  %v1665 = vsub.f32 %v1489, %v1578
  %v1666 = vsub.f32 %v1490, %v1578
  %v1667 = vsub.f32 %v1491, %v1587
  %v1668 = vsub.f32 %v1492, %v1587
  %v1669 = vsub.f32 %v1493, %v1596
  %v1670 = vsub.f32 %v1494, %v1596
  %v1671 = vsub.f32 %v1495, %v1605
  %v1672 = vsub.f32 %v1496, %v1605
  %v1673 = vsub.f32 %v1497, %v1614
  %v1674 = vsub.f32 %v1498, %v1614
  %v1675 = vsub.f32 %v1499, %v1623
  %v1676 = vsub.f32 %v1500, %v1623
  %v1677 = vsub.f32 %v1501, %v1632
  %v1678 = vsub.f32 %v1502, %v1632
  %v1679 = vsub.f32 %v1503, %v1641
  %v1680 = vsub.f32 %v1504, %v1641
  %v1681 = vsub.f32 %v1505, %v1650
  %v1682 = vsub.f32 %v1506, %v1650
  %v1683 = vmul.f32 %v1651, 1.442695
  %v1684 = vpow.pop %v1683
  %v1685 = vmul.f32 %v1652, 1.442695
  %v1686 = vpow.pop %v1685
  %v1687 = vmul.f32 %v1653, 1.442695
  %v1688 = vpow.pop %v1687
  %v1689 = vmul.f32 %v1654, 1.442695
  %v1690 = vpow.pop %v1689
  %v1691 = vmul.f32 %v1655, 1.442695
  %v1692 = vpow.pop %v1691
  %v1693 = vmul.f32 %v1656, 1.442695
  %v1694 = vpow.pop %v1693
  %v1695 = vmul.f32 %v1657, 1.442695
  %v1696 = vpow.pop %v1695
  %v1697 = vmul.f32 %v1658, 1.442695
  %v1698 = vpow.pop %v1697
  %v1699 = vmul.f32 %v1659, 1.442695
  %v1700 = vpow.pop %v1699
  %v1701 = vmul.f32 %v1660, 1.442695
  %v1702 = vpow.pop %v1701
  %v1703 = vmul.f32 %v1661, 1.442695
  %v1704 = vpow.pop %v1703
  %v1705 = vmul.f32 %v1662, 1.442695
  %v1706 = vpow.pop %v1705
  %v1707 = vmul.f32 %v1663, 1.442695
  %v1708 = vpow.pop %v1707
  %v1709 = vmul.f32 %v1664, 1.442695
  %v1710 = vpow.pop %v1709
  %v1711 = vmul.f32 %v1665, 1.442695
  %v1712 = vpow.pop %v1711
  %v1713 = vmul.f32 %v1666, 1.442695
  %v1714 = vpow.pop %v1713
  %v1715 = vmul.f32 %v1667, 1.442695
  %v1716 = vpow.pop %v1715
  %v1717 = vmul.f32 %v1668, 1.442695
  %v1718 = vpow.pop %v1717
  %v1719 = vmul.f32 %v1669, 1.442695
  %v1720 = vpow.pop %v1719
  %v1721 = vmul.f32 %v1670, 1.442695
  %v1722 = vpow.pop %v1721
  %v1723 = vmul.f32 %v1671, 1.442695
  %v1724 = vpow.pop %v1723
  %v1725 = vmul.f32 %v1672, 1.442695
  %v1726 = vpow.pop %v1725
  %v1727 = vmul.f32 %v1673, 1.442695
  %v1728 = vpow.pop %v1727
  %v1729 = vmul.f32 %v1674, 1.442695
  %v1730 = vpow.pop %v1729
  %v1731 = vmul.f32 %v1675, 1.442695
  %v1732 = vpow.pop %v1731
  %v1733 = vmul.f32 %v1676, 1.442695
  %v1734 = vpow.pop %v1733
  %v1735 = vmul.f32 %v1677, 1.442695
  %v1736 = vpow.pop %v1735
  %v1737 = vmul.f32 %v1678, 1.442695
  %v1738 = vpow.pop %v1737
  %v1739 = vmul.f32 %v1679, 1.442695
  %v1740 = vpow.pop %v1739
  %v1741 = vmul.f32 %v1680, 1.442695
  %v1742 = vpow.pop %v1741
  %v1743 = vmul.f32 %v1681, 1.442695
  %v1744 = vpow.pop %v1743
  %v1745 = vmul.f32 %v1682, 1.442695
  %v1746 = vpow.pop %v1745
  %v1747 = vsel %vm1009, %v1684, 0.0
  %v1748 = vsel %vm1009, %v1686, 0.0
  %v1749 = vadd.f32 %v1747, %v1748
  %v1750 = vrot.slane %v1749, 4
  %v1751 = vadd.f32 %v1749, %v1750
  %v1752 = vrot.slane %v1751, 2
  %v1753 = vadd.f32 %v1751, %v1752
  %v1754 = vrot.slane %v1753, 1
  %v1755 = vadd.f32 %v1753, %v1754
  %v1756 = vsel %vm1009, %v1688, 0.0
  %v1757 = vsel %vm1009, %v1690, 0.0
  %v1758 = vadd.f32 %v1756, %v1757
  %v1759 = vrot.slane %v1758, 4
  %v1760 = vadd.f32 %v1758, %v1759
  %v1761 = vrot.slane %v1760, 2
  %v1762 = vadd.f32 %v1760, %v1761
  %v1763 = vrot.slane %v1762, 1
  %v1764 = vadd.f32 %v1762, %v1763
  %v1765 = vsel %vm1009, %v1692, 0.0
  %v1766 = vsel %vm1009, %v1694, 0.0
  %v1767 = vadd.f32 %v1765, %v1766
  %v1768 = vrot.slane %v1767, 4
  %v1769 = vadd.f32 %v1767, %v1768
  %v1770 = vrot.slane %v1769, 2
  %v1771 = vadd.f32 %v1769, %v1770
  %v1772 = vrot.slane %v1771, 1
  %v1773 = vadd.f32 %v1771, %v1772
  %v1774 = vsel %vm1009, %v1696, 0.0
  %v1775 = vsel %vm1009, %v1698, 0.0
  %v1776 = vadd.f32 %v1774, %v1775
  %v1777 = vrot.slane %v1776, 4
  %v1778 = vadd.f32 %v1776, %v1777
  %v1779 = vrot.slane %v1778, 2
  %v1780 = vadd.f32 %v1778, %v1779
  %v1781 = vrot.slane %v1780, 1
  %v1782 = vadd.f32 %v1780, %v1781
  %v1783 = vsel %vm1009, %v1700, 0.0
  %v1784 = vsel %vm1009, %v1702, 0.0
  %v1785 = vadd.f32 %v1783, %v1784
  %v1786 = vrot.slane %v1785, 4
  %v1787 = vadd.f32 %v1785, %v1786
  %v1788 = vrot.slane %v1787, 2
  %v1789 = vadd.f32 %v1787, %v1788
  %v1790 = vrot.slane %v1789, 1
  %v1791 = vadd.f32 %v1789, %v1790
  %v1792 = vsel %vm1009, %v1704, 0.0
  %v1793 = vsel %vm1009, %v1706, 0.0
  %v1794 = vadd.f32 %v1792, %v1793
  %v1795 = vrot.slane %v1794, 4
  %v1796 = vadd.f32 %v1794, %v1795
  %v1797 = vrot.slane %v1796, 2
  %v1798 = vadd.f32 %v1796, %v1797
  %v1799 = vrot.slane %v1798, 1
  %v1800 = vadd.f32 %v1798, %v1799
  %v1801 = vsel %vm1009, %v1708, 0.0
  %v1802 = vsel %vm1009, %v1710, 0.0
  %v1803 = vadd.f32 %v1801, %v1802
  %v1804 = vrot.slane %v1803, 4
  %v1805 = vadd.f32 %v1803, %v1804
  %v1806 = vrot.slane %v1805, 2
  %v1807 = vadd.f32 %v1805, %v1806
  %v1808 = vrot.slane %v1807, 1
  %v1809 = vadd.f32 %v1807, %v1808
  %v1810 = vsel %vm1009, %v1712, 0.0
  %v1811 = vsel %vm1009, %v1714, 0.0
  %v1812 = vadd.f32 %v1810, %v1811
  %v1813 = vrot.slane %v1812, 4
  %v1814 = vadd.f32 %v1812, %v1813
  %v1815 = vrot.slane %v1814, 2
  %v1816 = vadd.f32 %v1814, %v1815
  %v1817 = vrot.slane %v1816, 1
  %v1818 = vadd.f32 %v1816, %v1817
  %v1819 = vsel %vm1009, %v1716, 0.0
  %v1820 = vsel %vm1009, %v1718, 0.0
  %v1821 = vadd.f32 %v1819, %v1820
  %v1822 = vrot.slane %v1821, 4
  %v1823 = vadd.f32 %v1821, %v1822
  %v1824 = vrot.slane %v1823, 2
  %v1825 = vadd.f32 %v1823, %v1824
  %v1826 = vrot.slane %v1825, 1
  %v1827 = vadd.f32 %v1825, %v1826
  %v1828 = vsel %vm1009, %v1720, 0.0
  %v1829 = vsel %vm1009, %v1722, 0.0
  %v1830 = vadd.f32 %v1828, %v1829
  %v1831 = vrot.slane %v1830, 4
  %v1832 = vadd.f32 %v1830, %v1831
  %v1833 = vrot.slane %v1832, 2
  %v1834 = vadd.f32 %v1832, %v1833
  %v1835 = vrot.slane %v1834, 1
  %v1836 = vadd.f32 %v1834, %v1835
  %v1837 = vsel %vm1009, %v1724, 0.0
  %v1838 = vsel %vm1009, %v1726, 0.0
  %v1839 = vadd.f32 %v1837, %v1838
  %v1840 = vrot.slane %v1839, 4
  %v1841 = vadd.f32 %v1839, %v1840
  %v1842 = vrot.slane %v1841, 2
  %v1843 = vadd.f32 %v1841, %v1842
  %v1844 = vrot.slane %v1843, 1
  %v1845 = vadd.f32 %v1843, %v1844
  %v1846 = vsel %vm1009, %v1728, 0.0
  %v1847 = vsel %vm1009, %v1730, 0.0
  %v1848 = vadd.f32 %v1846, %v1847
  %v1849 = vrot.slane %v1848, 4
  %v1850 = vadd.f32 %v1848, %v1849
  %v1851 = vrot.slane %v1850, 2
  %v1852 = vadd.f32 %v1850, %v1851
  %v1853 = vrot.slane %v1852, 1
  %v1854 = vadd.f32 %v1852, %v1853
  %v1855 = vsel %vm1009, %v1732, 0.0
  %v1856 = vsel %vm1009, %v1734, 0.0
  %v1857 = vadd.f32 %v1855, %v1856
  %v1858 = vrot.slane %v1857, 4
  %v1859 = vadd.f32 %v1857, %v1858
  %v1860 = vrot.slane %v1859, 2
  %v1861 = vadd.f32 %v1859, %v1860
  %v1862 = vrot.slane %v1861, 1
  %v1863 = vadd.f32 %v1861, %v1862
  %v1864 = vsel %vm1009, %v1736, 0.0
  %v1865 = vsel %vm1009, %v1738, 0.0
  %v1866 = vadd.f32 %v1864, %v1865
  %v1867 = vrot.slane %v1866, 4
  %v1868 = vadd.f32 %v1866, %v1867
  %v1869 = vrot.slane %v1868, 2
  %v1870 = vadd.f32 %v1868, %v1869
  %v1871 = vrot.slane %v1870, 1
  %v1872 = vadd.f32 %v1870, %v1871
  %v1873 = vsel %vm1009, %v1740, 0.0
  %v1874 = vsel %vm1009, %v1742, 0.0
  %v1875 = vadd.f32 %v1873, %v1874
  %v1876 = vrot.slane %v1875, 4
  %v1877 = vadd.f32 %v1875, %v1876
  %v1878 = vrot.slane %v1877, 2
  %v1879 = vadd.f32 %v1877, %v1878
  %v1880 = vrot.slane %v1879, 1
  %v1881 = vadd.f32 %v1879, %v1880
  %v1882 = vsel %vm1009, %v1744, 0.0
  %v1883 = vsel %vm1009, %v1746, 0.0
  %v1884 = vadd.f32 %v1882, %v1883
  %v1885 = vrot.slane %v1884, 4
  %v1886 = vadd.f32 %v1884, %v1885
  %v1887 = vrot.slane %v1886, 2
  %v1888 = vadd.f32 %v1886, %v1887
  %v1889 = vrot.slane %v1888, 1
  %v1890 = vadd.f32 %v1888, %v1889
  %v1891 = vrcp.pop %v1755
  %v1892 = vrcp.pop %v1764
  %v1893 = vrcp.pop %v1773
  %v1894 = vrcp.pop %v1782
  %v1895 = vrcp.pop %v1791
  %v1896 = vrcp.pop %v1800
  %v1897 = vrcp.pop %v1809
  %v1898 = vrcp.pop %v1818
  %v1899 = vrcp.pop %v1827
  %v1900 = vrcp.pop %v1836
  %v1901 = vrcp.pop %v1845
  %v1902 = vrcp.pop %v1854
  %v1903 = vrcp.pop %v1863
  %v1904 = vrcp.pop %v1872
  %v1905 = vrcp.pop %v1881
  %v1906 = vrcp.pop %v1890
  %v1907 = vmul.f32 %v1684, %v1891
  %v1908 = vmul.f32 %v1686, %v1891
  %v1909 = vmul.f32 %v1688, %v1892
  %v1910 = vmul.f32 %v1690, %v1892
  %v1911 = vmul.f32 %v1692, %v1893
  %v1912 = vmul.f32 %v1694, %v1893
  %v1913 = vmul.f32 %v1696, %v1894
  %v1914 = vmul.f32 %v1698, %v1894
  %v1915 = vmul.f32 %v1700, %v1895
  %v1916 = vmul.f32 %v1702, %v1895
  %v1917 = vmul.f32 %v1704, %v1896
  %v1918 = vmul.f32 %v1706, %v1896
  %v1919 = vmul.f32 %v1708, %v1897
  %v1920 = vmul.f32 %v1710, %v1897
  %v1921 = vmul.f32 %v1712, %v1898
  %v1922 = vmul.f32 %v1714, %v1898
  %v1923 = vmul.f32 %v1716, %v1899
  %v1924 = vmul.f32 %v1718, %v1899
  %v1925 = vmul.f32 %v1720, %v1900
  %v1926 = vmul.f32 %v1722, %v1900
  %v1927 = vmul.f32 %v1724, %v1901
  %v1928 = vmul.f32 %v1726, %v1901
  %v1929 = vmul.f32 %v1728, %v1902
  %v1930 = vmul.f32 %v1730, %v1902
  %v1931 = vmul.f32 %v1732, %v1903
  %v1932 = vmul.f32 %v1734, %v1903
  %v1933 = vmul.f32 %v1736, %v1904
  %v1934 = vmul.f32 %v1738, %v1904
  %v1935 = vmul.f32 %v1740, %v1905
  %v1936 = vmul.f32 %v1742, %v1905
  %v1937 = vmul.f32 %v1744, %v1906
  %v1938 = vmul.f32 %v1746, %v1906
  %v1939 = vmul.f32 %v1907, %v142
  %v1940 = vmul.f32 %v1908, %v147
  %v1941 = vmul.f32 %v1909, %v142
  %v1942 = vmul.f32 %v1910, %v147
  %v1943 = vmul.f32 %v1911, %v142
  %v1944 = vmul.f32 %v1912, %v147
  %v1945 = vmul.f32 %v1913, %v142
  %v1946 = vmul.f32 %v1914, %v147
  %v1947 = vmul.f32 %v1915, %v142
  %v1948 = vmul.f32 %v1916, %v147
  %v1949 = vmul.f32 %v1917, %v142
  %v1950 = vmul.f32 %v1918, %v147
  %v1951 = vmul.f32 %v1919, %v142
  %v1952 = vmul.f32 %v1920, %v147
  %v1953 = vmul.f32 %v1921, %v142
  %v1954 = vmul.f32 %v1922, %v147
  %v1955 = vmul.f32 %v1923, %v142
  %v1956 = vmul.f32 %v1924, %v147
  %v1957 = vmul.f32 %v1925, %v142
  %v1958 = vmul.f32 %v1926, %v147
  %v1959 = vmul.f32 %v1927, %v142
  %v1960 = vmul.f32 %v1928, %v147
  %v1961 = vmul.f32 %v1929, %v142
  %v1962 = vmul.f32 %v1930, %v147
  %v1963 = vmul.f32 %v1931, %v142
  %v1964 = vmul.f32 %v1932, %v147
  %v1965 = vmul.f32 %v1933, %v142
  %v1966 = vmul.f32 %v1934, %v147
  %v1967 = vmul.f32 %v1935, %v142
  %v1968 = vmul.f32 %v1936, %v147
  %v1969 = vmul.f32 %v1937, %v142
  %v1970 = vmul.f32 %v1938, %v147
  %v1971 = vsel %vm1009, %v1939, 0.0
  %v1972 = vsel %vm1009, %v1940, 0.0
  %v1973 = vadd.f32 %v1971, %v1972
  %v1974 = vrot.slane %v1973, 4
  %v1975 = vadd.f32 %v1973, %v1974
  %v1976 = vrot.slane %v1975, 2
  %v1977 = vadd.f32 %v1975, %v1976
  %v1978 = vrot.slane %v1977, 1
  %v1979 = vadd.f32 %v1977, %v1978
  %v1980 = vsel %vm1009, %v1941, 0.0
  %v1981 = vsel %vm1009, %v1942, 0.0
  %v1982 = vadd.f32 %v1980, %v1981
  %v1983 = vrot.slane %v1982, 4
  %v1984 = vadd.f32 %v1982, %v1983
  %v1985 = vrot.slane %v1984, 2
  %v1986 = vadd.f32 %v1984, %v1985
  %v1987 = vrot.slane %v1986, 1
  %v1988 = vadd.f32 %v1986, %v1987
  %v1989 = vsel %vm1009, %v1943, 0.0
  %v1990 = vsel %vm1009, %v1944, 0.0
  %v1991 = vadd.f32 %v1989, %v1990
  %v1992 = vrot.slane %v1991, 4
  %v1993 = vadd.f32 %v1991, %v1992
  %v1994 = vrot.slane %v1993, 2
  %v1995 = vadd.f32 %v1993, %v1994
  %v1996 = vrot.slane %v1995, 1
  %v1997 = vadd.f32 %v1995, %v1996
  %v1998 = vsel %vm1009, %v1945, 0.0
  %v1999 = vsel %vm1009, %v1946, 0.0
  %v2000 = vadd.f32 %v1998, %v1999
  %v2001 = vrot.slane %v2000, 4
  %v2002 = vadd.f32 %v2000, %v2001
  %v2003 = vrot.slane %v2002, 2
  %v2004 = vadd.f32 %v2002, %v2003
  %v2005 = vrot.slane %v2004, 1
  %v2006 = vadd.f32 %v2004, %v2005
  %v2007 = vsel %vm1009, %v1947, 0.0
  %v2008 = vsel %vm1009, %v1948, 0.0
  %v2009 = vadd.f32 %v2007, %v2008
  %v2010 = vrot.slane %v2009, 4
  %v2011 = vadd.f32 %v2009, %v2010
  %v2012 = vrot.slane %v2011, 2
  %v2013 = vadd.f32 %v2011, %v2012
  %v2014 = vrot.slane %v2013, 1
  %v2015 = vadd.f32 %v2013, %v2014
  %v2016 = vsel %vm1009, %v1949, 0.0
  %v2017 = vsel %vm1009, %v1950, 0.0
  %v2018 = vadd.f32 %v2016, %v2017
  %v2019 = vrot.slane %v2018, 4
  %v2020 = vadd.f32 %v2018, %v2019
  %v2021 = vrot.slane %v2020, 2
  %v2022 = vadd.f32 %v2020, %v2021
  %v2023 = vrot.slane %v2022, 1
  %v2024 = vadd.f32 %v2022, %v2023
  %v2025 = vsel %vm1009, %v1951, 0.0
  %v2026 = vsel %vm1009, %v1952, 0.0
  %v2027 = vadd.f32 %v2025, %v2026
  %v2028 = vrot.slane %v2027, 4
  %v2029 = vadd.f32 %v2027, %v2028
  %v2030 = vrot.slane %v2029, 2
  %v2031 = vadd.f32 %v2029, %v2030
  %v2032 = vrot.slane %v2031, 1
  %v2033 = vadd.f32 %v2031, %v2032
  %v2034 = vsel %vm1009, %v1953, 0.0
  %v2035 = vsel %vm1009, %v1954, 0.0
  %v2036 = vadd.f32 %v2034, %v2035
  %v2037 = vrot.slane %v2036, 4
  %v2038 = vadd.f32 %v2036, %v2037
  %v2039 = vrot.slane %v2038, 2
  %v2040 = vadd.f32 %v2038, %v2039
  %v2041 = vrot.slane %v2040, 1
  %v2042 = vadd.f32 %v2040, %v2041
  %v2043 = vsel %vm1009, %v1955, 0.0
  %v2044 = vsel %vm1009, %v1956, 0.0
  %v2045 = vadd.f32 %v2043, %v2044
  %v2046 = vrot.slane %v2045, 4
  %v2047 = vadd.f32 %v2045, %v2046
  %v2048 = vrot.slane %v2047, 2
  %v2049 = vadd.f32 %v2047, %v2048
  %v2050 = vrot.slane %v2049, 1
  %v2051 = vadd.f32 %v2049, %v2050
  %v2052 = vsel %vm1009, %v1957, 0.0
  %v2053 = vsel %vm1009, %v1958, 0.0
  %v2054 = vadd.f32 %v2052, %v2053
  %v2055 = vrot.slane %v2054, 4
  %v2056 = vadd.f32 %v2054, %v2055
  %v2057 = vrot.slane %v2056, 2
  %v2058 = vadd.f32 %v2056, %v2057
  %v2059 = vrot.slane %v2058, 1
  %v2060 = vadd.f32 %v2058, %v2059
  %v2061 = vsel %vm1009, %v1959, 0.0
  %v2062 = vsel %vm1009, %v1960, 0.0
  %v2063 = vadd.f32 %v2061, %v2062
  %v2064 = vrot.slane %v2063, 4
  %v2065 = vadd.f32 %v2063, %v2064
  %v2066 = vrot.slane %v2065, 2
  %v2067 = vadd.f32 %v2065, %v2066
  %v2068 = vrot.slane %v2067, 1
  %v2069 = vadd.f32 %v2067, %v2068
  %v2070 = vsel %vm1009, %v1961, 0.0
  %v2071 = vsel %vm1009, %v1962, 0.0
  %v2072 = vadd.f32 %v2070, %v2071
  %v2073 = vrot.slane %v2072, 4
  %v2074 = vadd.f32 %v2072, %v2073
  %v2075 = vrot.slane %v2074, 2
  %v2076 = vadd.f32 %v2074, %v2075
  %v2077 = vrot.slane %v2076, 1
  %v2078 = vadd.f32 %v2076, %v2077
  %v2079 = vsel %vm1009, %v1963, 0.0
  %v2080 = vsel %vm1009, %v1964, 0.0
  %v2081 = vadd.f32 %v2079, %v2080
  %v2082 = vrot.slane %v2081, 4
  %v2083 = vadd.f32 %v2081, %v2082
  %v2084 = vrot.slane %v2083, 2
  %v2085 = vadd.f32 %v2083, %v2084
  %v2086 = vrot.slane %v2085, 1
  %v2087 = vadd.f32 %v2085, %v2086
  %v2088 = vsel %vm1009, %v1965, 0.0
  %v2089 = vsel %vm1009, %v1966, 0.0
  %v2090 = vadd.f32 %v2088, %v2089
  %v2091 = vrot.slane %v2090, 4
  %v2092 = vadd.f32 %v2090, %v2091
  %v2093 = vrot.slane %v2092, 2
  %v2094 = vadd.f32 %v2092, %v2093
  %v2095 = vrot.slane %v2094, 1
  %v2096 = vadd.f32 %v2094, %v2095
  %v2097 = vsel %vm1009, %v1967, 0.0
  %v2098 = vsel %vm1009, %v1968, 0.0
  %v2099 = vadd.f32 %v2097, %v2098
  %v2100 = vrot.slane %v2099, 4
  %v2101 = vadd.f32 %v2099, %v2100
  %v2102 = vrot.slane %v2101, 2
  %v2103 = vadd.f32 %v2101, %v2102
  %v2104 = vrot.slane %v2103, 1
  %v2105 = vadd.f32 %v2103, %v2104
  %v2106 = vsel %vm1009, %v1969, 0.0
  %v2107 = vsel %vm1009, %v1970, 0.0
  %v2108 = vadd.f32 %v2106, %v2107
  %v2109 = vrot.slane %v2108, 4
  %v2110 = vadd.f32 %v2108, %v2109
  %v2111 = vrot.slane %v2110, 2
  %v2112 = vadd.f32 %v2110, %v2111
  %v2113 = vrot.slane %v2112, 1
  %v2114 = vadd.f32 %v2112, %v2113
  %v2115 = vlaneseq
  %v2116 = vshrl.u32 %v2115, 7
  %v2117 = vsub.s32 1, %v2116
  %v2118 = vrot.slane %v53, %v2117
  %v2119 = vadd.f32 %v1979, %v2118
  %v2120 = vadd.f32 %v1988, %v2118
  %v2121 = vadd.f32 %v1997, %v2118
  %v2122 = vadd.f32 %v2006, %v2118
  %v2123 = vadd.f32 %v2015, %v2118
  %v2124 = vadd.f32 %v2024, %v2118
  %v2125 = vadd.f32 %v2033, %v2118
  %v2126 = vadd.f32 %v2042, %v2118
  %v2127 = vadd.f32 %v2051, %v2118
  %v2128 = vadd.f32 %v2060, %v2118
  %v2129 = vadd.f32 %v2069, %v2118
  %v2130 = vadd.f32 %v2078, %v2118
  %v2131 = vadd.f32 %v2087, %v2118
  %v2132 = vadd.f32 %v2096, %v2118
  %v2133 = vadd.f32 %v2105, %v2118
  %v2134 = vadd.f32 %v2114, %v2118
  %v2151 = vrot.slane %v2120, 7
  %vm2152 = vcmask 1041409
  %v2153 = vsel %vm2152, %v2151, %v2119
  %v2154 = vrot.slane %v2121, 6
  %vm2155 = vcmask 1042434
  %v2156 = vsel %vm2155, %v2154, %v2153
  %v2157 = vrot.slane %v2122, 5
  %vm2158 = vcmask 1043459
  %v2159 = vsel %vm2158, %v2157, %v2156
  %v2160 = vrot.slane %v2123, 4
  %vm2161 = vcmask 1044484
  %v2162 = vsel %vm2161, %v2160, %v2159
  %v2163 = vrot.slane %v2124, 3
  %vm2164 = vcmask 1045509
  %v2165 = vsel %vm2164, %v2163, %v2162
  %v2166 = vrot.slane %v2125, 2
  %vm2167 = vcmask 1046534
  %v2168 = vsel %vm2167, %v2166, %v2165
  %v2169 = vrot.slane %v2126, 1
  %vm2170 = vcmask 1047559
  %v2171 = vsel %vm2170, %v2169, %v2168
  %v2172 = vrot.slane %v2128, 7
  %v2173 = vsel %vm2152, %v2172, %v2127
  %v2174 = vrot.slane %v2129, 6
  %v2175 = vsel %vm2155, %v2174, %v2173
  %v2176 = vrot.slane %v2130, 5
  %v2177 = vsel %vm2158, %v2176, %v2175
  %v2178 = vrot.slane %v2131, 4
  %v2179 = vsel %vm2161, %v2178, %v2177
  %v2180 = vrot.slane %v2132, 3
  %v2181 = vsel %vm2164, %v2180, %v2179
  %v2182 = vrot.slane %v2133, 2
  %v2183 = vsel %vm2167, %v2182, %v2181
  %v2184 = vrot.slane %v2134, 1
  %v2185 = vsel %vm2170, %v2184, %v2183
  %2187 = vrot.lane.b32.xlu0 %v2118, 96
  %v2188 = vpop.permute.xlu0 %2187
  %v2190 = vsel %vm1009, %v2171, 0
  %v2192 = vsel %vm1009, %v2185, 0
  %2194 = vmatprep.subr.mxu0 0.0
  %2195 = vmatpush1.msra.mxu0 %v60
  %2196 = vmatprep.subr.mxu0 0.0
  %2197 = vmatpush1.msra.mxu0 %v61
  %2198 = vmatprep.subr.mxu0 0.0
  %2199 = vmatpush1.msra.mxu0 %v62
  %2200 = vmatprep.subr.mxu0 0.0
  %2201 = vmatpush1.msra.mxu0 %v63
  %2202 = vmatprep.subr.mxu0 0.0
  %2203 = vmatpush1.msra.mxu0 0.0
  %2204 = vmatprep.subr.mxu0 0.0
  %2205 = vmatpush1.msra.mxu0 0.0
  %2206 = vmatprep.subr.mxu0 0.0
  %2207 = vmatpush1.msra.mxu0 0.0
  %2208 = vmatprep.subr.mxu0 0.0
  %2209 = vmatpush1.msra.mxu0 0.0
  %2210 = vmatprep.subr.mxu0 0.0
  %2211 = vmatpush1.msra.mxu0 0.0
  %2212 = vmatprep.subr.mxu0 0.0
  %2213 = vmatpush1.msra.mxu0 0.0
  %2214 = vmatprep.subr.mxu0 0.0
  %2215 = vmatpush1.msra.mxu0 0.0
  %2216 = vmatprep.subr.mxu0 0.0
  %2217 = vmatpush1.msra.mxu0 0.0
  %2218 = vmatprep.subr.mxu0 0.0
  %2219 = vmatpush1.msra.mxu0 0.0
  %2220 = vmatprep.subr.mxu0 0.0
  %2221 = vmatpush1.msra.mxu0 0.0
  %2222 = vmatprep.subr.mxu0 0.0
  %2223 = vmatpush1.msra.mxu0 0.0
  %2224 = vmatprep.subr.mxu0 0.0
  %2225 = vmatpush1.msra.mxu0 0.0
  %2226 = vmatprep.subr.mxu0 0.0
  %2227 = vmatpush1.msra.mxu0 0.0
  %2228 = vmatprep.subr.mxu0 0.0
  %2229 = vmatpush1.msra.mxu0 0.0
  %2230 = vmatprep.subr.mxu0 0.0
  %2231 = vmatpush1.msra.mxu0 0.0
  %2232 = vmatprep.subr.mxu0 0.0
  %2233 = vmatpush1.msra.mxu0 0.0
  %2234 = vmatprep.subr.mxu0 0.0
  %2235 = vmatpush1.msra.mxu0 0.0
  %2236 = vmatprep.subr.mxu0 0.0
  %2237 = vmatpush1.msra.mxu0 0.0
  %2238 = vmatprep.subr.mxu0 0.0
  %2239 = vmatpush1.msra.mxu0 0.0
  %2240 = vmatprep.subr.mxu0 0.0
  %2241 = vmatpush1.msra.mxu0 0.0
  %2242 = vmatprep.subr.mxu0 0.0
  %2243 = vmatpush1.msra.mxu0 0.0
  %2244 = vmatprep.subr.mxu0 0.0
  %2245 = vmatpush1.msra.mxu0 0.0
  %2246 = vmatprep.subr.mxu0 0.0
  %2247 = vmatpush1.msra.mxu0 0.0
  %2248 = vmatprep.subr.mxu0 0.0
  %2249 = vmatpush1.msra.mxu0 0.0
  %2250 = vmatprep.subr.mxu0 0.0
  %2251 = vmatpush1.msra.mxu0 0.0
  %2252 = vmatprep.subr.mxu0 0.0
  %2253 = vmatpush1.msra.mxu0 0.0
  %2254 = vmatprep.subr.mxu0 0.0
  %2255 = vmatpush1.msra.mxu0 0.0
  %2256 = vmatprep.subr.mxu0 0.0
  %2257 = vmatpush1.msra.mxu0 0.0
  %2258 = vmatprep.mubr.f32.mxu0 0.0
  %2259 = vmatmul.mubr.f32.gmra.mrb[0].mxu0 %v2190
  %v2260 = vpop.f32.mrb[0].mxu0
  %v2261 = vadd.f32 %v2188, %v2260
  %v2262 = vpop.f32.mrb[0].mxu0
  %2263 = vmatprep.mubr.f32.mxu0 0.0
  %2264 = vmatmul.mubr.f32.gmra.mrb[0].mxu0 %v2192
  %v2265 = vpop.f32.mrb[0].mxu0
  %v2266 = vadd.f32 %v2188, %v2265
  %v2267 = vpop.f32.mrb[0].mxu0
  %2268 = vdwg.mxu0
  %vm2269 = vcmp.gt.f32.partialorder %v2261, 0.0
  %vm2270 = vcmp.gt.f32.partialorder %v2266, 0.0
  %v2271 = vmin.f32 %v2261, 0.0
  %v2272 = vmin.f32 %v2266, 0.0
  %v2273 = vmul.f32 %v2271, 1.442695
  %v2274 = vpow.pop %v2273
  %v2275 = vmul.f32 %v2272, 1.442695
  %v2276 = vpow.pop %v2275
  %v2277 = vsub.f32 %v2274, 1.0
  %v2278 = vsub.f32 %v2276, 1.0
  %v2279 = vsel %vm2269, %v2261, %v2277
  %v2280 = vsel %vm2270, %v2266, %v2278
  %v2283 = vrot.slane %v2279, 1
  %v2284 = vrot.slane %v2279, 2
  %v2285 = vrot.slane %v2279, 3
  %v2286 = vrot.slane %v2279, 4
  %v2287 = vrot.slane %v2279, 5
  %v2288 = vrot.slane %v2279, 6
  %v2289 = vrot.slane %v2279, 7
  %v2290 = vrot.slane %v2280, 1
  %v2291 = vrot.slane %v2280, 2
  %v2292 = vrot.slane %v2280, 3
  %v2293 = vrot.slane %v2280, 4
  %v2294 = vrot.slane %v2280, 5
  %v2295 = vrot.slane %v2280, 6
  %v2296 = vrot.slane %v2280, 7
  %v2313 = vadd.f32 %v2119, %v2279
  %v2314 = vadd.f32 %v2120, %v2283
  %v2315 = vadd.f32 %v2121, %v2284
  %v2316 = vadd.f32 %v2122, %v2285
  %v2317 = vadd.f32 %v2123, %v2286
  %v2318 = vadd.f32 %v2124, %v2287
  %v2319 = vadd.f32 %v2125, %v2288
  %v2320 = vadd.f32 %v2126, %v2289
  %v2321 = vadd.f32 %v2127, %v2280
  %v2322 = vadd.f32 %v2128, %v2290
  %v2323 = vadd.f32 %v2129, %v2291
  %v2324 = vadd.f32 %v2130, %v2292
  %v2325 = vadd.f32 %v2131, %v2293
  %v2326 = vadd.f32 %v2132, %v2294
  %v2327 = vadd.f32 %v2133, %v2295
  %v2328 = vadd.f32 %v2134, %v2296
  %v2345 = vrot.slane %v2314, 7
  %v2346 = vsel %vm2152, %v2345, %v2313
  %v2347 = vrot.slane %v2315, 6
  %v2348 = vsel %vm2155, %v2347, %v2346
  %v2349 = vrot.slane %v2316, 5
  %v2350 = vsel %vm2158, %v2349, %v2348
  %v2351 = vrot.slane %v2317, 4
  %v2352 = vsel %vm2161, %v2351, %v2350
  %v2353 = vrot.slane %v2318, 3
  %v2354 = vsel %vm2164, %v2353, %v2352
  %v2355 = vrot.slane %v2319, 2
  %v2356 = vsel %vm2167, %v2355, %v2354
  %v2357 = vrot.slane %v2320, 1
  %v2358 = vsel %vm2170, %v2357, %v2356
  %v2359 = vrot.slane %v2322, 7
  %v2360 = vsel %vm2152, %v2359, %v2321
  %v2361 = vrot.slane %v2323, 6
  %v2362 = vsel %vm2155, %v2361, %v2360
  %v2363 = vrot.slane %v2324, 5
  %v2364 = vsel %vm2158, %v2363, %v2362
  %v2365 = vrot.slane %v2325, 4
  %v2366 = vsel %vm2161, %v2365, %v2364
  %v2367 = vrot.slane %v2326, 3
  %v2368 = vsel %vm2164, %v2367, %v2366
  %v2369 = vrot.slane %v2327, 2
  %v2370 = vsel %vm2167, %v2369, %v2368
  %v2371 = vrot.slane %v2328, 1
  %v2372 = vsel %vm2170, %v2371, %v2370
  %2375 = vst.msk [vmem:[#allocation2] sm:$0xff] %vm1009, %v2358
  %2376 = vst.msk [vmem:[#allocation2 + $0x8] sm:$0xff] %vm1009, %v2372
  %v2377 = vld [vmem:[#allocation2] sm:$0xff]
  %v2378 = vld [vmem:[#allocation2 + $0x8] sm:$0xff]
  %v2379 = vld [vmem:[%s1 + $0x68] sm:$0xff]
  %v2380 = vld [vmem:[%s1 + $0x70] sm:$0xff]
  %v2381 = vld [vmem:[%s1 + $0x78] sm:$0xff]
  %v2382 = vld [vmem:[%s1 + $0x80] sm:$0xff]
  %v2383 = vld [vmem:[%s1 + $0x88] sm:$0x3]
  %v2384 = vld [vmem:[%s1 + $0x90] sm:$0xff]
  %v2385 = vld [vmem:[%s1 + $0x98] sm:$0xff]
  %v2386 = vld [vmem:[%s1 + $0xa0] sm:$0xff]
  %v2387 = vld [vmem:[%s1 + $0xa8] sm:$0xff]
  %v2388 = vld [vmem:[%s1 + $0xb0] sm:$0xff]
  %v2389 = vld [vmem:[%s1 + $0xb8] sm:$0xff]
  %v2390 = vld [vmem:[%s1 + $0xc0] sm:$0xff]
  %v2391 = vld [vmem:[%s1 + $0xc8] sm:$0xff]
  %v2392 = vld [vmem:[%s1 + $0xd0] sm:$0xff]
  %v2393 = vld [vmem:[%s1 + $0xd8] sm:$0xff]
  %v2394 = vlaneseq
  %v2395 = vshrl.u32 %v2394, 7
  %v2396 = vsub.s32 0, %v2395
  %v2397 = vrot.slane %v2383, %v2396
  %v2399 = vsel %vm1009, %v2377, 0
  %v2402 = vsel %vm1009, %v2378, 0
  %2404 = vmatprep.subr.mxu0 0.0
  %2405 = vmatpush1.msra.mxu0 %v2379
  %2406 = vmatprep.subr.mxu0 0.0
  %2407 = vmatpush1.msra.mxu0 %v2380
  %2408 = vmatprep.subr.mxu0 0.0
  %2409 = vmatpush1.msra.mxu0 %v2381
  %2410 = vmatprep.subr.mxu0 0.0
  %2411 = vmatpush1.msra.mxu0 %v2382
  %2412 = vmatprep.subr.mxu0 0.0
  %2413 = vmatpush1.msra.mxu0 0.0
  %2414 = vmatprep.subr.mxu0 0.0
  %2415 = vmatpush1.msra.mxu0 0.0
  %2416 = vmatprep.subr.mxu0 0.0
  %2417 = vmatpush1.msra.mxu0 0.0
  %2418 = vmatprep.subr.mxu0 0.0
  %2419 = vmatpush1.msra.mxu0 0.0
  %2420 = vmatprep.subr.mxu0 0.0
  %2421 = vmatpush1.msra.mxu0 0.0
  %2422 = vmatprep.subr.mxu0 0.0
  %2423 = vmatpush1.msra.mxu0 0.0
  %2424 = vmatprep.subr.mxu0 0.0
  %2425 = vmatpush1.msra.mxu0 0.0
  %2426 = vmatprep.subr.mxu0 0.0
  %2427 = vmatpush1.msra.mxu0 0.0
  %2428 = vmatprep.subr.mxu0 0.0
  %2429 = vmatpush1.msra.mxu0 0.0
  %2430 = vmatprep.subr.mxu0 0.0
  %2431 = vmatpush1.msra.mxu0 0.0
  %2432 = vmatprep.subr.mxu0 0.0
  %2433 = vmatpush1.msra.mxu0 0.0
  %2434 = vmatprep.subr.mxu0 0.0
  %2435 = vmatpush1.msra.mxu0 0.0
  %2436 = vmatprep.subr.mxu0 0.0
  %2437 = vmatpush1.msra.mxu0 0.0
  %2438 = vmatprep.subr.mxu0 0.0
  %2439 = vmatpush1.msra.mxu0 0.0
  %2440 = vmatprep.subr.mxu0 0.0
  %2441 = vmatpush1.msra.mxu0 0.0
  %2442 = vmatprep.subr.mxu0 0.0
  %2443 = vmatpush1.msra.mxu0 0.0
  %2444 = vmatprep.subr.mxu0 0.0
  %2445 = vmatpush1.msra.mxu0 0.0
  %2446 = vmatprep.subr.mxu0 0.0
  %2447 = vmatpush1.msra.mxu0 0.0
  %2448 = vmatprep.subr.mxu0 0.0
  %2449 = vmatpush1.msra.mxu0 0.0
  %2450 = vmatprep.subr.mxu0 0.0
  %2451 = vmatpush1.msra.mxu0 0.0
  %2452 = vmatprep.subr.mxu0 0.0
  %2453 = vmatpush1.msra.mxu0 0.0
  %2454 = vmatprep.subr.mxu0 0.0
  %2455 = vmatpush1.msra.mxu0 0.0
  %2456 = vmatprep.subr.mxu0 0.0
  %2457 = vmatpush1.msra.mxu0 0.0
  %2458 = vmatprep.subr.mxu0 0.0
  %2459 = vmatpush1.msra.mxu0 0.0
  %2460 = vmatprep.subr.mxu0 0.0
  %2461 = vmatpush1.msra.mxu0 0.0
  %2462 = vmatprep.subr.mxu0 0.0
  %2463 = vmatpush1.msra.mxu0 0.0
  %2464 = vmatprep.subr.mxu0 0.0
  %2465 = vmatpush1.msra.mxu0 0.0
  %2466 = vmatprep.subr.mxu0 0.0
  %2467 = vmatpush1.msra.mxu0 0.0
  %2468 = vmatprep.mubr.f32.mxu0 0.0
  %2469 = vmatmul.mubr.f32.gmra.mrb[0].mxu0 %v2399
  %v2470 = vpop.f32.mrb[0].mxu0
  %v2471 = vadd.f32 %v2397, %v2470
  %v2472 = vpop.f32.mrb[0].mxu0
  %2473 = vmatprep.mubr.f32.mxu0 0.0
  %2474 = vmatmul.mubr.f32.gmra.mrb[0].mxu0 %v2402
  %v2475 = vpop.f32.mrb[0].mxu0
  %v2476 = vadd.f32 %v2397, %v2475
  %v2477 = vpop.f32.mrb[0].mxu0
  %2478 = vdwg.mxu0
  %2479 = vmatprep.subr.mxu0 0.0
  %2480 = vmatpush1.msra.mxu0 %v2384
  %2481 = vmatprep.subr.mxu0 0.0
  %2482 = vmatpush1.msra.mxu0 %v2385
  %2483 = vmatprep.subr.mxu0 0.0
  %2484 = vmatpush1.msra.mxu0 0.0
  %2485 = vmatprep.subr.mxu0 0.0
  %2486 = vmatpush1.msra.mxu0 0.0
  %2487 = vmatprep.subr.mxu0 0.0
  %2488 = vmatpush1.msra.mxu0 0.0
  %2489 = vmatprep.subr.mxu0 0.0
  %2490 = vmatpush1.msra.mxu0 0.0
  %2491 = vmatprep.subr.mxu0 0.0
  %2492 = vmatpush1.msra.mxu0 0.0
  %2493 = vmatprep.subr.mxu0 0.0
  %2494 = vmatpush1.msra.mxu0 0.0
  %2495 = vmatprep.subr.mxu0 0.0
  %2496 = vmatpush1.msra.mxu0 0.0
  %2497 = vmatprep.subr.mxu0 0.0
  %2498 = vmatpush1.msra.mxu0 0.0
  %2499 = vmatprep.subr.mxu0 0.0
  %2500 = vmatpush1.msra.mxu0 0.0
  %2501 = vmatprep.subr.mxu0 0.0
  %2502 = vmatpush1.msra.mxu0 0.0
  %2503 = vmatprep.subr.mxu0 0.0
  %2504 = vmatpush1.msra.mxu0 0.0
  %2505 = vmatprep.subr.mxu0 0.0
  %2506 = vmatpush1.msra.mxu0 0.0
  %2507 = vmatprep.subr.mxu0 0.0
  %2508 = vmatpush1.msra.mxu0 0.0
  %2509 = vmatprep.subr.mxu0 0.0
  %2510 = vmatpush1.msra.mxu0 0.0
  %2511 = vmatprep.subr.mxu0 0.0
  %2512 = vmatpush1.msra.mxu0 0.0
  %2513 = vmatprep.subr.mxu0 0.0
  %2514 = vmatpush1.msra.mxu0 0.0
  %2515 = vmatprep.subr.mxu0 0.0
  %2516 = vmatpush1.msra.mxu0 0.0
  %2517 = vmatprep.subr.mxu0 0.0
  %2518 = vmatpush1.msra.mxu0 0.0
  %2519 = vmatprep.subr.mxu0 0.0
  %2520 = vmatpush1.msra.mxu0 0.0
  %2521 = vmatprep.subr.mxu0 0.0
  %2522 = vmatpush1.msra.mxu0 0.0
  %2523 = vmatprep.subr.mxu0 0.0
  %2524 = vmatpush1.msra.mxu0 0.0
  %2525 = vmatprep.subr.mxu0 0.0
  %2526 = vmatpush1.msra.mxu0 0.0
  %2527 = vmatprep.subr.mxu0 0.0
  %2528 = vmatpush1.msra.mxu0 0.0
  %2529 = vmatprep.subr.mxu0 0.0
  %2530 = vmatpush1.msra.mxu0 0.0
  %2531 = vmatprep.subr.mxu0 0.0
  %2532 = vmatpush1.msra.mxu0 0.0
  %2533 = vmatprep.subr.mxu0 0.0
  %2534 = vmatpush1.msra.mxu0 0.0
  %2535 = vmatprep.subr.mxu0 0.0
  %2536 = vmatpush1.msra.mxu0 0.0
  %2537 = vmatprep.subr.mxu0 0.0
  %2538 = vmatpush1.msra.mxu0 0.0
  %2539 = vmatprep.subr.mxu0 0.0
  %2540 = vmatpush1.msra.mxu0 0.0
  %2541 = vmatprep.subr.mxu0 0.0
  %2542 = vmatpush1.msra.mxu0 0.0
  %2543 = vmatprep.mubr.f32.mxu0 0.0
  %2544 = vmatmul.mubr.f32.gmra.mrb[0].mxu0 %v151
  %v2545 = vpop.f32.mrb[0].mxu0
  %v2546 = vadd.f32 0.0, %v2545
  %v2547 = vpop.f32.mrb[0].mxu0
  %2548 = vmatprep.mubr.f32.mxu0 0.0
  %2549 = vmatmul.mubr.f32.gmra.mrb[0].mxu0 %v154
  %v2550 = vpop.f32.mrb[0].mxu0
  %v2551 = vadd.f32 0.0, %v2550
  %v2552 = vpop.f32.mrb[0].mxu0
  %2553 = vmatprep.mubr.f32.mxu0 0.0
  %2554 = vmatmul.mubr.f32.gmra.mrb[0].mxu0 %v157
  %v2555 = vpop.f32.mrb[0].mxu0
  %v2556 = vadd.f32 0.0, %v2555
  %v2557 = vpop.f32.mrb[0].mxu0
  %2558 = vmatprep.mubr.f32.mxu0 0.0
  %2559 = vmatmul.mubr.f32.gmra.mrb[0].mxu0 %v160
  %v2560 = vpop.f32.mrb[0].mxu0
  %v2561 = vadd.f32 0.0, %v2560
  %v2562 = vpop.f32.mrb[0].mxu0
  %2563 = vmatprep.mubr.f32.mxu0 0.0
  %2564 = vmatmul.mubr.f32.gmra.mrb[0].mxu0 %v163
  %v2565 = vpop.f32.mrb[0].mxu0
  %v2566 = vadd.f32 0.0, %v2565
  %v2567 = vpop.f32.mrb[0].mxu0
  %2568 = vmatprep.mubr.f32.mxu0 0.0
  %2569 = vmatmul.mubr.f32.gmra.mrb[0].mxu0 %v166
  %v2570 = vpop.f32.mrb[0].mxu0
  %v2571 = vadd.f32 0.0, %v2570
  %v2572 = vpop.f32.mrb[0].mxu0
  %2573 = vmatprep.mubr.f32.mxu0 0.0
  %2574 = vmatmul.mubr.f32.gmra.mrb[0].mxu0 %v169
  %v2575 = vpop.f32.mrb[0].mxu0
  %v2576 = vadd.f32 0.0, %v2575
  %v2577 = vpop.f32.mrb[0].mxu0
  %2578 = vmatprep.mubr.f32.mxu0 0.0
  %2579 = vmatmul.mubr.f32.gmra.mrb[0].mxu0 %v172
  %v2580 = vpop.f32.mrb[0].mxu0
  %v2581 = vadd.f32 0.0, %v2580
  %v2582 = vpop.f32.mrb[0].mxu0
  %2583 = vmatprep.mubr.f32.mxu0 0.0
  %2584 = vmatmul.mubr.f32.gmra.mrb[0].mxu0 %v175
  %v2585 = vpop.f32.mrb[0].mxu0
  %v2586 = vadd.f32 0.0, %v2585
  %v2587 = vpop.f32.mrb[0].mxu0
  %2588 = vmatprep.mubr.f32.mxu0 0.0
  %2589 = vmatmul.mubr.f32.gmra.mrb[0].mxu0 %v178
  %v2590 = vpop.f32.mrb[0].mxu0
  %v2591 = vadd.f32 0.0, %v2590
  %v2592 = vpop.f32.mrb[0].mxu0
  %2593 = vmatprep.mubr.f32.mxu0 0.0
  %2594 = vmatmul.mubr.f32.gmra.mrb[0].mxu0 %v181
  %v2595 = vpop.f32.mrb[0].mxu0
  %v2596 = vadd.f32 0.0, %v2595
  %v2597 = vpop.f32.mrb[0].mxu0
  %2598 = vmatprep.mubr.f32.mxu0 0.0
  %2599 = vmatmul.mubr.f32.gmra.mrb[0].mxu0 %v184
  %v2600 = vpop.f32.mrb[0].mxu0
  %v2601 = vadd.f32 0.0, %v2600
  %v2602 = vpop.f32.mrb[0].mxu0
  %2603 = vmatprep.mubr.f32.mxu0 0.0
  %2604 = vmatmul.mubr.f32.gmra.mrb[0].mxu0 %v187
  %v2605 = vpop.f32.mrb[0].mxu0
  %v2606 = vadd.f32 0.0, %v2605
  %v2607 = vpop.f32.mrb[0].mxu0
  %2608 = vmatprep.mubr.f32.mxu0 0.0
  %2609 = vmatmul.mubr.f32.gmra.mrb[0].mxu0 %v190
  %v2610 = vpop.f32.mrb[0].mxu0
  %v2611 = vadd.f32 0.0, %v2610
  %v2612 = vpop.f32.mrb[0].mxu0
  %2613 = vmatprep.mubr.f32.mxu0 0.0
  %2614 = vmatmul.mubr.f32.gmra.mrb[0].mxu0 %v193
  %v2615 = vpop.f32.mrb[0].mxu0
  %v2616 = vadd.f32 0.0, %v2615
  %v2617 = vpop.f32.mrb[0].mxu0
  %2618 = vmatprep.mubr.f32.mxu0 0.0
  %2619 = vmatmul.mubr.f32.gmra.mrb[0].mxu0 %v196
  %v2620 = vpop.f32.mrb[0].mxu0
  %v2621 = vadd.f32 0.0, %v2620
  %v2622 = vpop.f32.mrb[0].mxu0
  %2623 = vmatprep.mubr.f32.mxu0 0.0
  %2624 = vmatmul.mubr.f32.gmra.mrb[0].mxu0 %v199
  %v2625 = vpop.f32.mrb[0].mxu0
  %v2626 = vadd.f32 0.0, %v2625
  %v2627 = vpop.f32.mrb[0].mxu0
  %2628 = vmatprep.mubr.f32.mxu0 0.0
  %2629 = vmatmul.mubr.f32.gmra.mrb[0].mxu0 %v202
  %v2630 = vpop.f32.mrb[0].mxu0
  %v2631 = vadd.f32 0.0, %v2630
  %v2632 = vpop.f32.mrb[0].mxu0
  %2633 = vmatprep.mubr.f32.mxu0 0.0
  %2634 = vmatmul.mubr.f32.gmra.mrb[0].mxu0 %v205
  %v2635 = vpop.f32.mrb[0].mxu0
  %v2636 = vadd.f32 0.0, %v2635
  %v2637 = vpop.f32.mrb[0].mxu0
  %2638 = vmatprep.mubr.f32.mxu0 0.0
  %2639 = vmatmul.mubr.f32.gmra.mrb[0].mxu0 %v208
  %v2640 = vpop.f32.mrb[0].mxu0
  %v2641 = vadd.f32 0.0, %v2640
  %v2642 = vpop.f32.mrb[0].mxu0
  %2643 = vmatprep.mubr.f32.mxu0 0.0
  %2644 = vmatmul.mubr.f32.gmra.mrb[0].mxu0 %v211
  %v2645 = vpop.f32.mrb[0].mxu0
  %v2646 = vadd.f32 0.0, %v2645
  %v2647 = vpop.f32.mrb[0].mxu0
  %2648 = vmatprep.mubr.f32.mxu0 0.0
  %2649 = vmatmul.mubr.f32.gmra.mrb[0].mxu0 %v214
  %v2650 = vpop.f32.mrb[0].mxu0
  %v2651 = vadd.f32 0.0, %v2650
  %v2652 = vpop.f32.mrb[0].mxu0
  %2653 = vmatprep.mubr.f32.mxu0 0.0
  %2654 = vmatmul.mubr.f32.gmra.mrb[0].mxu0 %v217
  %v2655 = vpop.f32.mrb[0].mxu0
  %v2656 = vadd.f32 0.0, %v2655
  %v2657 = vpop.f32.mrb[0].mxu0
  %2658 = vmatprep.mubr.f32.mxu0 0.0
  %2659 = vmatmul.mubr.f32.gmra.mrb[0].mxu0 %v220
  %v2660 = vpop.f32.mrb[0].mxu0
  %v2661 = vadd.f32 0.0, %v2660
  %v2662 = vpop.f32.mrb[0].mxu0
  %2663 = vmatprep.mubr.f32.mxu0 0.0
  %2664 = vmatmul.mubr.f32.gmra.mrb[0].mxu0 %v223
  %v2665 = vpop.f32.mrb[0].mxu0
  %v2666 = vadd.f32 0.0, %v2665
  %v2667 = vpop.f32.mrb[0].mxu0
  %2668 = vmatprep.mubr.f32.mxu0 0.0
  %2669 = vmatmul.mubr.f32.gmra.mrb[0].mxu0 %v226
  %v2670 = vpop.f32.mrb[0].mxu0
  %v2671 = vadd.f32 0.0, %v2670
  %v2672 = vpop.f32.mrb[0].mxu0
  %2673 = vmatprep.mubr.f32.mxu0 0.0
  %2674 = vmatmul.mubr.f32.gmra.mrb[0].mxu0 %v229
  %v2675 = vpop.f32.mrb[0].mxu0
  %v2676 = vadd.f32 0.0, %v2675
  %v2677 = vpop.f32.mrb[0].mxu0
  %2678 = vmatprep.mubr.f32.mxu0 0.0
  %2679 = vmatmul.mubr.f32.gmra.mrb[0].mxu0 %v232
  %v2680 = vpop.f32.mrb[0].mxu0
  %v2681 = vadd.f32 0.0, %v2680
  %v2682 = vpop.f32.mrb[0].mxu0
  %2683 = vmatprep.mubr.f32.mxu0 0.0
  %2684 = vmatmul.mubr.f32.gmra.mrb[0].mxu0 %v235
  %v2685 = vpop.f32.mrb[0].mxu0
  %v2686 = vadd.f32 0.0, %v2685
  %v2687 = vpop.f32.mrb[0].mxu0
  %2688 = vmatprep.mubr.f32.mxu0 0.0
  %2689 = vmatmul.mubr.f32.gmra.mrb[0].mxu0 %v238
  %v2690 = vpop.f32.mrb[0].mxu0
  %v2691 = vadd.f32 0.0, %v2690
  %v2692 = vpop.f32.mrb[0].mxu0
  %2693 = vmatprep.mubr.f32.mxu0 0.0
  %2694 = vmatmul.mubr.f32.gmra.mrb[0].mxu0 %v241
  %v2695 = vpop.f32.mrb[0].mxu0
  %v2696 = vadd.f32 0.0, %v2695
  %v2697 = vpop.f32.mrb[0].mxu0
  %2698 = vmatprep.mubr.f32.mxu0 0.0
  %2699 = vmatmul.mubr.f32.gmra.mrb[0].mxu0 %v244
  %v2700 = vpop.f32.mrb[0].mxu0
  %v2701 = vadd.f32 0.0, %v2700
  %v2702 = vpop.f32.mrb[0].mxu0
  %2703 = vdwg.mxu0
  %v2706 = vcombine.high %v2471, %v2471
  %v2708 = vunpack.c.l.s4 1966171168
  %v2709 = vunpack.c.0.s8 %v2708
  %v2710 = vlaneseq
  %v2711 = vshrl.u32 %v2710, 7
  %v2712 = vsub.s32 %v2709, %v2711
  %v2713 = vrot.slane %v2471, %v2712
  %v2715 = vunpack.c.l.s4 1966171168
  %v2716 = vunpack.c.0.s8 %v2715
  %v2717 = vlaneseq
  %v2718 = vshrl.u32 %v2717, 7
  %v2719 = vsub.s32 %v2716, %v2718
  %v2720 = vrot.slane %v2706, %v2719
  %v2721 = vcombine.high %v2713, %v2713
  %v2722 = vcombine.high %v2720, %v2720
  %v2724 = vunpack.c.l.s4 1966171168
  %v2725 = vunpack.c.0.s8 %v2724
  %v2726 = vlaneseq
  %v2727 = vshrl.u32 %v2726, 7
  %v2728 = vsub.s32 %v2725, %v2727
  %v2729 = vrot.slane %v2713, %v2728
  %v2731 = vunpack.c.l.s4 1966171168
  %v2732 = vunpack.c.0.s8 %v2731
  %v2733 = vlaneseq
  %v2734 = vshrl.u32 %v2733, 7
  %v2735 = vsub.s32 %v2732, %v2734
  %v2736 = vrot.slane %v2720, %v2735
  %v2738 = vunpack.c.l.s4 1966171168
  %v2739 = vunpack.c.0.s8 %v2738
  %v2740 = vlaneseq
  %v2741 = vshrl.u32 %v2740, 7
  %v2742 = vsub.s32 %v2739, %v2741
  %v2743 = vrot.slane %v2721, %v2742
  %v2745 = vunpack.c.l.s4 1966171168
  %v2746 = vunpack.c.0.s8 %v2745
  %v2747 = vlaneseq
  %v2748 = vshrl.u32 %v2747, 7
  %v2749 = vsub.s32 %v2746, %v2748
  %v2750 = vrot.slane %v2722, %v2749
  %v2751 = vcombine.high %v2729, %v2729
  %v2752 = vcombine.high %v2736, %v2736
  %v2753 = vcombine.high %v2743, %v2743
  %v2754 = vcombine.high %v2750, %v2750
  %v2755 = vcombine.high %v2476, %v2476
  %v2757 = vunpack.c.l.s4 1966171168
  %v2758 = vunpack.c.0.s8 %v2757
  %v2759 = vlaneseq
  %v2760 = vshrl.u32 %v2759, 7
  %v2761 = vsub.s32 %v2758, %v2760
  %v2762 = vrot.slane %v2476, %v2761
  %v2764 = vunpack.c.l.s4 1966171168
  %v2765 = vunpack.c.0.s8 %v2764
  %v2766 = vlaneseq
  %v2767 = vshrl.u32 %v2766, 7
  %v2768 = vsub.s32 %v2765, %v2767
  %v2769 = vrot.slane %v2755, %v2768
  %v2770 = vcombine.high %v2762, %v2762
  %v2771 = vcombine.high %v2769, %v2769
  %v2773 = vunpack.c.l.s4 1966171168
  %v2774 = vunpack.c.0.s8 %v2773
  %v2775 = vlaneseq
  %v2776 = vshrl.u32 %v2775, 7
  %v2777 = vsub.s32 %v2774, %v2776
  %v2778 = vrot.slane %v2762, %v2777
  %v2780 = vunpack.c.l.s4 1966171168
  %v2781 = vunpack.c.0.s8 %v2780
  %v2782 = vlaneseq
  %v2783 = vshrl.u32 %v2782, 7
  %v2784 = vsub.s32 %v2781, %v2783
  %v2785 = vrot.slane %v2769, %v2784
  %v2787 = vunpack.c.l.s4 1966171168
  %v2788 = vunpack.c.0.s8 %v2787
  %v2789 = vlaneseq
  %v2790 = vshrl.u32 %v2789, 7
  %v2791 = vsub.s32 %v2788, %v2790
  %v2792 = vrot.slane %v2770, %v2791
  %v2794 = vunpack.c.l.s4 1966171168
  %v2795 = vunpack.c.0.s8 %v2794
  %v2796 = vlaneseq
  %v2797 = vshrl.u32 %v2796, 7
  %v2798 = vsub.s32 %v2795, %v2797
  %v2799 = vrot.slane %v2771, %v2798
  %v2800 = vcombine.high %v2778, %v2778
  %v2801 = vcombine.high %v2785, %v2785
  %v2802 = vcombine.high %v2792, %v2792
  %v2803 = vcombine.high %v2799, %v2799
  %v2804 = vlaneseq
  %v2805 = vshrl.u32 %v2804, 7
  %v2806 = vsub.s32 0, %v2805
  %v2807 = vrot.slane %v2729, %v2806
  %v2808 = vlaneseq
  %v2809 = vshrl.u32 %v2808, 7
  %v2810 = vsub.s32 0, %v2809
  %v2811 = vrot.slane %v2743, %v2810
  %v2812 = vlaneseq
  %v2813 = vshrl.u32 %v2812, 7
  %v2814 = vsub.s32 0, %v2813
  %v2815 = vrot.slane %v2751, %v2814
  %v2816 = vlaneseq
  %v2817 = vshrl.u32 %v2816, 7
  %v2818 = vsub.s32 0, %v2817
  %v2819 = vrot.slane %v2753, %v2818
  %v2820 = vlaneseq
  %v2821 = vshrl.u32 %v2820, 7
  %v2822 = vsub.s32 0, %v2821
  %v2823 = vrot.slane %v2736, %v2822
  %v2824 = vlaneseq
  %v2825 = vshrl.u32 %v2824, 7
  %v2826 = vsub.s32 0, %v2825
  %v2827 = vrot.slane %v2750, %v2826
  %v2828 = vlaneseq
  %v2829 = vshrl.u32 %v2828, 7
  %v2830 = vsub.s32 0, %v2829
  %v2831 = vrot.slane %v2752, %v2830
  %v2832 = vlaneseq
  %v2833 = vshrl.u32 %v2832, 7
  %v2834 = vsub.s32 0, %v2833
  %v2835 = vrot.slane %v2754, %v2834
  %v2836 = vlaneseq
  %v2837 = vshrl.u32 %v2836, 7
  %v2838 = vsub.s32 0, %v2837
  %v2839 = vrot.slane %v2778, %v2838
  %v2840 = vlaneseq
  %v2841 = vshrl.u32 %v2840, 7
  %v2842 = vsub.s32 0, %v2841
  %v2843 = vrot.slane %v2792, %v2842
  %v2844 = vlaneseq
  %v2845 = vshrl.u32 %v2844, 7
  %v2846 = vsub.s32 0, %v2845
  %v2847 = vrot.slane %v2800, %v2846
  %v2848 = vlaneseq
  %v2849 = vshrl.u32 %v2848, 7
  %v2850 = vsub.s32 0, %v2849
  %v2851 = vrot.slane %v2802, %v2850
  %v2852 = vlaneseq
  %v2853 = vshrl.u32 %v2852, 7
  %v2854 = vsub.s32 0, %v2853
  %v2855 = vrot.slane %v2785, %v2854
  %v2856 = vlaneseq
  %v2857 = vshrl.u32 %v2856, 7
  %v2858 = vsub.s32 0, %v2857
  %v2859 = vrot.slane %v2799, %v2858
  %v2860 = vlaneseq
  %v2861 = vshrl.u32 %v2860, 7
  %v2862 = vsub.s32 0, %v2861
  %v2863 = vrot.slane %v2801, %v2862
  %v2864 = vlaneseq
  %v2865 = vshrl.u32 %v2864, 7
  %v2866 = vsub.s32 0, %v2865
  %v2867 = vrot.slane %v2803, %v2866
  %2884 = vrot.lane.b32.xlu0 %v2471, 32
  %v2885 = vpop.permute.xlu0 %2884
  %2886 = vrot.lane.b32.xlu0 %v2476, 32
  %v2887 = vpop.permute.xlu0 %2886
  %v2890 = vadd.f32 %v2807, %v2885
  %v2891 = vadd.f32 %v2807, %v2887
  %v2892 = vadd.f32 %v2811, %v2885
  %v2893 = vadd.f32 %v2811, %v2887
  %v2894 = vadd.f32 %v2815, %v2885
  %v2895 = vadd.f32 %v2815, %v2887
  %v2896 = vadd.f32 %v2819, %v2885
  %v2897 = vadd.f32 %v2819, %v2887
  %v2898 = vadd.f32 %v2823, %v2885
  %v2899 = vadd.f32 %v2823, %v2887
  %v2900 = vadd.f32 %v2827, %v2885
  %v2901 = vadd.f32 %v2827, %v2887
  %v2902 = vadd.f32 %v2831, %v2885
  %v2903 = vadd.f32 %v2831, %v2887
  %v2904 = vadd.f32 %v2835, %v2885
  %v2905 = vadd.f32 %v2835, %v2887
  %v2906 = vadd.f32 %v2839, %v2885
  %v2907 = vadd.f32 %v2839, %v2887
  %v2908 = vadd.f32 %v2843, %v2885
  %v2909 = vadd.f32 %v2843, %v2887
  %v2910 = vadd.f32 %v2847, %v2885
  %v2911 = vadd.f32 %v2847, %v2887
  %v2912 = vadd.f32 %v2851, %v2885
  %v2913 = vadd.f32 %v2851, %v2887
  %v2914 = vadd.f32 %v2855, %v2885
  %v2915 = vadd.f32 %v2855, %v2887
  %v2916 = vadd.f32 %v2859, %v2885
  %v2917 = vadd.f32 %v2859, %v2887
  %v2918 = vadd.f32 %v2863, %v2885
  %v2919 = vadd.f32 %v2863, %v2887
  %v2920 = vadd.f32 %v2867, %v2885
  %v2921 = vadd.f32 %v2867, %v2887
  %2954 = vrot.lane.b32.xlu0 %v2546, 32
  %v2955 = vpop.permute.xlu0 %2954
  %2956 = vrot.lane.b32.xlu0 %v2551, 32
  %v2957 = vpop.permute.xlu0 %2956
  %2958 = vrot.lane.b32.xlu0 %v2556, 32
  %v2959 = vpop.permute.xlu0 %2958
  %2960 = vrot.lane.b32.xlu0 %v2561, 32
  %v2961 = vpop.permute.xlu0 %2960
  %2962 = vrot.lane.b32.xlu0 %v2566, 32
  %v2963 = vpop.permute.xlu0 %2962
  %2964 = vrot.lane.b32.xlu0 %v2571, 32
  %v2965 = vpop.permute.xlu0 %2964
  %2966 = vrot.lane.b32.xlu0 %v2576, 32
  %v2967 = vpop.permute.xlu0 %2966
  %2968 = vrot.lane.b32.xlu0 %v2581, 32
  %v2969 = vpop.permute.xlu0 %2968
  %2970 = vrot.lane.b32.xlu0 %v2586, 32
  %v2971 = vpop.permute.xlu0 %2970
  %2972 = vrot.lane.b32.xlu0 %v2591, 32
  %v2973 = vpop.permute.xlu0 %2972
  %2974 = vrot.lane.b32.xlu0 %v2596, 32
  %v2975 = vpop.permute.xlu0 %2974
  %2976 = vrot.lane.b32.xlu0 %v2601, 32
  %v2977 = vpop.permute.xlu0 %2976
  %2978 = vrot.lane.b32.xlu0 %v2606, 32
  %v2979 = vpop.permute.xlu0 %2978
  %2980 = vrot.lane.b32.xlu0 %v2611, 32
  %v2981 = vpop.permute.xlu0 %2980
  %2982 = vrot.lane.b32.xlu0 %v2616, 32
  %v2983 = vpop.permute.xlu0 %2982
  %2984 = vrot.lane.b32.xlu0 %v2621, 32
  %v2985 = vpop.permute.xlu0 %2984
  %2986 = vrot.lane.b32.xlu0 %v2626, 32
  %v2987 = vpop.permute.xlu0 %2986
  %2988 = vrot.lane.b32.xlu0 %v2631, 32
  %v2989 = vpop.permute.xlu0 %2988
  %2990 = vrot.lane.b32.xlu0 %v2636, 32
  %v2991 = vpop.permute.xlu0 %2990
  %2992 = vrot.lane.b32.xlu0 %v2641, 32
  %v2993 = vpop.permute.xlu0 %2992
  %2994 = vrot.lane.b32.xlu0 %v2646, 32
  %v2995 = vpop.permute.xlu0 %2994
  %2996 = vrot.lane.b32.xlu0 %v2651, 32
  %v2997 = vpop.permute.xlu0 %2996
  %2998 = vrot.lane.b32.xlu0 %v2656, 32
  %v2999 = vpop.permute.xlu0 %2998
  %3000 = vrot.lane.b32.xlu0 %v2661, 32
  %v3001 = vpop.permute.xlu0 %3000
  %3002 = vrot.lane.b32.xlu0 %v2666, 32
  %v3003 = vpop.permute.xlu0 %3002
  %3004 = vrot.lane.b32.xlu0 %v2671, 32
  %v3005 = vpop.permute.xlu0 %3004
  %3006 = vrot.lane.b32.xlu0 %v2676, 32
  %v3007 = vpop.permute.xlu0 %3006
  %3008 = vrot.lane.b32.xlu0 %v2681, 32
  %v3009 = vpop.permute.xlu0 %3008
  %3010 = vrot.lane.b32.xlu0 %v2686, 32
  %v3011 = vpop.permute.xlu0 %3010
  %3012 = vrot.lane.b32.xlu0 %v2691, 32
  %v3013 = vpop.permute.xlu0 %3012
  %3014 = vrot.lane.b32.xlu0 %v2696, 32
  %v3015 = vpop.permute.xlu0 %3014
  %3016 = vrot.lane.b32.xlu0 %v2701, 32
  %v3017 = vpop.permute.xlu0 %3016
  %v3050 = vadd.f32 %v2890, %v2955
  %v3051 = vadd.f32 %v2891, %v2957
  %v3052 = vadd.f32 %v2892, %v2959
  %v3053 = vadd.f32 %v2893, %v2961
  %v3054 = vadd.f32 %v2894, %v2963
  %v3055 = vadd.f32 %v2895, %v2965
  %v3056 = vadd.f32 %v2896, %v2967
  %v3057 = vadd.f32 %v2897, %v2969
  %v3058 = vadd.f32 %v2898, %v2971
  %v3059 = vadd.f32 %v2899, %v2973
  %v3060 = vadd.f32 %v2900, %v2975
  %v3061 = vadd.f32 %v2901, %v2977
  %v3062 = vadd.f32 %v2902, %v2979
  %v3063 = vadd.f32 %v2903, %v2981
  %v3064 = vadd.f32 %v2904, %v2983
  %v3065 = vadd.f32 %v2905, %v2985
  %v3066 = vadd.f32 %v2906, %v2987
  %v3067 = vadd.f32 %v2907, %v2989
  %v3068 = vadd.f32 %v2908, %v2991
  %v3069 = vadd.f32 %v2909, %v2993
  %v3070 = vadd.f32 %v2910, %v2995
  %v3071 = vadd.f32 %v2911, %v2997
  %v3072 = vadd.f32 %v2912, %v2999
  %v3073 = vadd.f32 %v2913, %v3001
  %v3074 = vadd.f32 %v2914, %v3003
  %v3075 = vadd.f32 %v2915, %v3005
  %v3076 = vadd.f32 %v2916, %v3007
  %v3077 = vadd.f32 %v2917, %v3009
  %v3078 = vadd.f32 %v2918, %v3011
  %v3079 = vadd.f32 %v2919, %v3013
  %v3080 = vadd.f32 %v2920, %v3015
  %v3081 = vadd.f32 %v2921, %v3017
  %v3082 = vmul.f32 %v3050, 0.2
  %v3083 = vmul.f32 %v3051, 0.2
  %v3084 = vmul.f32 %v3052, 0.2
  %v3085 = vmul.f32 %v3053, 0.2
  %v3086 = vmul.f32 %v3054, 0.2
  %v3087 = vmul.f32 %v3055, 0.2
  %v3088 = vmul.f32 %v3056, 0.2
  %v3089 = vmul.f32 %v3057, 0.2
  %v3090 = vmul.f32 %v3058, 0.2
  %v3091 = vmul.f32 %v3059, 0.2
  %v3092 = vmul.f32 %v3060, 0.2
  %v3093 = vmul.f32 %v3061, 0.2
  %v3094 = vmul.f32 %v3062, 0.2
  %v3095 = vmul.f32 %v3063, 0.2
  %v3096 = vmul.f32 %v3064, 0.2
  %v3097 = vmul.f32 %v3065, 0.2
  %v3098 = vmul.f32 %v3066, 0.2
  %v3099 = vmul.f32 %v3067, 0.2
  %v3100 = vmul.f32 %v3068, 0.2
  %v3101 = vmul.f32 %v3069, 0.2
  %v3102 = vmul.f32 %v3070, 0.2
  %v3103 = vmul.f32 %v3071, 0.2
  %v3104 = vmul.f32 %v3072, 0.2
  %v3105 = vmul.f32 %v3073, 0.2
  %v3106 = vmul.f32 %v3074, 0.2
  %v3107 = vmul.f32 %v3075, 0.2
  %v3108 = vmul.f32 %v3076, 0.2
  %v3109 = vmul.f32 %v3077, 0.2
  %v3110 = vmul.f32 %v3078, 0.2
  %v3111 = vmul.f32 %v3079, 0.2
  %v3112 = vmul.f32 %v3080, 0.2
  %v3113 = vmul.f32 %v3081, 0.2
  %v3114 = vmax.f32 %v3050, %v3082
  %v3115 = vmax.f32 %v3051, %v3083
  %v3116 = vmax.f32 %v3052, %v3084
  %v3117 = vmax.f32 %v3053, %v3085
  %v3118 = vmax.f32 %v3054, %v3086
  %v3119 = vmax.f32 %v3055, %v3087
  %v3120 = vmax.f32 %v3056, %v3088
  %v3121 = vmax.f32 %v3057, %v3089
  %v3122 = vmax.f32 %v3058, %v3090
  %v3123 = vmax.f32 %v3059, %v3091
  %v3124 = vmax.f32 %v3060, %v3092
  %v3125 = vmax.f32 %v3061, %v3093
  %v3126 = vmax.f32 %v3062, %v3094
  %v3127 = vmax.f32 %v3063, %v3095
  %v3128 = vmax.f32 %v3064, %v3096
  %v3129 = vmax.f32 %v3065, %v3097
  %v3130 = vmax.f32 %v3066, %v3098
  %v3131 = vmax.f32 %v3067, %v3099
  %v3132 = vmax.f32 %v3068, %v3100
  %v3133 = vmax.f32 %v3069, %v3101
  %v3134 = vmax.f32 %v3070, %v3102
  %v3135 = vmax.f32 %v3071, %v3103
  %v3136 = vmax.f32 %v3072, %v3104
  %v3137 = vmax.f32 %v3073, %v3105
  %v3138 = vmax.f32 %v3074, %v3106
  %v3139 = vmax.f32 %v3075, %v3107
  %v3140 = vmax.f32 %v3076, %v3108
  %v3141 = vmax.f32 %v3077, %v3109
  %v3142 = vmax.f32 %v3078, %v3110
  %v3143 = vmax.f32 %v3079, %v3111
  %v3144 = vmax.f32 %v3080, %v3112
  %v3145 = vmax.f32 %v3081, %v3113
  %3178 = vrot.lane.b32.xlu0 %v3114, 96
  %v3179 = vpop.permute.xlu0 %3178
  %3180 = vrot.lane.b32.xlu0 %v3115, 96
  %v3181 = vpop.permute.xlu0 %3180
  %3182 = vrot.lane.b32.xlu0 %v3116, 96
  %v3183 = vpop.permute.xlu0 %3182
  %3184 = vrot.lane.b32.xlu0 %v3117, 96
  %v3185 = vpop.permute.xlu0 %3184
  %3186 = vrot.lane.b32.xlu0 %v3118, 96
  %v3187 = vpop.permute.xlu0 %3186
  %3188 = vrot.lane.b32.xlu0 %v3119, 96
  %v3189 = vpop.permute.xlu0 %3188
  %3190 = vrot.lane.b32.xlu0 %v3120, 96
  %v3191 = vpop.permute.xlu0 %3190
  %3192 = vrot.lane.b32.xlu0 %v3121, 96
  %v3193 = vpop.permute.xlu0 %3192
  %3194 = vrot.lane.b32.xlu0 %v3122, 96
  %v3195 = vpop.permute.xlu0 %3194
  %3196 = vrot.lane.b32.xlu0 %v3123, 96
  %v3197 = vpop.permute.xlu0 %3196
  %3198 = vrot.lane.b32.xlu0 %v3124, 96
  %v3199 = vpop.permute.xlu0 %3198
  %3200 = vrot.lane.b32.xlu0 %v3125, 96
  %v3201 = vpop.permute.xlu0 %3200
  %3202 = vrot.lane.b32.xlu0 %v3126, 96
  %v3203 = vpop.permute.xlu0 %3202
  %3204 = vrot.lane.b32.xlu0 %v3127, 96
  %v3205 = vpop.permute.xlu0 %3204
  %3206 = vrot.lane.b32.xlu0 %v3128, 96
  %v3207 = vpop.permute.xlu0 %3206
  %3208 = vrot.lane.b32.xlu0 %v3129, 96
  %v3209 = vpop.permute.xlu0 %3208
  %3210 = vrot.lane.b32.xlu0 %v3130, 96
  %v3211 = vpop.permute.xlu0 %3210
  %3212 = vrot.lane.b32.xlu0 %v3131, 96
  %v3213 = vpop.permute.xlu0 %3212
  %3214 = vrot.lane.b32.xlu0 %v3132, 96
  %v3215 = vpop.permute.xlu0 %3214
  %3216 = vrot.lane.b32.xlu0 %v3133, 96
  %v3217 = vpop.permute.xlu0 %3216
  %3218 = vrot.lane.b32.xlu0 %v3134, 96
  %v3219 = vpop.permute.xlu0 %3218
  %3220 = vrot.lane.b32.xlu0 %v3135, 96
  %v3221 = vpop.permute.xlu0 %3220
  %3222 = vrot.lane.b32.xlu0 %v3136, 96
  %v3223 = vpop.permute.xlu0 %3222
  %3224 = vrot.lane.b32.xlu0 %v3137, 96
  %v3225 = vpop.permute.xlu0 %3224
  %3226 = vrot.lane.b32.xlu0 %v3138, 96
  %v3227 = vpop.permute.xlu0 %3226
  %3228 = vrot.lane.b32.xlu0 %v3139, 96
  %v3229 = vpop.permute.xlu0 %3228
  %3230 = vrot.lane.b32.xlu0 %v3140, 96
  %v3231 = vpop.permute.xlu0 %3230
  %3232 = vrot.lane.b32.xlu0 %v3141, 96
  %v3233 = vpop.permute.xlu0 %3232
  %3234 = vrot.lane.b32.xlu0 %v3142, 96
  %v3235 = vpop.permute.xlu0 %3234
  %3236 = vrot.lane.b32.xlu0 %v3143, 96
  %v3237 = vpop.permute.xlu0 %3236
  %3238 = vrot.lane.b32.xlu0 %v3144, 96
  %v3239 = vpop.permute.xlu0 %3238
  %3240 = vrot.lane.b32.xlu0 %v3145, 96
  %v3241 = vpop.permute.xlu0 %3240
  %v3242 = vsel %vm1009, %v3179, 0
  %v3244 = vsel %vm1009, %v3181, 0
  %v3246 = vsel %vm1009, %v3183, 0
  %v3248 = vsel %vm1009, %v3185, 0
  %v3250 = vsel %vm1009, %v3187, 0
  %v3252 = vsel %vm1009, %v3189, 0
  %v3254 = vsel %vm1009, %v3191, 0
  %v3256 = vsel %vm1009, %v3193, 0
  %v3258 = vsel %vm1009, %v3195, 0
  %v3260 = vsel %vm1009, %v3197, 0
  %v3262 = vsel %vm1009, %v3199, 0
  %v3264 = vsel %vm1009, %v3201, 0
  %v3266 = vsel %vm1009, %v3203, 0
  %v3268 = vsel %vm1009, %v3205, 0
  %v3270 = vsel %vm1009, %v3207, 0
  %v3272 = vsel %vm1009, %v3209, 0
  %v3274 = vsel %vm1009, %v3211, 0
  %v3276 = vsel %vm1009, %v3213, 0
  %v3278 = vsel %vm1009, %v3215, 0
  %v3280 = vsel %vm1009, %v3217, 0
  %v3282 = vsel %vm1009, %v3219, 0
  %v3284 = vsel %vm1009, %v3221, 0
  %v3286 = vsel %vm1009, %v3223, 0
  %v3288 = vsel %vm1009, %v3225, 0
  %v3290 = vsel %vm1009, %v3227, 0
  %v3292 = vsel %vm1009, %v3229, 0
  %v3294 = vsel %vm1009, %v3231, 0
  %v3296 = vsel %vm1009, %v3233, 0
  %v3298 = vsel %vm1009, %v3235, 0
  %v3300 = vsel %vm1009, %v3237, 0
  %v3302 = vsel %vm1009, %v3239, 0
  %v3304 = vsel %vm1009, %v3241, 0
  %3306 = vmatprep.subr.mxu0 0.0
  %3307 = vmatpush1.msra.mxu0 %v2386
  %3308 = vmatprep.subr.mxu0 0.0
  %3309 = vmatpush1.msra.mxu0 %v2387
  %3310 = vmatprep.subr.mxu0 0.0
  %3311 = vmatpush1.msra.mxu0 %v2388
  %3312 = vmatprep.subr.mxu0 0.0
  %3313 = vmatpush1.msra.mxu0 %v2389
  %3314 = vmatprep.subr.mxu0 0.0
  %3315 = vmatpush1.msra.mxu0 0.0
  %3316 = vmatprep.subr.mxu0 0.0
  %3317 = vmatpush1.msra.mxu0 0.0
  %3318 = vmatprep.subr.mxu0 0.0
  %3319 = vmatpush1.msra.mxu0 0.0
  %3320 = vmatprep.subr.mxu0 0.0
  %3321 = vmatpush1.msra.mxu0 0.0
  %3322 = vmatprep.subr.mxu0 0.0
  %3323 = vmatpush1.msra.mxu0 0.0
  %3324 = vmatprep.subr.mxu0 0.0
  %3325 = vmatpush1.msra.mxu0 0.0
  %3326 = vmatprep.subr.mxu0 0.0
  %3327 = vmatpush1.msra.mxu0 0.0
  %3328 = vmatprep.subr.mxu0 0.0
  %3329 = vmatpush1.msra.mxu0 0.0
  %3330 = vmatprep.subr.mxu0 0.0
  %3331 = vmatpush1.msra.mxu0 0.0
  %3332 = vmatprep.subr.mxu0 0.0
  %3333 = vmatpush1.msra.mxu0 0.0
  %3334 = vmatprep.subr.mxu0 0.0
  %3335 = vmatpush1.msra.mxu0 0.0
  %3336 = vmatprep.subr.mxu0 0.0
  %3337 = vmatpush1.msra.mxu0 0.0
  %3338 = vmatprep.subr.mxu0 0.0
  %3339 = vmatpush1.msra.mxu0 0.0
  %3340 = vmatprep.subr.mxu0 0.0
  %3341 = vmatpush1.msra.mxu0 0.0
  %3342 = vmatprep.subr.mxu0 0.0
  %3343 = vmatpush1.msra.mxu0 0.0
  %3344 = vmatprep.subr.mxu0 0.0
  %3345 = vmatpush1.msra.mxu0 0.0
  %3346 = vmatprep.subr.mxu0 0.0
  %3347 = vmatpush1.msra.mxu0 0.0
  %3348 = vmatprep.subr.mxu0 0.0
  %3349 = vmatpush1.msra.mxu0 0.0
  %3350 = vmatprep.subr.mxu0 0.0
  %3351 = vmatpush1.msra.mxu0 0.0
  %3352 = vmatprep.subr.mxu0 0.0
  %3353 = vmatpush1.msra.mxu0 0.0
  %3354 = vmatprep.subr.mxu0 0.0
  %3355 = vmatpush1.msra.mxu0 0.0
  %3356 = vmatprep.subr.mxu0 0.0
  %3357 = vmatpush1.msra.mxu0 0.0
  %3358 = vmatprep.subr.mxu0 0.0
  %3359 = vmatpush1.msra.mxu0 0.0
  %3360 = vmatprep.subr.mxu0 0.0
  %3361 = vmatpush1.msra.mxu0 0.0
  %3362 = vmatprep.subr.mxu0 0.0
  %3363 = vmatpush1.msra.mxu0 0.0
  %3364 = vmatprep.subr.mxu0 0.0
  %3365 = vmatpush1.msra.mxu0 0.0
  %3366 = vmatprep.subr.mxu0 0.0
  %3367 = vmatpush1.msra.mxu0 0.0
  %3368 = vmatprep.subr.mxu0 0.0
  %3369 = vmatpush1.msra.mxu0 0.0
  %3370 = vmatprep.mubr.f32.mxu0 0.0
  %3371 = vmatmul.mubr.f32.gmra.mrb[0].mxu0 %v3242
  %v3372 = vpop.f32.mrb[0].mxu0
  %v3373 = vadd.f32 0.0, %v3372
  %v3374 = vpop.f32.mrb[0].mxu0
  %3375 = vmatprep.mubr.f32.mxu0 0.0
  %3376 = vmatmul.mubr.f32.gmra.mrb[0].mxu0 %v3244
  %v3377 = vpop.f32.mrb[0].mxu0
  %v3378 = vadd.f32 0.0, %v3377
  %v3379 = vpop.f32.mrb[0].mxu0
  %3380 = vmatprep.mubr.f32.mxu0 0.0
  %3381 = vmatmul.mubr.f32.gmra.mrb[0].mxu0 %v3246
  %v3382 = vpop.f32.mrb[0].mxu0
  %v3383 = vadd.f32 0.0, %v3382
  %v3384 = vpop.f32.mrb[0].mxu0
  %3385 = vmatprep.mubr.f32.mxu0 0.0
  %3386 = vmatmul.mubr.f32.gmra.mrb[0].mxu0 %v3248
  %v3387 = vpop.f32.mrb[0].mxu0
  %v3388 = vadd.f32 0.0, %v3387
  %v3389 = vpop.f32.mrb[0].mxu0
  %3390 = vmatprep.mubr.f32.mxu0 0.0
  %3391 = vmatmul.mubr.f32.gmra.mrb[0].mxu0 %v3250
  %v3392 = vpop.f32.mrb[0].mxu0
  %v3393 = vadd.f32 0.0, %v3392
  %v3394 = vpop.f32.mrb[0].mxu0
  %3395 = vmatprep.mubr.f32.mxu0 0.0
  %3396 = vmatmul.mubr.f32.gmra.mrb[0].mxu0 %v3252
  %v3397 = vpop.f32.mrb[0].mxu0
  %v3398 = vadd.f32 0.0, %v3397
  %v3399 = vpop.f32.mrb[0].mxu0
  %3400 = vmatprep.mubr.f32.mxu0 0.0
  %3401 = vmatmul.mubr.f32.gmra.mrb[0].mxu0 %v3254
  %v3402 = vpop.f32.mrb[0].mxu0
  %v3403 = vadd.f32 0.0, %v3402
  %v3404 = vpop.f32.mrb[0].mxu0
  %3405 = vmatprep.mubr.f32.mxu0 0.0
  %3406 = vmatmul.mubr.f32.gmra.mrb[0].mxu0 %v3256
  %v3407 = vpop.f32.mrb[0].mxu0
  %v3408 = vadd.f32 0.0, %v3407
  %v3409 = vpop.f32.mrb[0].mxu0
  %3410 = vmatprep.mubr.f32.mxu0 0.0
  %3411 = vmatmul.mubr.f32.gmra.mrb[0].mxu0 %v3258
  %v3412 = vpop.f32.mrb[0].mxu0
  %v3413 = vadd.f32 0.0, %v3412
  %v3414 = vpop.f32.mrb[0].mxu0
  %3415 = vmatprep.mubr.f32.mxu0 0.0
  %3416 = vmatmul.mubr.f32.gmra.mrb[0].mxu0 %v3260
  %v3417 = vpop.f32.mrb[0].mxu0
  %v3418 = vadd.f32 0.0, %v3417
  %v3419 = vpop.f32.mrb[0].mxu0
  %3420 = vmatprep.mubr.f32.mxu0 0.0
  %3421 = vmatmul.mubr.f32.gmra.mrb[0].mxu0 %v3262
  %v3422 = vpop.f32.mrb[0].mxu0
  %v3423 = vadd.f32 0.0, %v3422
  %v3424 = vpop.f32.mrb[0].mxu0
  %3425 = vmatprep.mubr.f32.mxu0 0.0
  %3426 = vmatmul.mubr.f32.gmra.mrb[0].mxu0 %v3264
  %v3427 = vpop.f32.mrb[0].mxu0
  %v3428 = vadd.f32 0.0, %v3427
  %v3429 = vpop.f32.mrb[0].mxu0
  %3430 = vmatprep.mubr.f32.mxu0 0.0
  %3431 = vmatmul.mubr.f32.gmra.mrb[0].mxu0 %v3266
  %v3432 = vpop.f32.mrb[0].mxu0
  %v3433 = vadd.f32 0.0, %v3432
  %v3434 = vpop.f32.mrb[0].mxu0
  %3435 = vmatprep.mubr.f32.mxu0 0.0
  %3436 = vmatmul.mubr.f32.gmra.mrb[0].mxu0 %v3268
  %v3437 = vpop.f32.mrb[0].mxu0
  %v3438 = vadd.f32 0.0, %v3437
  %v3439 = vpop.f32.mrb[0].mxu0
  %3440 = vmatprep.mubr.f32.mxu0 0.0
  %3441 = vmatmul.mubr.f32.gmra.mrb[0].mxu0 %v3270
  %v3442 = vpop.f32.mrb[0].mxu0
  %v3443 = vadd.f32 0.0, %v3442
  %v3444 = vpop.f32.mrb[0].mxu0
  %3445 = vmatprep.mubr.f32.mxu0 0.0
  %3446 = vmatmul.mubr.f32.gmra.mrb[0].mxu0 %v3272
  %v3447 = vpop.f32.mrb[0].mxu0
  %v3448 = vadd.f32 0.0, %v3447
  %v3449 = vpop.f32.mrb[0].mxu0
  %3450 = vmatprep.mubr.f32.mxu0 0.0
  %3451 = vmatmul.mubr.f32.gmra.mrb[0].mxu0 %v3274
  %v3452 = vpop.f32.mrb[0].mxu0
  %v3453 = vadd.f32 0.0, %v3452
  %v3454 = vpop.f32.mrb[0].mxu0
  %3455 = vmatprep.mubr.f32.mxu0 0.0
  %3456 = vmatmul.mubr.f32.gmra.mrb[0].mxu0 %v3276
  %v3457 = vpop.f32.mrb[0].mxu0
  %v3458 = vadd.f32 0.0, %v3457
  %v3459 = vpop.f32.mrb[0].mxu0
  %3460 = vmatprep.mubr.f32.mxu0 0.0
  %3461 = vmatmul.mubr.f32.gmra.mrb[0].mxu0 %v3278
  %v3462 = vpop.f32.mrb[0].mxu0
  %v3463 = vadd.f32 0.0, %v3462
  %v3464 = vpop.f32.mrb[0].mxu0
  %3465 = vmatprep.mubr.f32.mxu0 0.0
  %3466 = vmatmul.mubr.f32.gmra.mrb[0].mxu0 %v3280
  %v3467 = vpop.f32.mrb[0].mxu0
  %v3468 = vadd.f32 0.0, %v3467
  %v3469 = vpop.f32.mrb[0].mxu0
  %3470 = vmatprep.mubr.f32.mxu0 0.0
  %3471 = vmatmul.mubr.f32.gmra.mrb[0].mxu0 %v3282
  %v3472 = vpop.f32.mrb[0].mxu0
  %v3473 = vadd.f32 0.0, %v3472
  %v3474 = vpop.f32.mrb[0].mxu0
  %3475 = vmatprep.mubr.f32.mxu0 0.0
  %3476 = vmatmul.mubr.f32.gmra.mrb[0].mxu0 %v3284
  %v3477 = vpop.f32.mrb[0].mxu0
  %v3478 = vadd.f32 0.0, %v3477
  %v3479 = vpop.f32.mrb[0].mxu0
  %3480 = vmatprep.mubr.f32.mxu0 0.0
  %3481 = vmatmul.mubr.f32.gmra.mrb[0].mxu0 %v3286
  %v3482 = vpop.f32.mrb[0].mxu0
  %v3483 = vadd.f32 0.0, %v3482
  %v3484 = vpop.f32.mrb[0].mxu0
  %3485 = vmatprep.mubr.f32.mxu0 0.0
  %3486 = vmatmul.mubr.f32.gmra.mrb[0].mxu0 %v3288
  %v3487 = vpop.f32.mrb[0].mxu0
  %v3488 = vadd.f32 0.0, %v3487
  %v3489 = vpop.f32.mrb[0].mxu0
  %3490 = vmatprep.mubr.f32.mxu0 0.0
  %3491 = vmatmul.mubr.f32.gmra.mrb[0].mxu0 %v3290
  %v3492 = vpop.f32.mrb[0].mxu0
  %v3493 = vadd.f32 0.0, %v3492
  %v3494 = vpop.f32.mrb[0].mxu0
  %3495 = vmatprep.mubr.f32.mxu0 0.0
  %3496 = vmatmul.mubr.f32.gmra.mrb[0].mxu0 %v3292
  %v3497 = vpop.f32.mrb[0].mxu0
  %v3498 = vadd.f32 0.0, %v3497
  %v3499 = vpop.f32.mrb[0].mxu0
  %3500 = vmatprep.mubr.f32.mxu0 0.0
  %3501 = vmatmul.mubr.f32.gmra.mrb[0].mxu0 %v3294
  %v3502 = vpop.f32.mrb[0].mxu0
  %v3503 = vadd.f32 0.0, %v3502
  %v3504 = vpop.f32.mrb[0].mxu0
  %3505 = vmatprep.mubr.f32.mxu0 0.0
  %3506 = vmatmul.mubr.f32.gmra.mrb[0].mxu0 %v3296
  %v3507 = vpop.f32.mrb[0].mxu0
  %v3508 = vadd.f32 0.0, %v3507
  %v3509 = vpop.f32.mrb[0].mxu0
  %3510 = vmatprep.mubr.f32.mxu0 0.0
  %3511 = vmatmul.mubr.f32.gmra.mrb[0].mxu0 %v3298
  %v3512 = vpop.f32.mrb[0].mxu0
  %v3513 = vadd.f32 0.0, %v3512
  %v3514 = vpop.f32.mrb[0].mxu0
  %3515 = vmatprep.mubr.f32.mxu0 0.0
  %3516 = vmatmul.mubr.f32.gmra.mrb[0].mxu0 %v3300
  %v3517 = vpop.f32.mrb[0].mxu0
  %v3518 = vadd.f32 0.0, %v3517
  %v3519 = vpop.f32.mrb[0].mxu0
  %3520 = vmatprep.mubr.f32.mxu0 0.0
  %3521 = vmatmul.mubr.f32.gmra.mrb[0].mxu0 %v3302
  %v3522 = vpop.f32.mrb[0].mxu0
  %v3523 = vadd.f32 0.0, %v3522
  %v3524 = vpop.f32.mrb[0].mxu0
  %3525 = vmatprep.mubr.f32.mxu0 0.0
  %3526 = vmatmul.mubr.f32.gmra.mrb[0].mxu0 %v3304
  %v3527 = vpop.f32.mrb[0].mxu0
  %v3528 = vadd.f32 0.0, %v3527
  %v3529 = vpop.f32.mrb[0].mxu0
  %3530 = vdwg.mxu0
  %v3531 = vadd.f32 %v3373, %v1305
  %v3532 = vadd.f32 %v3378, %v1309
  %v3533 = vadd.f32 %v3383, %v1316
  %v3534 = vadd.f32 %v3388, %v1320
  %v3535 = vadd.f32 %v3393, %v1327
  %v3536 = vadd.f32 %v3398, %v1331
  %v3537 = vadd.f32 %v3403, %v1338
  %v3538 = vadd.f32 %v3408, %v1342
  %v3539 = vadd.f32 %v3413, %v1349
  %v3540 = vadd.f32 %v3418, %v1353
  %v3541 = vadd.f32 %v3423, %v1360
  %v3542 = vadd.f32 %v3428, %v1364
  %v3543 = vadd.f32 %v3433, %v1371
  %v3544 = vadd.f32 %v3438, %v1375
  %v3545 = vadd.f32 %v3443, %v1382
  %v3546 = vadd.f32 %v3448, %v1386
  %v3547 = vadd.f32 %v3453, %v1393
  %v3548 = vadd.f32 %v3458, %v1397
  %v3549 = vadd.f32 %v3463, %v1404
  %v3550 = vadd.f32 %v3468, %v1408
  %v3551 = vadd.f32 %v3473, %v1415
  %v3552 = vadd.f32 %v3478, %v1419
  %v3553 = vadd.f32 %v3483, %v1426
  %v3554 = vadd.f32 %v3488, %v1430
  %v3555 = vadd.f32 %v3493, %v1437
  %v3556 = vadd.f32 %v3498, %v1441
  %v3557 = vadd.f32 %v3503, %v1448
  %v3558 = vadd.f32 %v3508, %v1452
  %v3559 = vadd.f32 %v3513, %v1459
  %v3560 = vadd.f32 %v3518, %v1463
  %v3561 = vadd.f32 %v3523, %v1470
  %v3562 = vadd.f32 %v3528, %v1474
  %v3563 = vsel %vm1009, %v3531, -inf
  %v3564 = vsel %vm1009, %v3532, -inf
  %v3565 = vmax.f32 %v3563, %v3564
  %v3566 = vrot.slane %v3565, 4
  %v3567 = vmax.f32 %v3565, %v3566
  %v3568 = vrot.slane %v3567, 2
  %v3569 = vmax.f32 %v3567, %v3568
  %v3570 = vrot.slane %v3569, 1
  %v3571 = vmax.f32 %v3569, %v3570
  %v3572 = vsel %vm1009, %v3533, -inf
  %v3573 = vsel %vm1009, %v3534, -inf
  %v3574 = vmax.f32 %v3572, %v3573
  %v3575 = vrot.slane %v3574, 4
  %v3576 = vmax.f32 %v3574, %v3575
  %v3577 = vrot.slane %v3576, 2
  %v3578 = vmax.f32 %v3576, %v3577
  %v3579 = vrot.slane %v3578, 1
  %v3580 = vmax.f32 %v3578, %v3579
  %v3581 = vsel %vm1009, %v3535, -inf
  %v3582 = vsel %vm1009, %v3536, -inf
  %v3583 = vmax.f32 %v3581, %v3582
  %v3584 = vrot.slane %v3583, 4
  %v3585 = vmax.f32 %v3583, %v3584
  %v3586 = vrot.slane %v3585, 2
  %v3587 = vmax.f32 %v3585, %v3586
  %v3588 = vrot.slane %v3587, 1
  %v3589 = vmax.f32 %v3587, %v3588
  %v3590 = vsel %vm1009, %v3537, -inf
  %v3591 = vsel %vm1009, %v3538, -inf
  %v3592 = vmax.f32 %v3590, %v3591
  %v3593 = vrot.slane %v3592, 4
  %v3594 = vmax.f32 %v3592, %v3593
  %v3595 = vrot.slane %v3594, 2
  %v3596 = vmax.f32 %v3594, %v3595
  %v3597 = vrot.slane %v3596, 1
  %v3598 = vmax.f32 %v3596, %v3597
  %v3599 = vsel %vm1009, %v3539, -inf
  %v3600 = vsel %vm1009, %v3540, -inf
  %v3601 = vmax.f32 %v3599, %v3600
  %v3602 = vrot.slane %v3601, 4
  %v3603 = vmax.f32 %v3601, %v3602
  %v3604 = vrot.slane %v3603, 2
  %v3605 = vmax.f32 %v3603, %v3604
  %v3606 = vrot.slane %v3605, 1
  %v3607 = vmax.f32 %v3605, %v3606
  %v3608 = vsel %vm1009, %v3541, -inf
  %v3609 = vsel %vm1009, %v3542, -inf
  %v3610 = vmax.f32 %v3608, %v3609
  %v3611 = vrot.slane %v3610, 4
  %v3612 = vmax.f32 %v3610, %v3611
  %v3613 = vrot.slane %v3612, 2
  %v3614 = vmax.f32 %v3612, %v3613
  %v3615 = vrot.slane %v3614, 1
  %v3616 = vmax.f32 %v3614, %v3615
  %v3617 = vsel %vm1009, %v3543, -inf
  %v3618 = vsel %vm1009, %v3544, -inf
  %v3619 = vmax.f32 %v3617, %v3618
  %v3620 = vrot.slane %v3619, 4
  %v3621 = vmax.f32 %v3619, %v3620
  %v3622 = vrot.slane %v3621, 2
  %v3623 = vmax.f32 %v3621, %v3622
  %v3624 = vrot.slane %v3623, 1
  %v3625 = vmax.f32 %v3623, %v3624
  %v3626 = vsel %vm1009, %v3545, -inf
  %v3627 = vsel %vm1009, %v3546, -inf
  %v3628 = vmax.f32 %v3626, %v3627
  %v3629 = vrot.slane %v3628, 4
  %v3630 = vmax.f32 %v3628, %v3629
  %v3631 = vrot.slane %v3630, 2
  %v3632 = vmax.f32 %v3630, %v3631
  %v3633 = vrot.slane %v3632, 1
  %v3634 = vmax.f32 %v3632, %v3633
  %v3635 = vsel %vm1009, %v3547, -inf
  %v3636 = vsel %vm1009, %v3548, -inf
  %v3637 = vmax.f32 %v3635, %v3636
  %v3638 = vrot.slane %v3637, 4
  %v3639 = vmax.f32 %v3637, %v3638
  %v3640 = vrot.slane %v3639, 2
  %v3641 = vmax.f32 %v3639, %v3640
  %v3642 = vrot.slane %v3641, 1
  %v3643 = vmax.f32 %v3641, %v3642
  %v3644 = vsel %vm1009, %v3549, -inf
  %v3645 = vsel %vm1009, %v3550, -inf
  %v3646 = vmax.f32 %v3644, %v3645
  %v3647 = vrot.slane %v3646, 4
  %v3648 = vmax.f32 %v3646, %v3647
  %v3649 = vrot.slane %v3648, 2
  %v3650 = vmax.f32 %v3648, %v3649
  %v3651 = vrot.slane %v3650, 1
  %v3652 = vmax.f32 %v3650, %v3651
  %v3653 = vsel %vm1009, %v3551, -inf
  %v3654 = vsel %vm1009, %v3552, -inf
  %v3655 = vmax.f32 %v3653, %v3654
  %v3656 = vrot.slane %v3655, 4
  %v3657 = vmax.f32 %v3655, %v3656
  %v3658 = vrot.slane %v3657, 2
  %v3659 = vmax.f32 %v3657, %v3658
  %v3660 = vrot.slane %v3659, 1
  %v3661 = vmax.f32 %v3659, %v3660
  %v3662 = vsel %vm1009, %v3553, -inf
  %v3663 = vsel %vm1009, %v3554, -inf
  %v3664 = vmax.f32 %v3662, %v3663
  %v3665 = vrot.slane %v3664, 4
  %v3666 = vmax.f32 %v3664, %v3665
  %v3667 = vrot.slane %v3666, 2
  %v3668 = vmax.f32 %v3666, %v3667
  %v3669 = vrot.slane %v3668, 1
  %v3670 = vmax.f32 %v3668, %v3669
  %v3671 = vsel %vm1009, %v3555, -inf
  %v3672 = vsel %vm1009, %v3556, -inf
  %v3673 = vmax.f32 %v3671, %v3672
  %v3674 = vrot.slane %v3673, 4
  %v3675 = vmax.f32 %v3673, %v3674
  %v3676 = vrot.slane %v3675, 2
  %v3677 = vmax.f32 %v3675, %v3676
  %v3678 = vrot.slane %v3677, 1
  %v3679 = vmax.f32 %v3677, %v3678
  %v3680 = vsel %vm1009, %v3557, -inf
  %v3681 = vsel %vm1009, %v3558, -inf
  %v3682 = vmax.f32 %v3680, %v3681
  %v3683 = vrot.slane %v3682, 4
  %v3684 = vmax.f32 %v3682, %v3683
  %v3685 = vrot.slane %v3684, 2
  %v3686 = vmax.f32 %v3684, %v3685
  %v3687 = vrot.slane %v3686, 1
  %v3688 = vmax.f32 %v3686, %v3687
  %v3689 = vsel %vm1009, %v3559, -inf
  %v3690 = vsel %vm1009, %v3560, -inf
  %v3691 = vmax.f32 %v3689, %v3690
  %v3692 = vrot.slane %v3691, 4
  %v3693 = vmax.f32 %v3691, %v3692
  %v3694 = vrot.slane %v3693, 2
  %v3695 = vmax.f32 %v3693, %v3694
  %v3696 = vrot.slane %v3695, 1
  %v3697 = vmax.f32 %v3695, %v3696
  %v3698 = vsel %vm1009, %v3561, -inf
  %v3699 = vsel %vm1009, %v3562, -inf
  %v3700 = vmax.f32 %v3698, %v3699
  %v3701 = vrot.slane %v3700, 4
  %v3702 = vmax.f32 %v3700, %v3701
  %v3703 = vrot.slane %v3702, 2
  %v3704 = vmax.f32 %v3702, %v3703
  %v3705 = vrot.slane %v3704, 1
  %v3706 = vmax.f32 %v3704, %v3705
  %v3707 = vsub.f32 %v3531, %v3571
  %v3708 = vsub.f32 %v3532, %v3571
  %v3709 = vsub.f32 %v3533, %v3580
  %v3710 = vsub.f32 %v3534, %v3580
  %v3711 = vsub.f32 %v3535, %v3589
  %v3712 = vsub.f32 %v3536, %v3589
  %v3713 = vsub.f32 %v3537, %v3598
  %v3714 = vsub.f32 %v3538, %v3598
  %v3715 = vsub.f32 %v3539, %v3607
  %v3716 = vsub.f32 %v3540, %v3607
  %v3717 = vsub.f32 %v3541, %v3616
  %v3718 = vsub.f32 %v3542, %v3616
  %v3719 = vsub.f32 %v3543, %v3625
  %v3720 = vsub.f32 %v3544, %v3625
  %v3721 = vsub.f32 %v3545, %v3634
  %v3722 = vsub.f32 %v3546, %v3634
  %v3723 = vsub.f32 %v3547, %v3643
  %v3724 = vsub.f32 %v3548, %v3643
  %v3725 = vsub.f32 %v3549, %v3652
  %v3726 = vsub.f32 %v3550, %v3652
  %v3727 = vsub.f32 %v3551, %v3661
  %v3728 = vsub.f32 %v3552, %v3661
  %v3729 = vsub.f32 %v3553, %v3670
  %v3730 = vsub.f32 %v3554, %v3670
  %v3731 = vsub.f32 %v3555, %v3679
  %v3732 = vsub.f32 %v3556, %v3679
  %v3733 = vsub.f32 %v3557, %v3688
  %v3734 = vsub.f32 %v3558, %v3688
  %v3735 = vsub.f32 %v3559, %v3697
  %v3736 = vsub.f32 %v3560, %v3697
  %v3737 = vsub.f32 %v3561, %v3706
  %v3738 = vsub.f32 %v3562, %v3706
  %v3739 = vmul.f32 %v3707, 1.442695
  %v3740 = vpow.pop %v3739
  %v3741 = vmul.f32 %v3708, 1.442695
  %v3742 = vpow.pop %v3741
  %v3743 = vmul.f32 %v3709, 1.442695
  %v3744 = vpow.pop %v3743
  %v3745 = vmul.f32 %v3710, 1.442695
  %v3746 = vpow.pop %v3745
  %v3747 = vmul.f32 %v3711, 1.442695
  %v3748 = vpow.pop %v3747
  %v3749 = vmul.f32 %v3712, 1.442695
  %v3750 = vpow.pop %v3749
  %v3751 = vmul.f32 %v3713, 1.442695
  %v3752 = vpow.pop %v3751
  %v3753 = vmul.f32 %v3714, 1.442695
  %v3754 = vpow.pop %v3753
  %v3755 = vmul.f32 %v3715, 1.442695
  %v3756 = vpow.pop %v3755
  %v3757 = vmul.f32 %v3716, 1.442695
  %v3758 = vpow.pop %v3757
  %v3759 = vmul.f32 %v3717, 1.442695
  %v3760 = vpow.pop %v3759
  %v3761 = vmul.f32 %v3718, 1.442695
  %v3762 = vpow.pop %v3761
  %v3763 = vmul.f32 %v3719, 1.442695
  %v3764 = vpow.pop %v3763
  %v3765 = vmul.f32 %v3720, 1.442695
  %v3766 = vpow.pop %v3765
  %v3767 = vmul.f32 %v3721, 1.442695
  %v3768 = vpow.pop %v3767
  %v3769 = vmul.f32 %v3722, 1.442695
  %v3770 = vpow.pop %v3769
  %v3771 = vmul.f32 %v3723, 1.442695
  %v3772 = vpow.pop %v3771
  %v3773 = vmul.f32 %v3724, 1.442695
  %v3774 = vpow.pop %v3773
  %v3775 = vmul.f32 %v3725, 1.442695
  %v3776 = vpow.pop %v3775
  %v3777 = vmul.f32 %v3726, 1.442695
  %v3778 = vpow.pop %v3777
  %v3779 = vmul.f32 %v3727, 1.442695
  %v3780 = vpow.pop %v3779
  %v3781 = vmul.f32 %v3728, 1.442695
  %v3782 = vpow.pop %v3781
  %v3783 = vmul.f32 %v3729, 1.442695
  %v3784 = vpow.pop %v3783
  %v3785 = vmul.f32 %v3730, 1.442695
  %v3786 = vpow.pop %v3785
  %v3787 = vmul.f32 %v3731, 1.442695
  %v3788 = vpow.pop %v3787
  %v3789 = vmul.f32 %v3732, 1.442695
  %v3790 = vpow.pop %v3789
  %v3791 = vmul.f32 %v3733, 1.442695
  %v3792 = vpow.pop %v3791
  %v3793 = vmul.f32 %v3734, 1.442695
  %v3794 = vpow.pop %v3793
  %v3795 = vmul.f32 %v3735, 1.442695
  %v3796 = vpow.pop %v3795
  %v3797 = vmul.f32 %v3736, 1.442695
  %v3798 = vpow.pop %v3797
  %v3799 = vmul.f32 %v3737, 1.442695
  %v3800 = vpow.pop %v3799
  %v3801 = vmul.f32 %v3738, 1.442695
  %v3802 = vpow.pop %v3801
  %v3803 = vsel %vm1009, %v3740, 0.0
  %v3804 = vsel %vm1009, %v3742, 0.0
  %v3805 = vadd.f32 %v3803, %v3804
  %v3806 = vrot.slane %v3805, 4
  %v3807 = vadd.f32 %v3805, %v3806
  %v3808 = vrot.slane %v3807, 2
  %v3809 = vadd.f32 %v3807, %v3808
  %v3810 = vrot.slane %v3809, 1
  %v3811 = vadd.f32 %v3809, %v3810
  %v3812 = vsel %vm1009, %v3744, 0.0
  %v3813 = vsel %vm1009, %v3746, 0.0
  %v3814 = vadd.f32 %v3812, %v3813
  %v3815 = vrot.slane %v3814, 4
  %v3816 = vadd.f32 %v3814, %v3815
  %v3817 = vrot.slane %v3816, 2
  %v3818 = vadd.f32 %v3816, %v3817
  %v3819 = vrot.slane %v3818, 1
  %v3820 = vadd.f32 %v3818, %v3819
  %v3821 = vsel %vm1009, %v3748, 0.0
  %v3822 = vsel %vm1009, %v3750, 0.0
  %v3823 = vadd.f32 %v3821, %v3822
  %v3824 = vrot.slane %v3823, 4
  %v3825 = vadd.f32 %v3823, %v3824
  %v3826 = vrot.slane %v3825, 2
  %v3827 = vadd.f32 %v3825, %v3826
  %v3828 = vrot.slane %v3827, 1
  %v3829 = vadd.f32 %v3827, %v3828
  %v3830 = vsel %vm1009, %v3752, 0.0
  %v3831 = vsel %vm1009, %v3754, 0.0
  %v3832 = vadd.f32 %v3830, %v3831
  %v3833 = vrot.slane %v3832, 4
  %v3834 = vadd.f32 %v3832, %v3833
  %v3835 = vrot.slane %v3834, 2
  %v3836 = vadd.f32 %v3834, %v3835
  %v3837 = vrot.slane %v3836, 1
  %v3838 = vadd.f32 %v3836, %v3837
  %v3839 = vsel %vm1009, %v3756, 0.0
  %v3840 = vsel %vm1009, %v3758, 0.0
  %v3841 = vadd.f32 %v3839, %v3840
  %v3842 = vrot.slane %v3841, 4
  %v3843 = vadd.f32 %v3841, %v3842
  %v3844 = vrot.slane %v3843, 2
  %v3845 = vadd.f32 %v3843, %v3844
  %v3846 = vrot.slane %v3845, 1
  %v3847 = vadd.f32 %v3845, %v3846
  %v3848 = vsel %vm1009, %v3760, 0.0
  %v3849 = vsel %vm1009, %v3762, 0.0
  %v3850 = vadd.f32 %v3848, %v3849
  %v3851 = vrot.slane %v3850, 4
  %v3852 = vadd.f32 %v3850, %v3851
  %v3853 = vrot.slane %v3852, 2
  %v3854 = vadd.f32 %v3852, %v3853
  %v3855 = vrot.slane %v3854, 1
  %v3856 = vadd.f32 %v3854, %v3855
  %v3857 = vsel %vm1009, %v3764, 0.0
  %v3858 = vsel %vm1009, %v3766, 0.0
  %v3859 = vadd.f32 %v3857, %v3858
  %v3860 = vrot.slane %v3859, 4
  %v3861 = vadd.f32 %v3859, %v3860
  %v3862 = vrot.slane %v3861, 2
  %v3863 = vadd.f32 %v3861, %v3862
  %v3864 = vrot.slane %v3863, 1
  %v3865 = vadd.f32 %v3863, %v3864
  %v3866 = vsel %vm1009, %v3768, 0.0
  %v3867 = vsel %vm1009, %v3770, 0.0
  %v3868 = vadd.f32 %v3866, %v3867
  %v3869 = vrot.slane %v3868, 4
  %v3870 = vadd.f32 %v3868, %v3869
  %v3871 = vrot.slane %v3870, 2
  %v3872 = vadd.f32 %v3870, %v3871
  %v3873 = vrot.slane %v3872, 1
  %v3874 = vadd.f32 %v3872, %v3873
  %v3875 = vsel %vm1009, %v3772, 0.0
  %v3876 = vsel %vm1009, %v3774, 0.0
  %v3877 = vadd.f32 %v3875, %v3876
  %v3878 = vrot.slane %v3877, 4
  %v3879 = vadd.f32 %v3877, %v3878
  %v3880 = vrot.slane %v3879, 2
  %v3881 = vadd.f32 %v3879, %v3880
  %v3882 = vrot.slane %v3881, 1
  %v3883 = vadd.f32 %v3881, %v3882
  %v3884 = vsel %vm1009, %v3776, 0.0
  %v3885 = vsel %vm1009, %v3778, 0.0
  %v3886 = vadd.f32 %v3884, %v3885
  %v3887 = vrot.slane %v3886, 4
  %v3888 = vadd.f32 %v3886, %v3887
  %v3889 = vrot.slane %v3888, 2
  %v3890 = vadd.f32 %v3888, %v3889
  %v3891 = vrot.slane %v3890, 1
  %v3892 = vadd.f32 %v3890, %v3891
  %v3893 = vsel %vm1009, %v3780, 0.0
  %v3894 = vsel %vm1009, %v3782, 0.0
  %v3895 = vadd.f32 %v3893, %v3894
  %v3896 = vrot.slane %v3895, 4
  %v3897 = vadd.f32 %v3895, %v3896
  %v3898 = vrot.slane %v3897, 2
  %v3899 = vadd.f32 %v3897, %v3898
  %v3900 = vrot.slane %v3899, 1
  %v3901 = vadd.f32 %v3899, %v3900
  %v3902 = vsel %vm1009, %v3784, 0.0
  %v3903 = vsel %vm1009, %v3786, 0.0
  %v3904 = vadd.f32 %v3902, %v3903
  %v3905 = vrot.slane %v3904, 4
  %v3906 = vadd.f32 %v3904, %v3905
  %v3907 = vrot.slane %v3906, 2
  %v3908 = vadd.f32 %v3906, %v3907
  %v3909 = vrot.slane %v3908, 1
  %v3910 = vadd.f32 %v3908, %v3909
  %v3911 = vsel %vm1009, %v3788, 0.0
  %v3912 = vsel %vm1009, %v3790, 0.0
  %v3913 = vadd.f32 %v3911, %v3912
  %v3914 = vrot.slane %v3913, 4
  %v3915 = vadd.f32 %v3913, %v3914
  %v3916 = vrot.slane %v3915, 2
  %v3917 = vadd.f32 %v3915, %v3916
  %v3918 = vrot.slane %v3917, 1
  %v3919 = vadd.f32 %v3917, %v3918
  %v3920 = vsel %vm1009, %v3792, 0.0
  %v3921 = vsel %vm1009, %v3794, 0.0
  %v3922 = vadd.f32 %v3920, %v3921
  %v3923 = vrot.slane %v3922, 4
  %v3924 = vadd.f32 %v3922, %v3923
  %v3925 = vrot.slane %v3924, 2
  %v3926 = vadd.f32 %v3924, %v3925
  %v3927 = vrot.slane %v3926, 1
  %v3928 = vadd.f32 %v3926, %v3927
  %v3929 = vsel %vm1009, %v3796, 0.0
  %v3930 = vsel %vm1009, %v3798, 0.0
  %v3931 = vadd.f32 %v3929, %v3930
  %v3932 = vrot.slane %v3931, 4
  %v3933 = vadd.f32 %v3931, %v3932
  %v3934 = vrot.slane %v3933, 2
  %v3935 = vadd.f32 %v3933, %v3934
  %v3936 = vrot.slane %v3935, 1
  %v3937 = vadd.f32 %v3935, %v3936
  %v3938 = vsel %vm1009, %v3800, 0.0
  %v3939 = vsel %vm1009, %v3802, 0.0
  %v3940 = vadd.f32 %v3938, %v3939
  %v3941 = vrot.slane %v3940, 4
  %v3942 = vadd.f32 %v3940, %v3941
  %v3943 = vrot.slane %v3942, 2
  %v3944 = vadd.f32 %v3942, %v3943
  %v3945 = vrot.slane %v3944, 1
  %v3946 = vadd.f32 %v3944, %v3945
  %v3947 = vrcp.pop %v3811
  %v3948 = vrcp.pop %v3820
  %v3949 = vrcp.pop %v3829
  %v3950 = vrcp.pop %v3838
  %v3951 = vrcp.pop %v3847
  %v3952 = vrcp.pop %v3856
  %v3953 = vrcp.pop %v3865
  %v3954 = vrcp.pop %v3874
  %v3955 = vrcp.pop %v3883
  %v3956 = vrcp.pop %v3892
  %v3957 = vrcp.pop %v3901
  %v3958 = vrcp.pop %v3910
  %v3959 = vrcp.pop %v3919
  %v3960 = vrcp.pop %v3928
  %v3961 = vrcp.pop %v3937
  %v3962 = vrcp.pop %v3946
  %v3963 = vmul.f32 %v3740, %v3947
  %v3964 = vmul.f32 %v3742, %v3947
  %v3965 = vmul.f32 %v3744, %v3948
  %v3966 = vmul.f32 %v3746, %v3948
  %v3967 = vmul.f32 %v3748, %v3949
  %v3968 = vmul.f32 %v3750, %v3949
  %v3969 = vmul.f32 %v3752, %v3950
  %v3970 = vmul.f32 %v3754, %v3950
  %v3971 = vmul.f32 %v3756, %v3951
  %v3972 = vmul.f32 %v3758, %v3951
  %v3973 = vmul.f32 %v3760, %v3952
  %v3974 = vmul.f32 %v3762, %v3952
  %v3975 = vmul.f32 %v3764, %v3953
  %v3976 = vmul.f32 %v3766, %v3953
  %v3977 = vmul.f32 %v3768, %v3954
  %v3978 = vmul.f32 %v3770, %v3954
  %v3979 = vmul.f32 %v3772, %v3955
  %v3980 = vmul.f32 %v3774, %v3955
  %v3981 = vmul.f32 %v3776, %v3956
  %v3982 = vmul.f32 %v3778, %v3956
  %v3983 = vmul.f32 %v3780, %v3957
  %v3984 = vmul.f32 %v3782, %v3957
  %v3985 = vmul.f32 %v3784, %v3958
  %v3986 = vmul.f32 %v3786, %v3958
  %v3987 = vmul.f32 %v3788, %v3959
  %v3988 = vmul.f32 %v3790, %v3959
  %v3989 = vmul.f32 %v3792, %v3960
  %v3990 = vmul.f32 %v3794, %v3960
  %v3991 = vmul.f32 %v3796, %v3961
  %v3992 = vmul.f32 %v3798, %v3961
  %v3993 = vmul.f32 %v3800, %v3962
  %v3994 = vmul.f32 %v3802, %v3962
  %v3995 = vmul.f32 %v3963, %v2471
  %v3996 = vmul.f32 %v3964, %v2476
  %v3997 = vmul.f32 %v3965, %v2471
  %v3998 = vmul.f32 %v3966, %v2476
  %v3999 = vmul.f32 %v3967, %v2471
  %v4000 = vmul.f32 %v3968, %v2476
  %v4001 = vmul.f32 %v3969, %v2471
  %v4002 = vmul.f32 %v3970, %v2476
  %v4003 = vmul.f32 %v3971, %v2471
  %v4004 = vmul.f32 %v3972, %v2476
  %v4005 = vmul.f32 %v3973, %v2471
  %v4006 = vmul.f32 %v3974, %v2476
  %v4007 = vmul.f32 %v3975, %v2471
  %v4008 = vmul.f32 %v3976, %v2476
  %v4009 = vmul.f32 %v3977, %v2471
  %v4010 = vmul.f32 %v3978, %v2476
  %v4011 = vmul.f32 %v3979, %v2471
  %v4012 = vmul.f32 %v3980, %v2476
  %v4013 = vmul.f32 %v3981, %v2471
  %v4014 = vmul.f32 %v3982, %v2476
  %v4015 = vmul.f32 %v3983, %v2471
  %v4016 = vmul.f32 %v3984, %v2476
  %v4017 = vmul.f32 %v3985, %v2471
  %v4018 = vmul.f32 %v3986, %v2476
  %v4019 = vmul.f32 %v3987, %v2471
  %v4020 = vmul.f32 %v3988, %v2476
  %v4021 = vmul.f32 %v3989, %v2471
  %v4022 = vmul.f32 %v3990, %v2476
  %v4023 = vmul.f32 %v3991, %v2471
  %v4024 = vmul.f32 %v3992, %v2476
  %v4025 = vmul.f32 %v3993, %v2471
  %v4026 = vmul.f32 %v3994, %v2476
  %v4027 = vsel %vm1009, %v3995, 0.0
  %v4028 = vsel %vm1009, %v3996, 0.0
  %v4029 = vadd.f32 %v4027, %v4028
  %v4030 = vrot.slane %v4029, 4
  %v4031 = vadd.f32 %v4029, %v4030
  %v4032 = vrot.slane %v4031, 2
  %v4033 = vadd.f32 %v4031, %v4032
  %v4034 = vrot.slane %v4033, 1
  %v4035 = vadd.f32 %v4033, %v4034
  %v4036 = vsel %vm1009, %v3997, 0.0
  %v4037 = vsel %vm1009, %v3998, 0.0
  %v4038 = vadd.f32 %v4036, %v4037
  %v4039 = vrot.slane %v4038, 4
  %v4040 = vadd.f32 %v4038, %v4039
  %v4041 = vrot.slane %v4040, 2
  %v4042 = vadd.f32 %v4040, %v4041
  %v4043 = vrot.slane %v4042, 1
  %v4044 = vadd.f32 %v4042, %v4043
  %v4045 = vsel %vm1009, %v3999, 0.0
  %v4046 = vsel %vm1009, %v4000, 0.0
  %v4047 = vadd.f32 %v4045, %v4046
  %v4048 = vrot.slane %v4047, 4
  %v4049 = vadd.f32 %v4047, %v4048
  %v4050 = vrot.slane %v4049, 2
  %v4051 = vadd.f32 %v4049, %v4050
  %v4052 = vrot.slane %v4051, 1
  %v4053 = vadd.f32 %v4051, %v4052
  %v4054 = vsel %vm1009, %v4001, 0.0
  %v4055 = vsel %vm1009, %v4002, 0.0
  %v4056 = vadd.f32 %v4054, %v4055
  %v4057 = vrot.slane %v4056, 4
  %v4058 = vadd.f32 %v4056, %v4057
  %v4059 = vrot.slane %v4058, 2
  %v4060 = vadd.f32 %v4058, %v4059
  %v4061 = vrot.slane %v4060, 1
  %v4062 = vadd.f32 %v4060, %v4061
  %v4063 = vsel %vm1009, %v4003, 0.0
  %v4064 = vsel %vm1009, %v4004, 0.0
  %v4065 = vadd.f32 %v4063, %v4064
  %v4066 = vrot.slane %v4065, 4
  %v4067 = vadd.f32 %v4065, %v4066
  %v4068 = vrot.slane %v4067, 2
  %v4069 = vadd.f32 %v4067, %v4068
  %v4070 = vrot.slane %v4069, 1
  %v4071 = vadd.f32 %v4069, %v4070
  %v4072 = vsel %vm1009, %v4005, 0.0
  %v4073 = vsel %vm1009, %v4006, 0.0
  %v4074 = vadd.f32 %v4072, %v4073
  %v4075 = vrot.slane %v4074, 4
  %v4076 = vadd.f32 %v4074, %v4075
  %v4077 = vrot.slane %v4076, 2
  %v4078 = vadd.f32 %v4076, %v4077
  %v4079 = vrot.slane %v4078, 1
  %v4080 = vadd.f32 %v4078, %v4079
  %v4081 = vsel %vm1009, %v4007, 0.0
  %v4082 = vsel %vm1009, %v4008, 0.0
  %v4083 = vadd.f32 %v4081, %v4082
  %v4084 = vrot.slane %v4083, 4
  %v4085 = vadd.f32 %v4083, %v4084
  %v4086 = vrot.slane %v4085, 2
  %v4087 = vadd.f32 %v4085, %v4086
  %v4088 = vrot.slane %v4087, 1
  %v4089 = vadd.f32 %v4087, %v4088
  %v4090 = vsel %vm1009, %v4009, 0.0
  %v4091 = vsel %vm1009, %v4010, 0.0
  %v4092 = vadd.f32 %v4090, %v4091
  %v4093 = vrot.slane %v4092, 4
  %v4094 = vadd.f32 %v4092, %v4093
  %v4095 = vrot.slane %v4094, 2
  %v4096 = vadd.f32 %v4094, %v4095
  %v4097 = vrot.slane %v4096, 1
  %v4098 = vadd.f32 %v4096, %v4097
  %v4099 = vsel %vm1009, %v4011, 0.0
  %v4100 = vsel %vm1009, %v4012, 0.0
  %v4101 = vadd.f32 %v4099, %v4100
  %v4102 = vrot.slane %v4101, 4
  %v4103 = vadd.f32 %v4101, %v4102
  %v4104 = vrot.slane %v4103, 2
  %v4105 = vadd.f32 %v4103, %v4104
  %v4106 = vrot.slane %v4105, 1
  %v4107 = vadd.f32 %v4105, %v4106
  %v4108 = vsel %vm1009, %v4013, 0.0
  %v4109 = vsel %vm1009, %v4014, 0.0
  %v4110 = vadd.f32 %v4108, %v4109
  %v4111 = vrot.slane %v4110, 4
  %v4112 = vadd.f32 %v4110, %v4111
  %v4113 = vrot.slane %v4112, 2
  %v4114 = vadd.f32 %v4112, %v4113
  %v4115 = vrot.slane %v4114, 1
  %v4116 = vadd.f32 %v4114, %v4115
  %v4117 = vsel %vm1009, %v4015, 0.0
  %v4118 = vsel %vm1009, %v4016, 0.0
  %v4119 = vadd.f32 %v4117, %v4118
  %v4120 = vrot.slane %v4119, 4
  %v4121 = vadd.f32 %v4119, %v4120
  %v4122 = vrot.slane %v4121, 2
  %v4123 = vadd.f32 %v4121, %v4122
  %v4124 = vrot.slane %v4123, 1
  %v4125 = vadd.f32 %v4123, %v4124
  %v4126 = vsel %vm1009, %v4017, 0.0
  %v4127 = vsel %vm1009, %v4018, 0.0
  %v4128 = vadd.f32 %v4126, %v4127
  %v4129 = vrot.slane %v4128, 4
  %v4130 = vadd.f32 %v4128, %v4129
  %v4131 = vrot.slane %v4130, 2
  %v4132 = vadd.f32 %v4130, %v4131
  %v4133 = vrot.slane %v4132, 1
  %v4134 = vadd.f32 %v4132, %v4133
  %v4135 = vsel %vm1009, %v4019, 0.0
  %v4136 = vsel %vm1009, %v4020, 0.0
  %v4137 = vadd.f32 %v4135, %v4136
  %v4138 = vrot.slane %v4137, 4
  %v4139 = vadd.f32 %v4137, %v4138
  %v4140 = vrot.slane %v4139, 2
  %v4141 = vadd.f32 %v4139, %v4140
  %v4142 = vrot.slane %v4141, 1
  %v4143 = vadd.f32 %v4141, %v4142
  %v4144 = vsel %vm1009, %v4021, 0.0
  %v4145 = vsel %vm1009, %v4022, 0.0
  %v4146 = vadd.f32 %v4144, %v4145
  %v4147 = vrot.slane %v4146, 4
  %v4148 = vadd.f32 %v4146, %v4147
  %v4149 = vrot.slane %v4148, 2
  %v4150 = vadd.f32 %v4148, %v4149
  %v4151 = vrot.slane %v4150, 1
  %v4152 = vadd.f32 %v4150, %v4151
  %v4153 = vsel %vm1009, %v4023, 0.0
  %v4154 = vsel %vm1009, %v4024, 0.0
  %v4155 = vadd.f32 %v4153, %v4154
  %v4156 = vrot.slane %v4155, 4
  %v4157 = vadd.f32 %v4155, %v4156
  %v4158 = vrot.slane %v4157, 2
  %v4159 = vadd.f32 %v4157, %v4158
  %v4160 = vrot.slane %v4159, 1
  %v4161 = vadd.f32 %v4159, %v4160
  %v4162 = vsel %vm1009, %v4025, 0.0
  %v4163 = vsel %vm1009, %v4026, 0.0
  %v4164 = vadd.f32 %v4162, %v4163
  %v4165 = vrot.slane %v4164, 4
  %v4166 = vadd.f32 %v4164, %v4165
  %v4167 = vrot.slane %v4166, 2
  %v4168 = vadd.f32 %v4166, %v4167
  %v4169 = vrot.slane %v4168, 1
  %v4170 = vadd.f32 %v4168, %v4169
  %v4171 = vlaneseq
  %v4172 = vshrl.u32 %v4171, 7
  %v4173 = vsub.s32 1, %v4172
  %v4174 = vrot.slane %v2383, %v4173
  %v4175 = vadd.f32 %v4035, %v4174
  %v4176 = vadd.f32 %v4044, %v4174
  %v4177 = vadd.f32 %v4053, %v4174
  %v4178 = vadd.f32 %v4062, %v4174
  %v4179 = vadd.f32 %v4071, %v4174
  %v4180 = vadd.f32 %v4080, %v4174
  %v4181 = vadd.f32 %v4089, %v4174
  %v4182 = vadd.f32 %v4098, %v4174
  %v4183 = vadd.f32 %v4107, %v4174
  %v4184 = vadd.f32 %v4116, %v4174
  %v4185 = vadd.f32 %v4125, %v4174
  %v4186 = vadd.f32 %v4134, %v4174
  %v4187 = vadd.f32 %v4143, %v4174
  %v4188 = vadd.f32 %v4152, %v4174
  %v4189 = vadd.f32 %v4161, %v4174
  %v4190 = vadd.f32 %v4170, %v4174
  %v4207 = vrot.slane %v4176, 7
  %v4208 = vsel %vm2152, %v4207, %v4175
  %v4209 = vrot.slane %v4177, 6
  %v4210 = vsel %vm2155, %v4209, %v4208
  %v4211 = vrot.slane %v4178, 5
  %v4212 = vsel %vm2158, %v4211, %v4210
  %v4213 = vrot.slane %v4179, 4
  %v4214 = vsel %vm2161, %v4213, %v4212
  %v4215 = vrot.slane %v4180, 3
  %v4216 = vsel %vm2164, %v4215, %v4214
  %v4217 = vrot.slane %v4181, 2
  %v4218 = vsel %vm2167, %v4217, %v4216
  %v4219 = vrot.slane %v4182, 1
  %v4220 = vsel %vm2170, %v4219, %v4218
  %v4221 = vrot.slane %v4184, 7
  %v4222 = vsel %vm2152, %v4221, %v4183
  %v4223 = vrot.slane %v4185, 6
  %v4224 = vsel %vm2155, %v4223, %v4222
  %v4225 = vrot.slane %v4186, 5
  %v4226 = vsel %vm2158, %v4225, %v4224
  %v4227 = vrot.slane %v4187, 4
  %v4228 = vsel %vm2161, %v4227, %v4226
  %v4229 = vrot.slane %v4188, 3
  %v4230 = vsel %vm2164, %v4229, %v4228
  %v4231 = vrot.slane %v4189, 2
  %v4232 = vsel %vm2167, %v4231, %v4230
  %v4233 = vrot.slane %v4190, 1
  %v4234 = vsel %vm2170, %v4233, %v4232
  %4236 = vrot.lane.b32.xlu0 %v4174, 96
  %v4237 = vpop.permute.xlu0 %4236
  %v4239 = vsel %vm1009, %v4220, 0
  %v4241 = vsel %vm1009, %v4234, 0
  %4243 = vmatprep.subr.mxu0 0.0
  %4244 = vmatpush1.msra.mxu0 %v2390
  %4245 = vmatprep.subr.mxu0 0.0
  %4246 = vmatpush1.msra.mxu0 %v2391
  %4247 = vmatprep.subr.mxu0 0.0
  %4248 = vmatpush1.msra.mxu0 %v2392
  %4249 = vmatprep.subr.mxu0 0.0
  %4250 = vmatpush1.msra.mxu0 %v2393
  %4251 = vmatprep.subr.mxu0 0.0
  %4252 = vmatpush1.msra.mxu0 0.0
  %4253 = vmatprep.subr.mxu0 0.0
  %4254 = vmatpush1.msra.mxu0 0.0
  %4255 = vmatprep.subr.mxu0 0.0
  %4256 = vmatpush1.msra.mxu0 0.0
  %4257 = vmatprep.subr.mxu0 0.0
  %4258 = vmatpush1.msra.mxu0 0.0
  %4259 = vmatprep.subr.mxu0 0.0
  %4260 = vmatpush1.msra.mxu0 0.0
  %4261 = vmatprep.subr.mxu0 0.0
  %4262 = vmatpush1.msra.mxu0 0.0
  %4263 = vmatprep.subr.mxu0 0.0
  %4264 = vmatpush1.msra.mxu0 0.0
  %4265 = vmatprep.subr.mxu0 0.0
  %4266 = vmatpush1.msra.mxu0 0.0
  %4267 = vmatprep.subr.mxu0 0.0
  %4268 = vmatpush1.msra.mxu0 0.0
  %4269 = vmatprep.subr.mxu0 0.0
  %4270 = vmatpush1.msra.mxu0 0.0
  %4271 = vmatprep.subr.mxu0 0.0
  %4272 = vmatpush1.msra.mxu0 0.0
  %4273 = vmatprep.subr.mxu0 0.0
  %4274 = vmatpush1.msra.mxu0 0.0
  %4275 = vmatprep.subr.mxu0 0.0
  %4276 = vmatpush1.msra.mxu0 0.0
  %4277 = vmatprep.subr.mxu0 0.0
  %4278 = vmatpush1.msra.mxu0 0.0
  %4279 = vmatprep.subr.mxu0 0.0
  %4280 = vmatpush1.msra.mxu0 0.0
  %4281 = vmatprep.subr.mxu0 0.0
  %4282 = vmatpush1.msra.mxu0 0.0
  %4283 = vmatprep.subr.mxu0 0.0
  %4284 = vmatpush1.msra.mxu0 0.0
  %4285 = vmatprep.subr.mxu0 0.0
  %4286 = vmatpush1.msra.mxu0 0.0
  %4287 = vmatprep.subr.mxu0 0.0
  %4288 = vmatpush1.msra.mxu0 0.0
  %4289 = vmatprep.subr.mxu0 0.0
  %4290 = vmatpush1.msra.mxu0 0.0
  %4291 = vmatprep.subr.mxu0 0.0
  %4292 = vmatpush1.msra.mxu0 0.0
  %4293 = vmatprep.subr.mxu0 0.0
  %4294 = vmatpush1.msra.mxu0 0.0
  %4295 = vmatprep.subr.mxu0 0.0
  %4296 = vmatpush1.msra.mxu0 0.0
  %4297 = vmatprep.subr.mxu0 0.0
  %4298 = vmatpush1.msra.mxu0 0.0
  %4299 = vmatprep.subr.mxu0 0.0
  %4300 = vmatpush1.msra.mxu0 0.0
  %4301 = vmatprep.subr.mxu0 0.0
  %4302 = vmatpush1.msra.mxu0 0.0
  %4303 = vmatprep.subr.mxu0 0.0
  %4304 = vmatpush1.msra.mxu0 0.0
  %4305 = vmatprep.subr.mxu0 0.0
  %4306 = vmatpush1.msra.mxu0 0.0
  %4307 = vmatprep.mubr.f32.mxu0 0.0
  %4308 = vmatmul.mubr.f32.gmra.mrb[0].mxu0 %v4239
  %v4309 = vpop.f32.mrb[0].mxu0
  %v4310 = vadd.f32 %v4237, %v4309
  %v4311 = vpop.f32.mrb[0].mxu0
  %4312 = vmatprep.mubr.f32.mxu0 0.0
  %4313 = vmatmul.mubr.f32.gmra.mrb[0].mxu0 %v4241
  %v4314 = vpop.f32.mrb[0].mxu0
  %v4315 = vadd.f32 %v4237, %v4314
  %v4316 = vpop.f32.mrb[0].mxu0
  %4317 = vdwg.mxu0
  %vm4318 = vcmp.gt.f32.partialorder %v4310, 0.0
  %vm4319 = vcmp.gt.f32.partialorder %v4315, 0.0
  %v4320 = vmin.f32 %v4310, 0.0
  %v4321 = vmin.f32 %v4315, 0.0
  %v4322 = vmul.f32 %v4320, 1.442695
  %v4323 = vpow.pop %v4322
  %v4324 = vmul.f32 %v4321, 1.442695
  %v4325 = vpow.pop %v4324
  %v4326 = vsub.f32 %v4323, 1.0
  %v4327 = vsub.f32 %v4325, 1.0
  %v4328 = vsel %vm4318, %v4310, %v4326
  %v4329 = vsel %vm4319, %v4315, %v4327
  %v4332 = vrot.slane %v4328, 1
  %v4333 = vrot.slane %v4328, 2
  %v4334 = vrot.slane %v4328, 3
  %v4335 = vrot.slane %v4328, 4
  %v4336 = vrot.slane %v4328, 5
  %v4337 = vrot.slane %v4328, 6
  %v4338 = vrot.slane %v4328, 7
  %v4339 = vrot.slane %v4329, 1
  %v4340 = vrot.slane %v4329, 2
  %v4341 = vrot.slane %v4329, 3
  %v4342 = vrot.slane %v4329, 4
  %v4343 = vrot.slane %v4329, 5
  %v4344 = vrot.slane %v4329, 6
  %v4345 = vrot.slane %v4329, 7
  %v4362 = vadd.f32 %v4175, %v4328
  %v4363 = vadd.f32 %v4176, %v4332
  %v4364 = vadd.f32 %v4177, %v4333
  %v4365 = vadd.f32 %v4178, %v4334
  %v4366 = vadd.f32 %v4179, %v4335
  %v4367 = vadd.f32 %v4180, %v4336
  %v4368 = vadd.f32 %v4181, %v4337
  %v4369 = vadd.f32 %v4182, %v4338
  %v4370 = vadd.f32 %v4183, %v4329
  %v4371 = vadd.f32 %v4184, %v4339
  %v4372 = vadd.f32 %v4185, %v4340
  %v4373 = vadd.f32 %v4186, %v4341
  %v4374 = vadd.f32 %v4187, %v4342
  %v4375 = vadd.f32 %v4188, %v4343
  %v4376 = vadd.f32 %v4189, %v4344
  %v4377 = vadd.f32 %v4190, %v4345
  %v4394 = vrot.slane %v4363, 7
  %v4395 = vsel %vm2152, %v4394, %v4362
  %v4396 = vrot.slane %v4364, 6
  %v4397 = vsel %vm2155, %v4396, %v4395
  %v4398 = vrot.slane %v4365, 5
  %v4399 = vsel %vm2158, %v4398, %v4397
  %v4400 = vrot.slane %v4366, 4
  %v4401 = vsel %vm2161, %v4400, %v4399
  %v4402 = vrot.slane %v4367, 3
  %v4403 = vsel %vm2164, %v4402, %v4401
  %v4404 = vrot.slane %v4368, 2
  %v4405 = vsel %vm2167, %v4404, %v4403
  %v4406 = vrot.slane %v4369, 1
  %v4407 = vsel %vm2170, %v4406, %v4405
  %v4408 = vrot.slane %v4371, 7
  %v4409 = vsel %vm2152, %v4408, %v4370
  %v4410 = vrot.slane %v4372, 6
  %v4411 = vsel %vm2155, %v4410, %v4409
  %v4412 = vrot.slane %v4373, 5
  %v4413 = vsel %vm2158, %v4412, %v4411
  %v4414 = vrot.slane %v4374, 4
  %v4415 = vsel %vm2161, %v4414, %v4413
  %v4416 = vrot.slane %v4375, 3
  %v4417 = vsel %vm2164, %v4416, %v4415
  %v4418 = vrot.slane %v4376, 2
  %v4419 = vsel %vm2167, %v4418, %v4417
  %v4420 = vrot.slane %v4377, 1
  %v4421 = vsel %vm2170, %v4420, %v4419
  %4424 = vst.msk [vmem:[#allocation2] sm:$0xff] %vm1009, %v4407
  %4425 = vst.msk [vmem:[#allocation2 + $0x8] sm:$0xff] %vm1009, %v4421
  %v4426 = vld [vmem:[#allocation2] sm:$0xff]
  %v4427 = vld [vmem:[#allocation2 + $0x8] sm:$0xff]
  %v4428 = vld [vmem:[%s0 + $0x128] sm:$0xff]
  %v4429 = vld [vmem:[%s0 + $0x130] sm:$0xff]
  %v4430 = vsub.f32 %v4429, 1.0
  %v4431 = vmul.f32 %v4430, 1e+30
  %v4432 = vld [vmem:[%s0 + $0x138] sm:$0xff]
  %v4433 = vld [vmem:[%s0 + $0x140] sm:$0xff]
  %v4434 = vld [vmem:[%s0 + $0x148] sm:$0xff]
  %v4435 = vld [vmem:[%s0 + $0x150] sm:$0xff]
  %v4436 = vld [vmem:[%s0 + $0x158] sm:$0xff]
  %v4437 = vld [vmem:[%s0 + $0x160] sm:$0xff]
  %v4438 = vld [vmem:[%s0 + $0x168] sm:$0xff]
  %v4439 = vld [vmem:[%s0 + $0x170] sm:$0xff]
  %v4440 = vld [vmem:[%s1 + $0xe0] sm:$0xff]
  %v4441 = vld [vmem:[%s1 + $0xe8] sm:$0xff]
  %v4442 = vld [vmem:[%s1 + $0xf0] sm:$0x3]
  %v4443 = vld [vmem:[%s1 + $0xf8] sm:$0xff]
  %v4444 = vld [vmem:[%s1 + $0x100] sm:$0xff]
  %v4445 = vld [vmem:[%s1 + $0x108] sm:$0xff]
  %v4446 = vld [vmem:[%s1 + $0x110] sm:$0xff]
  %v4447 = vld [vmem:[%s1 + $0x118] sm:$0xff]
  %v4448 = vld [vmem:[%s1 + $0x120] sm:$0xff]
  %v4449 = vld [vmem:[%s1 + $0x128] sm:$0xff]
  %v4450 = vld [vmem:[%s1 + $0x130] sm:$0xff]
  %v4451 = vld [vmem:[%s1 + $0x138] sm:$0xff]
  %v4452 = vld [vmem:[%s1 + $0x140] sm:$0xff]
  %v4453 = vlaneseq
  %v4454 = vshrl.u32 %v4453, 7
  %v4455 = vsub.s32 0, %v4454
  %v4456 = vrot.slane %v4442, %v4455
  %v4458 = vsel %vm68, %v4428, 0
  %4460 = vmatprep.subr.mxu0 0.0
  %4461 = vmatpush1.msra.mxu0 %v4440
  %4462 = vmatprep.subr.mxu0 0.0
  %4463 = vmatpush1.msra.mxu0 %v4441
  %4464 = vmatprep.subr.mxu0 0.0
  %4465 = vmatpush1.msra.mxu0 0.0
  %4466 = vmatprep.subr.mxu0 0.0
  %4467 = vmatpush1.msra.mxu0 0.0
  %4468 = vmatprep.subr.mxu0 0.0
  %4469 = vmatpush1.msra.mxu0 0.0
  %4470 = vmatprep.subr.mxu0 0.0
  %4471 = vmatpush1.msra.mxu0 0.0
  %4472 = vmatprep.subr.mxu0 0.0
  %4473 = vmatpush1.msra.mxu0 0.0
  %4474 = vmatprep.subr.mxu0 0.0
  %4475 = vmatpush1.msra.mxu0 0.0
  %4476 = vmatprep.subr.mxu0 0.0
  %4477 = vmatpush1.msra.mxu0 0.0
  %4478 = vmatprep.subr.mxu0 0.0
  %4479 = vmatpush1.msra.mxu0 0.0
  %4480 = vmatprep.subr.mxu0 0.0
  %4481 = vmatpush1.msra.mxu0 0.0
  %4482 = vmatprep.subr.mxu0 0.0
  %4483 = vmatpush1.msra.mxu0 0.0
  %4484 = vmatprep.subr.mxu0 0.0
  %4485 = vmatpush1.msra.mxu0 0.0
  %4486 = vmatprep.subr.mxu0 0.0
  %4487 = vmatpush1.msra.mxu0 0.0
  %4488 = vmatprep.subr.mxu0 0.0
  %4489 = vmatpush1.msra.mxu0 0.0
  %4490 = vmatprep.subr.mxu0 0.0
  %4491 = vmatpush1.msra.mxu0 0.0
  %4492 = vmatprep.subr.mxu0 0.0
  %4493 = vmatpush1.msra.mxu0 0.0
  %4494 = vmatprep.subr.mxu0 0.0
  %4495 = vmatpush1.msra.mxu0 0.0
  %4496 = vmatprep.subr.mxu0 0.0
  %4497 = vmatpush1.msra.mxu0 0.0
  %4498 = vmatprep.subr.mxu0 0.0
  %4499 = vmatpush1.msra.mxu0 0.0
  %4500 = vmatprep.subr.mxu0 0.0
  %4501 = vmatpush1.msra.mxu0 0.0
  %4502 = vmatprep.subr.mxu0 0.0
  %4503 = vmatpush1.msra.mxu0 0.0
  %4504 = vmatprep.subr.mxu0 0.0
  %4505 = vmatpush1.msra.mxu0 0.0
  %4506 = vmatprep.subr.mxu0 0.0
  %4507 = vmatpush1.msra.mxu0 0.0
  %4508 = vmatprep.subr.mxu0 0.0
  %4509 = vmatpush1.msra.mxu0 0.0
  %4510 = vmatprep.subr.mxu0 0.0
  %4511 = vmatpush1.msra.mxu0 0.0
  %4512 = vmatprep.subr.mxu0 0.0
  %4513 = vmatpush1.msra.mxu0 0.0
  %4514 = vmatprep.subr.mxu0 0.0
  %4515 = vmatpush1.msra.mxu0 0.0
  %4516 = vmatprep.subr.mxu0 0.0
  %4517 = vmatpush1.msra.mxu0 0.0
  %4518 = vmatprep.subr.mxu0 0.0
  %4519 = vmatpush1.msra.mxu0 0.0
  %4520 = vmatprep.subr.mxu0 0.0
  %4521 = vmatpush1.msra.mxu0 0.0
  %4522 = vmatprep.subr.mxu0 0.0
  %4523 = vmatpush1.msra.mxu0 0.0
  %4524 = vmatprep.mubr.f32.mxu0 0.0
  %4525 = vmatmul.mubr.f32.gmra.mrb[0].mxu0 %v4458
  %v4526 = vpop.f32.mrb[0].mxu0
  %v4527 = vadd.f32 %v4456, %v4526
  %v4528 = vpop.f32.mrb[0].mxu0
  %4529 = vdwg.mxu0
  %v4531 = vsel %vm68, %v4432, 0
  %v4534 = vsel %vm68, %v4433, 0
  %v4537 = vsel %vm68, %v4434, 0
  %v4540 = vsel %vm68, %v4435, 0
  %v4543 = vsel %vm68, %v4436, 0
  %v4546 = vsel %vm68, %v4437, 0
  %v4549 = vsel %vm68, %v4438, 0
  %v4552 = vsel %vm68, %v4439, 0
  %4554 = vmatprep.subr.mxu0 0.0
  %4555 = vmatpush1.msra.mxu0 %v4443
  %4556 = vmatprep.subr.mxu0 0.0
  %4557 = vmatpush1.msra.mxu0 %v4444
  %4558 = vmatprep.subr.mxu0 0.0
  %4559 = vmatpush1.msra.mxu0 0.0
  %4560 = vmatprep.subr.mxu0 0.0
  %4561 = vmatpush1.msra.mxu0 0.0
  %4562 = vmatprep.subr.mxu0 0.0
  %4563 = vmatpush1.msra.mxu0 0.0
  %4564 = vmatprep.subr.mxu0 0.0
  %4565 = vmatpush1.msra.mxu0 0.0
  %4566 = vmatprep.subr.mxu0 0.0
  %4567 = vmatpush1.msra.mxu0 0.0
  %4568 = vmatprep.subr.mxu0 0.0
  %4569 = vmatpush1.msra.mxu0 0.0
  %4570 = vmatprep.subr.mxu0 0.0
  %4571 = vmatpush1.msra.mxu0 0.0
  %4572 = vmatprep.subr.mxu0 0.0
  %4573 = vmatpush1.msra.mxu0 0.0
  %4574 = vmatprep.subr.mxu0 0.0
  %4575 = vmatpush1.msra.mxu0 0.0
  %4576 = vmatprep.subr.mxu0 0.0
  %4577 = vmatpush1.msra.mxu0 0.0
  %4578 = vmatprep.subr.mxu0 0.0
  %4579 = vmatpush1.msra.mxu0 0.0
  %4580 = vmatprep.subr.mxu0 0.0
  %4581 = vmatpush1.msra.mxu0 0.0
  %4582 = vmatprep.subr.mxu0 0.0
  %4583 = vmatpush1.msra.mxu0 0.0
  %4584 = vmatprep.subr.mxu0 0.0
  %4585 = vmatpush1.msra.mxu0 0.0
  %4586 = vmatprep.subr.mxu0 0.0
  %4587 = vmatpush1.msra.mxu0 0.0
  %4588 = vmatprep.subr.mxu0 0.0
  %4589 = vmatpush1.msra.mxu0 0.0
  %4590 = vmatprep.subr.mxu0 0.0
  %4591 = vmatpush1.msra.mxu0 0.0
  %4592 = vmatprep.subr.mxu0 0.0
  %4593 = vmatpush1.msra.mxu0 0.0
  %4594 = vmatprep.subr.mxu0 0.0
  %4595 = vmatpush1.msra.mxu0 0.0
  %4596 = vmatprep.subr.mxu0 0.0
  %4597 = vmatpush1.msra.mxu0 0.0
  %4598 = vmatprep.subr.mxu0 0.0
  %4599 = vmatpush1.msra.mxu0 0.0
  %4600 = vmatprep.subr.mxu0 0.0
  %4601 = vmatpush1.msra.mxu0 0.0
  %4602 = vmatprep.subr.mxu0 0.0
  %4603 = vmatpush1.msra.mxu0 0.0
  %4604 = vmatprep.subr.mxu0 0.0
  %4605 = vmatpush1.msra.mxu0 0.0
  %4606 = vmatprep.subr.mxu0 0.0
  %4607 = vmatpush1.msra.mxu0 0.0
  %4608 = vmatprep.subr.mxu0 0.0
  %4609 = vmatpush1.msra.mxu0 0.0
  %4610 = vmatprep.subr.mxu0 0.0
  %4611 = vmatpush1.msra.mxu0 0.0
  %4612 = vmatprep.subr.mxu0 0.0
  %4613 = vmatpush1.msra.mxu0 0.0
  %4614 = vmatprep.subr.mxu0 0.0
  %4615 = vmatpush1.msra.mxu0 0.0
  %4616 = vmatprep.subr.mxu0 0.0
  %4617 = vmatpush1.msra.mxu0 0.0
  %4618 = vmatprep.mubr.f32.mxu0 0.0
  %4619 = vmatmul.mubr.f32.gmra.mrb[0].mxu0 %v4531
  %v4620 = vpop.f32.mrb[0].mxu0
  %v4621 = vadd.f32 0.0, %v4620
  %v4622 = vpop.f32.mrb[0].mxu0
  %4623 = vmatprep.mubr.f32.mxu0 0.0
  %4624 = vmatmul.mubr.f32.gmra.mrb[0].mxu0 %v4534
  %v4625 = vpop.f32.mrb[0].mxu0
  %v4626 = vadd.f32 0.0, %v4625
  %v4627 = vpop.f32.mrb[0].mxu0
  %4628 = vmatprep.mubr.f32.mxu0 0.0
  %4629 = vmatmul.mubr.f32.gmra.mrb[0].mxu0 %v4537
  %v4630 = vpop.f32.mrb[0].mxu0
  %v4631 = vadd.f32 0.0, %v4630
  %v4632 = vpop.f32.mrb[0].mxu0
  %4633 = vmatprep.mubr.f32.mxu0 0.0
  %4634 = vmatmul.mubr.f32.gmra.mrb[0].mxu0 %v4540
  %v4635 = vpop.f32.mrb[0].mxu0
  %v4636 = vadd.f32 0.0, %v4635
  %v4637 = vpop.f32.mrb[0].mxu0
  %4638 = vmatprep.mubr.f32.mxu0 0.0
  %4639 = vmatmul.mubr.f32.gmra.mrb[0].mxu0 %v4543
  %v4640 = vpop.f32.mrb[0].mxu0
  %v4641 = vadd.f32 0.0, %v4640
  %v4642 = vpop.f32.mrb[0].mxu0
  %4643 = vmatprep.mubr.f32.mxu0 0.0
  %4644 = vmatmul.mubr.f32.gmra.mrb[0].mxu0 %v4546
  %v4645 = vpop.f32.mrb[0].mxu0
  %v4646 = vadd.f32 0.0, %v4645
  %v4647 = vpop.f32.mrb[0].mxu0
  %4648 = vmatprep.mubr.f32.mxu0 0.0
  %4649 = vmatmul.mubr.f32.gmra.mrb[0].mxu0 %v4549
  %v4650 = vpop.f32.mrb[0].mxu0
  %v4651 = vadd.f32 0.0, %v4650
  %v4652 = vpop.f32.mrb[0].mxu0
  %4653 = vmatprep.mubr.f32.mxu0 0.0
  %4654 = vmatmul.mubr.f32.gmra.mrb[0].mxu0 %v4552
  %v4655 = vpop.f32.mrb[0].mxu0
  %v4656 = vadd.f32 0.0, %v4655
  %v4657 = vpop.f32.mrb[0].mxu0
  %4658 = vdwg.mxu0
  %v4660 = vcombine.high %v4527, %v4527
  %v4662 = vunpack.c.l.s4 1966171168
  %v4663 = vunpack.c.0.s8 %v4662
  %v4664 = vlaneseq
  %v4665 = vshrl.u32 %v4664, 7
  %v4666 = vsub.s32 %v4663, %v4665
  %v4667 = vrot.slane %v4527, %v4666
  %v4669 = vunpack.c.l.s4 1966171168
  %v4670 = vunpack.c.0.s8 %v4669
  %v4671 = vlaneseq
  %v4672 = vshrl.u32 %v4671, 7
  %v4673 = vsub.s32 %v4670, %v4672
  %v4674 = vrot.slane %v4660, %v4673
  %v4675 = vcombine.high %v4667, %v4667
  %v4676 = vcombine.high %v4674, %v4674
  %v4678 = vunpack.c.l.s4 1966171168
  %v4679 = vunpack.c.0.s8 %v4678
  %v4680 = vlaneseq
  %v4681 = vshrl.u32 %v4680, 7
  %v4682 = vsub.s32 %v4679, %v4681
  %v4683 = vrot.slane %v4667, %v4682
  %v4685 = vunpack.c.l.s4 1966171168
  %v4686 = vunpack.c.0.s8 %v4685
  %v4687 = vlaneseq
  %v4688 = vshrl.u32 %v4687, 7
  %v4689 = vsub.s32 %v4686, %v4688
  %v4690 = vrot.slane %v4674, %v4689
  %v4692 = vunpack.c.l.s4 1966171168
  %v4693 = vunpack.c.0.s8 %v4692
  %v4694 = vlaneseq
  %v4695 = vshrl.u32 %v4694, 7
  %v4696 = vsub.s32 %v4693, %v4695
  %v4697 = vrot.slane %v4675, %v4696
  %v4699 = vunpack.c.l.s4 1966171168
  %v4700 = vunpack.c.0.s8 %v4699
  %v4701 = vlaneseq
  %v4702 = vshrl.u32 %v4701, 7
  %v4703 = vsub.s32 %v4700, %v4702
  %v4704 = vrot.slane %v4676, %v4703
  %v4705 = vcombine.high %v4683, %v4683
  %v4706 = vcombine.high %v4690, %v4690
  %v4707 = vcombine.high %v4697, %v4697
  %v4708 = vcombine.high %v4704, %v4704
  %v4709 = vlaneseq
  %v4710 = vshrl.u32 %v4709, 7
  %v4711 = vsub.s32 0, %v4710
  %v4712 = vrot.slane %v4683, %v4711
  %v4713 = vlaneseq
  %v4714 = vshrl.u32 %v4713, 7
  %v4715 = vsub.s32 0, %v4714
  %v4716 = vrot.slane %v4697, %v4715
  %v4717 = vlaneseq
  %v4718 = vshrl.u32 %v4717, 7
  %v4719 = vsub.s32 0, %v4718
  %v4720 = vrot.slane %v4705, %v4719
  %v4721 = vlaneseq
  %v4722 = vshrl.u32 %v4721, 7
  %v4723 = vsub.s32 0, %v4722
  %v4724 = vrot.slane %v4707, %v4723
  %v4725 = vlaneseq
  %v4726 = vshrl.u32 %v4725, 7
  %v4727 = vsub.s32 0, %v4726
  %v4728 = vrot.slane %v4690, %v4727
  %v4729 = vlaneseq
  %v4730 = vshrl.u32 %v4729, 7
  %v4731 = vsub.s32 0, %v4730
  %v4732 = vrot.slane %v4704, %v4731
  %v4733 = vlaneseq
  %v4734 = vshrl.u32 %v4733, 7
  %v4735 = vsub.s32 0, %v4734
  %v4736 = vrot.slane %v4706, %v4735
  %v4737 = vlaneseq
  %v4738 = vshrl.u32 %v4737, 7
  %v4739 = vsub.s32 0, %v4738
  %v4740 = vrot.slane %v4708, %v4739
  %4749 = vrot.lane.b32.xlu0 %v4527, 32
  %v4750 = vpop.permute.xlu0 %4749
  %v4752 = vadd.f32 %v4712, %v4750
  %v4753 = vadd.f32 %v4716, %v4750
  %v4754 = vadd.f32 %v4720, %v4750
  %v4755 = vadd.f32 %v4724, %v4750
  %v4756 = vadd.f32 %v4728, %v4750
  %v4757 = vadd.f32 %v4732, %v4750
  %v4758 = vadd.f32 %v4736, %v4750
  %v4759 = vadd.f32 %v4740, %v4750
  %4768 = vrot.lane.b32.xlu0 %v4621, 32
  %v4769 = vpop.permute.xlu0 %4768
  %4770 = vrot.lane.b32.xlu0 %v4626, 32
  %v4771 = vpop.permute.xlu0 %4770
  %4772 = vrot.lane.b32.xlu0 %v4631, 32
  %v4773 = vpop.permute.xlu0 %4772
  %4774 = vrot.lane.b32.xlu0 %v4636, 32
  %v4775 = vpop.permute.xlu0 %4774
  %4776 = vrot.lane.b32.xlu0 %v4641, 32
  %v4777 = vpop.permute.xlu0 %4776
  %4778 = vrot.lane.b32.xlu0 %v4646, 32
  %v4779 = vpop.permute.xlu0 %4778
  %4780 = vrot.lane.b32.xlu0 %v4651, 32
  %v4781 = vpop.permute.xlu0 %4780
  %4782 = vrot.lane.b32.xlu0 %v4656, 32
  %v4783 = vpop.permute.xlu0 %4782
  %v4792 = vadd.f32 %v4752, %v4769
  %v4793 = vadd.f32 %v4753, %v4771
  %v4794 = vadd.f32 %v4754, %v4773
  %v4795 = vadd.f32 %v4755, %v4775
  %v4796 = vadd.f32 %v4756, %v4777
  %v4797 = vadd.f32 %v4757, %v4779
  %v4798 = vadd.f32 %v4758, %v4781
  %v4799 = vadd.f32 %v4759, %v4783
  %v4800 = vmul.f32 %v4792, 0.2
  %v4801 = vmul.f32 %v4793, 0.2
  %v4802 = vmul.f32 %v4794, 0.2
  %v4803 = vmul.f32 %v4795, 0.2
  %v4804 = vmul.f32 %v4796, 0.2
  %v4805 = vmul.f32 %v4797, 0.2
  %v4806 = vmul.f32 %v4798, 0.2
  %v4807 = vmul.f32 %v4799, 0.2
  %v4808 = vmax.f32 %v4792, %v4800
  %v4809 = vmax.f32 %v4793, %v4801
  %v4810 = vmax.f32 %v4794, %v4802
  %v4811 = vmax.f32 %v4795, %v4803
  %v4812 = vmax.f32 %v4796, %v4804
  %v4813 = vmax.f32 %v4797, %v4805
  %v4814 = vmax.f32 %v4798, %v4806
  %v4815 = vmax.f32 %v4799, %v4807
  %4824 = vrot.lane.b32.xlu0 %v4808, 96
  %v4825 = vpop.permute.xlu0 %4824
  %4826 = vrot.lane.b32.xlu0 %v4809, 96
  %v4827 = vpop.permute.xlu0 %4826
  %4828 = vrot.lane.b32.xlu0 %v4810, 96
  %v4829 = vpop.permute.xlu0 %4828
  %4830 = vrot.lane.b32.xlu0 %v4811, 96
  %v4831 = vpop.permute.xlu0 %4830
  %4832 = vrot.lane.b32.xlu0 %v4812, 96
  %v4833 = vpop.permute.xlu0 %4832
  %4834 = vrot.lane.b32.xlu0 %v4813, 96
  %v4835 = vpop.permute.xlu0 %4834
  %4836 = vrot.lane.b32.xlu0 %v4814, 96
  %v4837 = vpop.permute.xlu0 %4836
  %4838 = vrot.lane.b32.xlu0 %v4815, 96
  %v4839 = vpop.permute.xlu0 %4838
  %v4840 = vsel %vm1009, %v4825, 0
  %v4842 = vsel %vm1009, %v4827, 0
  %v4844 = vsel %vm1009, %v4829, 0
  %v4846 = vsel %vm1009, %v4831, 0
  %v4848 = vsel %vm1009, %v4833, 0
  %v4850 = vsel %vm1009, %v4835, 0
  %v4852 = vsel %vm1009, %v4837, 0
  %v4854 = vsel %vm1009, %v4839, 0
  %4856 = vmatprep.subr.mxu0 0.0
  %4857 = vmatpush1.msra.mxu0 %v4445
  %4858 = vmatprep.subr.mxu0 0.0
  %4859 = vmatpush1.msra.mxu0 %v4446
  %4860 = vmatprep.subr.mxu0 0.0
  %4861 = vmatpush1.msra.mxu0 %v4447
  %4862 = vmatprep.subr.mxu0 0.0
  %4863 = vmatpush1.msra.mxu0 %v4448
  %4864 = vmatprep.subr.mxu0 0.0
  %4865 = vmatpush1.msra.mxu0 0.0
  %4866 = vmatprep.subr.mxu0 0.0
  %4867 = vmatpush1.msra.mxu0 0.0
  %4868 = vmatprep.subr.mxu0 0.0
  %4869 = vmatpush1.msra.mxu0 0.0
  %4870 = vmatprep.subr.mxu0 0.0
  %4871 = vmatpush1.msra.mxu0 0.0
  %4872 = vmatprep.subr.mxu0 0.0
  %4873 = vmatpush1.msra.mxu0 0.0
  %4874 = vmatprep.subr.mxu0 0.0
  %4875 = vmatpush1.msra.mxu0 0.0
  %4876 = vmatprep.subr.mxu0 0.0
  %4877 = vmatpush1.msra.mxu0 0.0
  %4878 = vmatprep.subr.mxu0 0.0
  %4879 = vmatpush1.msra.mxu0 0.0
  %4880 = vmatprep.subr.mxu0 0.0
  %4881 = vmatpush1.msra.mxu0 0.0
  %4882 = vmatprep.subr.mxu0 0.0
  %4883 = vmatpush1.msra.mxu0 0.0
  %4884 = vmatprep.subr.mxu0 0.0
  %4885 = vmatpush1.msra.mxu0 0.0
  %4886 = vmatprep.subr.mxu0 0.0
  %4887 = vmatpush1.msra.mxu0 0.0
  %4888 = vmatprep.subr.mxu0 0.0
  %4889 = vmatpush1.msra.mxu0 0.0
  %4890 = vmatprep.subr.mxu0 0.0
  %4891 = vmatpush1.msra.mxu0 0.0
  %4892 = vmatprep.subr.mxu0 0.0
  %4893 = vmatpush1.msra.mxu0 0.0
  %4894 = vmatprep.subr.mxu0 0.0
  %4895 = vmatpush1.msra.mxu0 0.0
  %4896 = vmatprep.subr.mxu0 0.0
  %4897 = vmatpush1.msra.mxu0 0.0
  %4898 = vmatprep.subr.mxu0 0.0
  %4899 = vmatpush1.msra.mxu0 0.0
  %4900 = vmatprep.subr.mxu0 0.0
  %4901 = vmatpush1.msra.mxu0 0.0
  %4902 = vmatprep.subr.mxu0 0.0
  %4903 = vmatpush1.msra.mxu0 0.0
  %4904 = vmatprep.subr.mxu0 0.0
  %4905 = vmatpush1.msra.mxu0 0.0
  %4906 = vmatprep.subr.mxu0 0.0
  %4907 = vmatpush1.msra.mxu0 0.0
  %4908 = vmatprep.subr.mxu0 0.0
  %4909 = vmatpush1.msra.mxu0 0.0
  %4910 = vmatprep.subr.mxu0 0.0
  %4911 = vmatpush1.msra.mxu0 0.0
  %4912 = vmatprep.subr.mxu0 0.0
  %4913 = vmatpush1.msra.mxu0 0.0
  %4914 = vmatprep.subr.mxu0 0.0
  %4915 = vmatpush1.msra.mxu0 0.0
  %4916 = vmatprep.subr.mxu0 0.0
  %4917 = vmatpush1.msra.mxu0 0.0
  %4918 = vmatprep.subr.mxu0 0.0
  %4919 = vmatpush1.msra.mxu0 0.0
  %4920 = vmatprep.mubr.f32.mxu0 0.0
  %4921 = vmatmul.mubr.f32.gmra.mrb[0].mxu0 %v4840
  %v4922 = vpop.f32.mrb[0].mxu0
  %v4923 = vadd.f32 0.0, %v4922
  %v4924 = vpop.f32.mrb[0].mxu0
  %4925 = vmatprep.mubr.f32.mxu0 0.0
  %4926 = vmatmul.mubr.f32.gmra.mrb[0].mxu0 %v4842
  %v4927 = vpop.f32.mrb[0].mxu0
  %v4928 = vadd.f32 0.0, %v4927
  %v4929 = vpop.f32.mrb[0].mxu0
  %4930 = vmatprep.mubr.f32.mxu0 0.0
  %4931 = vmatmul.mubr.f32.gmra.mrb[0].mxu0 %v4844
  %v4932 = vpop.f32.mrb[0].mxu0
  %v4933 = vadd.f32 0.0, %v4932
  %v4934 = vpop.f32.mrb[0].mxu0
  %4935 = vmatprep.mubr.f32.mxu0 0.0
  %4936 = vmatmul.mubr.f32.gmra.mrb[0].mxu0 %v4846
  %v4937 = vpop.f32.mrb[0].mxu0
  %v4938 = vadd.f32 0.0, %v4937
  %v4939 = vpop.f32.mrb[0].mxu0
  %4940 = vmatprep.mubr.f32.mxu0 0.0
  %4941 = vmatmul.mubr.f32.gmra.mrb[0].mxu0 %v4848
  %v4942 = vpop.f32.mrb[0].mxu0
  %v4943 = vadd.f32 0.0, %v4942
  %v4944 = vpop.f32.mrb[0].mxu0
  %4945 = vmatprep.mubr.f32.mxu0 0.0
  %4946 = vmatmul.mubr.f32.gmra.mrb[0].mxu0 %v4850
  %v4947 = vpop.f32.mrb[0].mxu0
  %v4948 = vadd.f32 0.0, %v4947
  %v4949 = vpop.f32.mrb[0].mxu0
  %4950 = vmatprep.mubr.f32.mxu0 0.0
  %4951 = vmatmul.mubr.f32.gmra.mrb[0].mxu0 %v4852
  %v4952 = vpop.f32.mrb[0].mxu0
  %v4953 = vadd.f32 0.0, %v4952
  %v4954 = vpop.f32.mrb[0].mxu0
  %4955 = vmatprep.mubr.f32.mxu0 0.0
  %4956 = vmatmul.mubr.f32.gmra.mrb[0].mxu0 %v4854
  %v4957 = vpop.f32.mrb[0].mxu0
  %v4958 = vadd.f32 0.0, %v4957
  %v4959 = vpop.f32.mrb[0].mxu0
  %4960 = vdwg.mxu0
  %v4961 = vlaneseq
  %v4962 = vshrl.u32 %v4961, 7
  %v4963 = vsub.s32 0, %v4962
  %v4964 = vrot.slane %v4431, %v4963
  %4966 = vbcast.lane.b32.xlu0 %v4964, 256
  %v4967 = vpop.permute.xlu0 %4966
  %v4968 = vlaneseq
  %v4969 = vshrl.u32 %v4968, 7
  %v4970 = vsub.s32 1, %v4969
  %v4971 = vrot.slane %v4431, %v4970
  %4973 = vbcast.lane.b32.xlu0 %v4971, 256
  %v4974 = vpop.permute.xlu0 %4973
  %v4975 = vlaneseq
  %v4976 = vshrl.u32 %v4975, 7
  %v4977 = vsub.s32 2, %v4976
  %v4978 = vrot.slane %v4431, %v4977
  %4980 = vbcast.lane.b32.xlu0 %v4978, 256
  %v4981 = vpop.permute.xlu0 %4980
  %v4982 = vlaneseq
  %v4983 = vshrl.u32 %v4982, 7
  %v4984 = vsub.s32 3, %v4983
  %v4985 = vrot.slane %v4431, %v4984
  %4987 = vbcast.lane.b32.xlu0 %v4985, 256
  %v4988 = vpop.permute.xlu0 %4987
  %v4989 = vlaneseq
  %v4990 = vshrl.u32 %v4989, 7
  %v4991 = vsub.s32 4, %v4990
  %v4992 = vrot.slane %v4431, %v4991
  %4994 = vbcast.lane.b32.xlu0 %v4992, 256
  %v4995 = vpop.permute.xlu0 %4994
  %v4996 = vlaneseq
  %v4997 = vshrl.u32 %v4996, 7
  %v4998 = vsub.s32 5, %v4997
  %v4999 = vrot.slane %v4431, %v4998
  %5001 = vbcast.lane.b32.xlu0 %v4999, 256
  %v5002 = vpop.permute.xlu0 %5001
  %v5003 = vlaneseq
  %v5004 = vshrl.u32 %v5003, 7
  %v5005 = vsub.s32 6, %v5004
  %v5006 = vrot.slane %v4431, %v5005
  %5008 = vbcast.lane.b32.xlu0 %v5006, 256
  %v5009 = vpop.permute.xlu0 %5008
  %v5010 = vlaneseq
  %v5011 = vshrl.u32 %v5010, 7
  %v5012 = vsub.s32 7, %v5011
  %v5013 = vrot.slane %v4431, %v5012
  %5015 = vbcast.lane.b32.xlu0 %v5013, 256
  %v5016 = vpop.permute.xlu0 %5015
  %v5017 = vadd.f32 %v4923, %v4967
  %v5018 = vadd.f32 %v4928, %v4974
  %v5019 = vadd.f32 %v4933, %v4981
  %v5020 = vadd.f32 %v4938, %v4988
  %v5021 = vadd.f32 %v4943, %v4995
  %v5022 = vadd.f32 %v4948, %v5002
  %v5023 = vadd.f32 %v4953, %v5009
  %v5024 = vadd.f32 %v4958, %v5016
  %v5025 = vsel %vm1009, %v5017, -inf
  %v5026 = vrot.slane %v5025, 4
  %v5027 = vmax.f32 %v5025, %v5026
  %v5028 = vrot.slane %v5027, 2
  %v5029 = vmax.f32 %v5027, %v5028
  %v5030 = vrot.slane %v5029, 1
  %v5031 = vmax.f32 %v5029, %v5030
  %v5032 = vsel %vm1009, %v5018, -inf
  %v5033 = vrot.slane %v5032, 4
  %v5034 = vmax.f32 %v5032, %v5033
  %v5035 = vrot.slane %v5034, 2
  %v5036 = vmax.f32 %v5034, %v5035
  %v5037 = vrot.slane %v5036, 1
  %v5038 = vmax.f32 %v5036, %v5037
  %v5039 = vsel %vm1009, %v5019, -inf
  %v5040 = vrot.slane %v5039, 4
  %v5041 = vmax.f32 %v5039, %v5040
  %v5042 = vrot.slane %v5041, 2
  %v5043 = vmax.f32 %v5041, %v5042
  %v5044 = vrot.slane %v5043, 1
  %v5045 = vmax.f32 %v5043, %v5044
  %v5046 = vsel %vm1009, %v5020, -inf
  %v5047 = vrot.slane %v5046, 4
  %v5048 = vmax.f32 %v5046, %v5047
  %v5049 = vrot.slane %v5048, 2
  %v5050 = vmax.f32 %v5048, %v5049
  %v5051 = vrot.slane %v5050, 1
  %v5052 = vmax.f32 %v5050, %v5051
  %v5053 = vsel %vm1009, %v5021, -inf
  %v5054 = vrot.slane %v5053, 4
  %v5055 = vmax.f32 %v5053, %v5054
  %v5056 = vrot.slane %v5055, 2
  %v5057 = vmax.f32 %v5055, %v5056
  %v5058 = vrot.slane %v5057, 1
  %v5059 = vmax.f32 %v5057, %v5058
  %v5060 = vsel %vm1009, %v5022, -inf
  %v5061 = vrot.slane %v5060, 4
  %v5062 = vmax.f32 %v5060, %v5061
  %v5063 = vrot.slane %v5062, 2
  %v5064 = vmax.f32 %v5062, %v5063
  %v5065 = vrot.slane %v5064, 1
  %v5066 = vmax.f32 %v5064, %v5065
  %v5067 = vsel %vm1009, %v5023, -inf
  %v5068 = vrot.slane %v5067, 4
  %v5069 = vmax.f32 %v5067, %v5068
  %v5070 = vrot.slane %v5069, 2
  %v5071 = vmax.f32 %v5069, %v5070
  %v5072 = vrot.slane %v5071, 1
  %v5073 = vmax.f32 %v5071, %v5072
  %v5074 = vsel %vm1009, %v5024, -inf
  %v5075 = vrot.slane %v5074, 4
  %v5076 = vmax.f32 %v5074, %v5075
  %v5077 = vrot.slane %v5076, 2
  %v5078 = vmax.f32 %v5076, %v5077
  %v5079 = vrot.slane %v5078, 1
  %v5080 = vmax.f32 %v5078, %v5079
  %v5081 = vsub.f32 %v5017, %v5031
  %v5082 = vsub.f32 %v5018, %v5038
  %v5083 = vsub.f32 %v5019, %v5045
  %v5084 = vsub.f32 %v5020, %v5052
  %v5085 = vsub.f32 %v5021, %v5059
  %v5086 = vsub.f32 %v5022, %v5066
  %v5087 = vsub.f32 %v5023, %v5073
  %v5088 = vsub.f32 %v5024, %v5080
  %v5089 = vmul.f32 %v5081, 1.442695
  %v5090 = vpow.pop %v5089
  %v5091 = vmul.f32 %v5082, 1.442695
  %v5092 = vpow.pop %v5091
  %v5093 = vmul.f32 %v5083, 1.442695
  %v5094 = vpow.pop %v5093
  %v5095 = vmul.f32 %v5084, 1.442695
  %v5096 = vpow.pop %v5095
  %v5097 = vmul.f32 %v5085, 1.442695
  %v5098 = vpow.pop %v5097
  %v5099 = vmul.f32 %v5086, 1.442695
  %v5100 = vpow.pop %v5099
  %v5101 = vmul.f32 %v5087, 1.442695
  %v5102 = vpow.pop %v5101
  %v5103 = vmul.f32 %v5088, 1.442695
  %v5104 = vpow.pop %v5103
  %v5105 = vsel %vm1009, %v5090, 0.0
  %v5106 = vrot.slane %v5105, 4
  %v5107 = vadd.f32 %v5105, %v5106
  %v5108 = vrot.slane %v5107, 2
  %v5109 = vadd.f32 %v5107, %v5108
  %v5110 = vrot.slane %v5109, 1
  %v5111 = vadd.f32 %v5109, %v5110
  %v5112 = vsel %vm1009, %v5092, 0.0
  %v5113 = vrot.slane %v5112, 4
  %v5114 = vadd.f32 %v5112, %v5113
  %v5115 = vrot.slane %v5114, 2
  %v5116 = vadd.f32 %v5114, %v5115
  %v5117 = vrot.slane %v5116, 1
  %v5118 = vadd.f32 %v5116, %v5117
  %v5119 = vsel %vm1009, %v5094, 0.0
  %v5120 = vrot.slane %v5119, 4
  %v5121 = vadd.f32 %v5119, %v5120
  %v5122 = vrot.slane %v5121, 2
  %v5123 = vadd.f32 %v5121, %v5122
  %v5124 = vrot.slane %v5123, 1
  %v5125 = vadd.f32 %v5123, %v5124
  %v5126 = vsel %vm1009, %v5096, 0.0
  %v5127 = vrot.slane %v5126, 4
  %v5128 = vadd.f32 %v5126, %v5127
  %v5129 = vrot.slane %v5128, 2
  %v5130 = vadd.f32 %v5128, %v5129
  %v5131 = vrot.slane %v5130, 1
  %v5132 = vadd.f32 %v5130, %v5131
  %v5133 = vsel %vm1009, %v5098, 0.0
  %v5134 = vrot.slane %v5133, 4
  %v5135 = vadd.f32 %v5133, %v5134
  %v5136 = vrot.slane %v5135, 2
  %v5137 = vadd.f32 %v5135, %v5136
  %v5138 = vrot.slane %v5137, 1
  %v5139 = vadd.f32 %v5137, %v5138
  %v5140 = vsel %vm1009, %v5100, 0.0
  %v5141 = vrot.slane %v5140, 4
  %v5142 = vadd.f32 %v5140, %v5141
  %v5143 = vrot.slane %v5142, 2
  %v5144 = vadd.f32 %v5142, %v5143
  %v5145 = vrot.slane %v5144, 1
  %v5146 = vadd.f32 %v5144, %v5145
  %v5147 = vsel %vm1009, %v5102, 0.0
  %v5148 = vrot.slane %v5147, 4
  %v5149 = vadd.f32 %v5147, %v5148
  %v5150 = vrot.slane %v5149, 2
  %v5151 = vadd.f32 %v5149, %v5150
  %v5152 = vrot.slane %v5151, 1
  %v5153 = vadd.f32 %v5151, %v5152
  %v5154 = vsel %vm1009, %v5104, 0.0
  %v5155 = vrot.slane %v5154, 4
  %v5156 = vadd.f32 %v5154, %v5155
  %v5157 = vrot.slane %v5156, 2
  %v5158 = vadd.f32 %v5156, %v5157
  %v5159 = vrot.slane %v5158, 1
  %v5160 = vadd.f32 %v5158, %v5159
  %v5161 = vrcp.pop %v5111
  %v5162 = vrcp.pop %v5118
  %v5163 = vrcp.pop %v5125
  %v5164 = vrcp.pop %v5132
  %v5165 = vrcp.pop %v5139
  %v5166 = vrcp.pop %v5146
  %v5167 = vrcp.pop %v5153
  %v5168 = vrcp.pop %v5160
  %v5169 = vmul.f32 %v5090, %v5161
  %v5170 = vmul.f32 %v5092, %v5162
  %v5171 = vmul.f32 %v5094, %v5163
  %v5172 = vmul.f32 %v5096, %v5164
  %v5173 = vmul.f32 %v5098, %v5165
  %v5174 = vmul.f32 %v5100, %v5166
  %v5175 = vmul.f32 %v5102, %v5167
  %v5176 = vmul.f32 %v5104, %v5168
  %v5177 = vmul.f32 %v5169, %v4527
  %v5178 = vmul.f32 %v5170, %v4527
  %v5179 = vmul.f32 %v5171, %v4527
  %v5180 = vmul.f32 %v5172, %v4527
  %v5181 = vmul.f32 %v5173, %v4527
  %v5182 = vmul.f32 %v5174, %v4527
  %v5183 = vmul.f32 %v5175, %v4527
  %v5184 = vmul.f32 %v5176, %v4527
  %v5185 = vsel %vm1009, %v5177, 0.0
  %v5186 = vrot.slane %v5185, 4
  %v5187 = vadd.f32 %v5185, %v5186
  %v5188 = vrot.slane %v5187, 2
  %v5189 = vadd.f32 %v5187, %v5188
  %v5190 = vrot.slane %v5189, 1
  %v5191 = vadd.f32 %v5189, %v5190
  %v5192 = vsel %vm1009, %v5178, 0.0
  %v5193 = vrot.slane %v5192, 4
  %v5194 = vadd.f32 %v5192, %v5193
  %v5195 = vrot.slane %v5194, 2
  %v5196 = vadd.f32 %v5194, %v5195
  %v5197 = vrot.slane %v5196, 1
  %v5198 = vadd.f32 %v5196, %v5197
  %v5199 = vsel %vm1009, %v5179, 0.0
  %v5200 = vrot.slane %v5199, 4
  %v5201 = vadd.f32 %v5199, %v5200
  %v5202 = vrot.slane %v5201, 2
  %v5203 = vadd.f32 %v5201, %v5202
  %v5204 = vrot.slane %v5203, 1
  %v5205 = vadd.f32 %v5203, %v5204
  %v5206 = vsel %vm1009, %v5180, 0.0
  %v5207 = vrot.slane %v5206, 4
  %v5208 = vadd.f32 %v5206, %v5207
  %v5209 = vrot.slane %v5208, 2
  %v5210 = vadd.f32 %v5208, %v5209
  %v5211 = vrot.slane %v5210, 1
  %v5212 = vadd.f32 %v5210, %v5211
  %v5213 = vsel %vm1009, %v5181, 0.0
  %v5214 = vrot.slane %v5213, 4
  %v5215 = vadd.f32 %v5213, %v5214
  %v5216 = vrot.slane %v5215, 2
  %v5217 = vadd.f32 %v5215, %v5216
  %v5218 = vrot.slane %v5217, 1
  %v5219 = vadd.f32 %v5217, %v5218
  %v5220 = vsel %vm1009, %v5182, 0.0
  %v5221 = vrot.slane %v5220, 4
  %v5222 = vadd.f32 %v5220, %v5221
  %v5223 = vrot.slane %v5222, 2
  %v5224 = vadd.f32 %v5222, %v5223
  %v5225 = vrot.slane %v5224, 1
  %v5226 = vadd.f32 %v5224, %v5225
  %v5227 = vsel %vm1009, %v5183, 0.0
  %v5228 = vrot.slane %v5227, 4
  %v5229 = vadd.f32 %v5227, %v5228
  %v5230 = vrot.slane %v5229, 2
  %v5231 = vadd.f32 %v5229, %v5230
  %v5232 = vrot.slane %v5231, 1
  %v5233 = vadd.f32 %v5231, %v5232
  %v5234 = vsel %vm1009, %v5184, 0.0
  %v5235 = vrot.slane %v5234, 4
  %v5236 = vadd.f32 %v5234, %v5235
  %v5237 = vrot.slane %v5236, 2
  %v5238 = vadd.f32 %v5236, %v5237
  %v5239 = vrot.slane %v5238, 1
  %v5240 = vadd.f32 %v5238, %v5239
  %v5241 = vlaneseq
  %v5242 = vshrl.u32 %v5241, 7
  %v5243 = vsub.s32 1, %v5242
  %v5244 = vrot.slane %v4442, %v5243
  %v5245 = vadd.f32 %v5191, %v5244
  %v5246 = vadd.f32 %v5198, %v5244
  %v5247 = vadd.f32 %v5205, %v5244
  %v5248 = vadd.f32 %v5212, %v5244
  %v5249 = vadd.f32 %v5219, %v5244
  %v5250 = vadd.f32 %v5226, %v5244
  %v5251 = vadd.f32 %v5233, %v5244
  %v5252 = vadd.f32 %v5240, %v5244
  %v5261 = vrot.slane %v5246, 7
  %v5262 = vsel %vm2152, %v5261, %v5245
  %v5263 = vrot.slane %v5247, 6
  %v5264 = vsel %vm2155, %v5263, %v5262
  %v5265 = vrot.slane %v5248, 5
  %v5266 = vsel %vm2158, %v5265, %v5264
  %v5267 = vrot.slane %v5249, 4
  %v5268 = vsel %vm2161, %v5267, %v5266
  %v5269 = vrot.slane %v5250, 3
  %v5270 = vsel %vm2164, %v5269, %v5268
  %v5271 = vrot.slane %v5251, 2
  %v5272 = vsel %vm2167, %v5271, %v5270
  %v5273 = vrot.slane %v5252, 1
  %v5274 = vsel %vm2170, %v5273, %v5272
  %5276 = vrot.lane.b32.xlu0 %v5244, 96
  %v5277 = vpop.permute.xlu0 %5276
  %v5279 = vsel %vm1009, %v5274, 0
  %5281 = vmatprep.subr.mxu0 0.0
  %5282 = vmatpush1.msra.mxu0 %v4449
  %5283 = vmatprep.subr.mxu0 0.0
  %5284 = vmatpush1.msra.mxu0 %v4450
  %5285 = vmatprep.subr.mxu0 0.0
  %5286 = vmatpush1.msra.mxu0 %v4451
  %5287 = vmatprep.subr.mxu0 0.0
  %5288 = vmatpush1.msra.mxu0 %v4452
  %5289 = vmatprep.subr.mxu0 0.0
  %5290 = vmatpush1.msra.mxu0 0.0
  %5291 = vmatprep.subr.mxu0 0.0
  %5292 = vmatpush1.msra.mxu0 0.0
  %5293 = vmatprep.subr.mxu0 0.0
  %5294 = vmatpush1.msra.mxu0 0.0
  %5295 = vmatprep.subr.mxu0 0.0
  %5296 = vmatpush1.msra.mxu0 0.0
  %5297 = vmatprep.subr.mxu0 0.0
  %5298 = vmatpush1.msra.mxu0 0.0
  %5299 = vmatprep.subr.mxu0 0.0
  %5300 = vmatpush1.msra.mxu0 0.0
  %5301 = vmatprep.subr.mxu0 0.0
  %5302 = vmatpush1.msra.mxu0 0.0
  %5303 = vmatprep.subr.mxu0 0.0
  %5304 = vmatpush1.msra.mxu0 0.0
  %5305 = vmatprep.subr.mxu0 0.0
  %5306 = vmatpush1.msra.mxu0 0.0
  %5307 = vmatprep.subr.mxu0 0.0
  %5308 = vmatpush1.msra.mxu0 0.0
  %5309 = vmatprep.subr.mxu0 0.0
  %5310 = vmatpush1.msra.mxu0 0.0
  %5311 = vmatprep.subr.mxu0 0.0
  %5312 = vmatpush1.msra.mxu0 0.0
  %5313 = vmatprep.subr.mxu0 0.0
  %5314 = vmatpush1.msra.mxu0 0.0
  %5315 = vmatprep.subr.mxu0 0.0
  %5316 = vmatpush1.msra.mxu0 0.0
  %5317 = vmatprep.subr.mxu0 0.0
  %5318 = vmatpush1.msra.mxu0 0.0
  %5319 = vmatprep.subr.mxu0 0.0
  %5320 = vmatpush1.msra.mxu0 0.0
  %5321 = vmatprep.subr.mxu0 0.0
  %5322 = vmatpush1.msra.mxu0 0.0
  %5323 = vmatprep.subr.mxu0 0.0
  %5324 = vmatpush1.msra.mxu0 0.0
  %5325 = vmatprep.subr.mxu0 0.0
  %5326 = vmatpush1.msra.mxu0 0.0
  %5327 = vmatprep.subr.mxu0 0.0
  %5328 = vmatpush1.msra.mxu0 0.0
  %5329 = vmatprep.subr.mxu0 0.0
  %5330 = vmatpush1.msra.mxu0 0.0
  %5331 = vmatprep.subr.mxu0 0.0
  %5332 = vmatpush1.msra.mxu0 0.0
  %5333 = vmatprep.subr.mxu0 0.0
  %5334 = vmatpush1.msra.mxu0 0.0
  %5335 = vmatprep.subr.mxu0 0.0
  %5336 = vmatpush1.msra.mxu0 0.0
  %5337 = vmatprep.subr.mxu0 0.0
  %5338 = vmatpush1.msra.mxu0 0.0
  %5339 = vmatprep.subr.mxu0 0.0
  %5340 = vmatpush1.msra.mxu0 0.0
  %5341 = vmatprep.subr.mxu0 0.0
  %5342 = vmatpush1.msra.mxu0 0.0
  %5343 = vmatprep.subr.mxu0 0.0
  %5344 = vmatpush1.msra.mxu0 0.0
  %5345 = vmatprep.mubr.f32.mxu0 0.0
  %5346 = vmatmul.mubr.f32.gmra.mrb[0].mxu0 %v5279
  %v5347 = vpop.f32.mrb[0].mxu0
  %v5348 = vadd.f32 %v5277, %v5347
  %v5349 = vpop.f32.mrb[0].mxu0
  %5350 = vdwg.mxu0
  %vm5351 = vcmp.gt.f32.partialorder %v5348, 0.0
  %v5352 = vmin.f32 %v5348, 0.0
  %v5353 = vmul.f32 %v5352, 1.442695
  %v5354 = vpow.pop %v5353
  %v5355 = vsub.f32 %v5354, 1.0
  %v5356 = vsel %vm5351, %v5348, %v5355
  %v5358 = vrot.slane %v5356, 1
  %v5359 = vrot.slane %v5356, 2
  %v5360 = vrot.slane %v5356, 3
  %v5361 = vrot.slane %v5356, 4
  %v5362 = vrot.slane %v5356, 5
  %v5363 = vrot.slane %v5356, 6
  %v5364 = vrot.slane %v5356, 7
  %v5373 = vadd.f32 %v5245, %v5356
  %v5374 = vadd.f32 %v5246, %v5358
  %v5375 = vadd.f32 %v5247, %v5359
  %v5376 = vadd.f32 %v5248, %v5360
  %v5377 = vadd.f32 %v5249, %v5361
  %v5378 = vadd.f32 %v5250, %v5362
  %v5379 = vadd.f32 %v5251, %v5363
  %v5380 = vadd.f32 %v5252, %v5364
  %v5389 = vrot.slane %v5374, 7
  %v5390 = vsel %vm2152, %v5389, %v5373
  %v5391 = vrot.slane %v5375, 6
  %v5392 = vsel %vm2155, %v5391, %v5390
  %v5393 = vrot.slane %v5376, 5
  %v5394 = vsel %vm2158, %v5393, %v5392
  %v5395 = vrot.slane %v5377, 4
  %v5396 = vsel %vm2161, %v5395, %v5394
  %v5397 = vrot.slane %v5378, 3
  %v5398 = vsel %vm2164, %v5397, %v5396
  %v5399 = vrot.slane %v5379, 2
  %v5400 = vsel %vm2167, %v5399, %v5398
  %v5401 = vrot.slane %v5380, 1
  %v5402 = vsel %vm2170, %v5401, %v5400
  %5404 = vst.msk [vmem:[#allocation3] sm:$0xff] %vm1009, %v5402
  %v5405 = vld [vmem:[#allocation3] sm:$0xff]
  %v5406 = vld [vmem:[%s1 + $0x148] sm:$0xff]
  %v5407 = vld [vmem:[%s1 + $0x150] sm:$0xff]
  %v5408 = vld [vmem:[%s1 + $0x158] sm:$0xff]
  %v5409 = vld [vmem:[%s1 + $0x160] sm:$0xff]
  %v5410 = vld [vmem:[%s1 + $0x168] sm:$0x3]
  %v5411 = vld [vmem:[%s1 + $0x170] sm:$0xff]
  %v5412 = vld [vmem:[%s1 + $0x178] sm:$0xff]
  %v5413 = vld [vmem:[%s1 + $0x180] sm:$0xff]
  %v5414 = vld [vmem:[%s1 + $0x188] sm:$0xff]
  %v5415 = vld [vmem:[%s1 + $0x190] sm:$0xff]
  %v5416 = vld [vmem:[%s1 + $0x198] sm:$0xff]
  %v5417 = vld [vmem:[%s1 + $0x1a0] sm:$0xff]
  %v5418 = vld [vmem:[%s1 + $0x1a8] sm:$0xff]
  %v5419 = vld [vmem:[%s1 + $0x1b0] sm:$0xff]
  %v5420 = vld [vmem:[%s1 + $0x1b8] sm:$0xff]
  %v5421 = vlaneseq
  %v5422 = vshrl.u32 %v5421, 7
  %v5423 = vsub.s32 0, %v5422
  %v5424 = vrot.slane %v5410, %v5423
  %v5426 = vsel %vm1009, %v5405, 0
  %5428 = vmatprep.subr.mxu0 0.0
  %5429 = vmatpush1.msra.mxu0 %v5406
  %5430 = vmatprep.subr.mxu0 0.0
  %5431 = vmatpush1.msra.mxu0 %v5407
  %5432 = vmatprep.subr.mxu0 0.0
  %5433 = vmatpush1.msra.mxu0 %v5408
  %5434 = vmatprep.subr.mxu0 0.0
  %5435 = vmatpush1.msra.mxu0 %v5409
  %5436 = vmatprep.subr.mxu0 0.0
  %5437 = vmatpush1.msra.mxu0 0.0
  %5438 = vmatprep.subr.mxu0 0.0
  %5439 = vmatpush1.msra.mxu0 0.0
  %5440 = vmatprep.subr.mxu0 0.0
  %5441 = vmatpush1.msra.mxu0 0.0
  %5442 = vmatprep.subr.mxu0 0.0
  %5443 = vmatpush1.msra.mxu0 0.0
  %5444 = vmatprep.subr.mxu0 0.0
  %5445 = vmatpush1.msra.mxu0 0.0
  %5446 = vmatprep.subr.mxu0 0.0
  %5447 = vmatpush1.msra.mxu0 0.0
  %5448 = vmatprep.subr.mxu0 0.0
  %5449 = vmatpush1.msra.mxu0 0.0
  %5450 = vmatprep.subr.mxu0 0.0
  %5451 = vmatpush1.msra.mxu0 0.0
  %5452 = vmatprep.subr.mxu0 0.0
  %5453 = vmatpush1.msra.mxu0 0.0
  %5454 = vmatprep.subr.mxu0 0.0
  %5455 = vmatpush1.msra.mxu0 0.0
  %5456 = vmatprep.subr.mxu0 0.0
  %5457 = vmatpush1.msra.mxu0 0.0
  %5458 = vmatprep.subr.mxu0 0.0
  %5459 = vmatpush1.msra.mxu0 0.0
  %5460 = vmatprep.subr.mxu0 0.0
  %5461 = vmatpush1.msra.mxu0 0.0
  %5462 = vmatprep.subr.mxu0 0.0
  %5463 = vmatpush1.msra.mxu0 0.0
  %5464 = vmatprep.subr.mxu0 0.0
  %5465 = vmatpush1.msra.mxu0 0.0
  %5466 = vmatprep.subr.mxu0 0.0
  %5467 = vmatpush1.msra.mxu0 0.0
  %5468 = vmatprep.subr.mxu0 0.0
  %5469 = vmatpush1.msra.mxu0 0.0
  %5470 = vmatprep.subr.mxu0 0.0
  %5471 = vmatpush1.msra.mxu0 0.0
  %5472 = vmatprep.subr.mxu0 0.0
  %5473 = vmatpush1.msra.mxu0 0.0
  %5474 = vmatprep.subr.mxu0 0.0
  %5475 = vmatpush1.msra.mxu0 0.0
  %5476 = vmatprep.subr.mxu0 0.0
  %5477 = vmatpush1.msra.mxu0 0.0
  %5478 = vmatprep.subr.mxu0 0.0
  %5479 = vmatpush1.msra.mxu0 0.0
  %5480 = vmatprep.subr.mxu0 0.0
  %5481 = vmatpush1.msra.mxu0 0.0
  %5482 = vmatprep.subr.mxu0 0.0
  %5483 = vmatpush1.msra.mxu0 0.0
  %5484 = vmatprep.subr.mxu0 0.0
  %5485 = vmatpush1.msra.mxu0 0.0
  %5486 = vmatprep.subr.mxu0 0.0
  %5487 = vmatpush1.msra.mxu0 0.0
  %5488 = vmatprep.subr.mxu0 0.0
  %5489 = vmatpush1.msra.mxu0 0.0
  %5490 = vmatprep.subr.mxu0 0.0
  %5491 = vmatpush1.msra.mxu0 0.0
  %5492 = vmatprep.mubr.f32.mxu0 0.0
  %5493 = vmatmul.mubr.f32.gmra.mrb[0].mxu0 %v5426
  %v5494 = vpop.f32.mrb[0].mxu0
  %v5495 = vadd.f32 %v5424, %v5494
  %v5496 = vpop.f32.mrb[0].mxu0
  %5497 = vdwg.mxu0
  %5498 = vmatprep.subr.mxu0 0.0
  %5499 = vmatpush1.msra.mxu0 %v5411
  %5500 = vmatprep.subr.mxu0 0.0
  %5501 = vmatpush1.msra.mxu0 %v5412
  %5502 = vmatprep.subr.mxu0 0.0
  %5503 = vmatpush1.msra.mxu0 0.0
  %5504 = vmatprep.subr.mxu0 0.0
  %5505 = vmatpush1.msra.mxu0 0.0
  %5506 = vmatprep.subr.mxu0 0.0
  %5507 = vmatpush1.msra.mxu0 0.0
  %5508 = vmatprep.subr.mxu0 0.0
  %5509 = vmatpush1.msra.mxu0 0.0
  %5510 = vmatprep.subr.mxu0 0.0
  %5511 = vmatpush1.msra.mxu0 0.0
  %5512 = vmatprep.subr.mxu0 0.0
  %5513 = vmatpush1.msra.mxu0 0.0
  %5514 = vmatprep.subr.mxu0 0.0
  %5515 = vmatpush1.msra.mxu0 0.0
  %5516 = vmatprep.subr.mxu0 0.0
  %5517 = vmatpush1.msra.mxu0 0.0
  %5518 = vmatprep.subr.mxu0 0.0
  %5519 = vmatpush1.msra.mxu0 0.0
  %5520 = vmatprep.subr.mxu0 0.0
  %5521 = vmatpush1.msra.mxu0 0.0
  %5522 = vmatprep.subr.mxu0 0.0
  %5523 = vmatpush1.msra.mxu0 0.0
  %5524 = vmatprep.subr.mxu0 0.0
  %5525 = vmatpush1.msra.mxu0 0.0
  %5526 = vmatprep.subr.mxu0 0.0
  %5527 = vmatpush1.msra.mxu0 0.0
  %5528 = vmatprep.subr.mxu0 0.0
  %5529 = vmatpush1.msra.mxu0 0.0
  %5530 = vmatprep.subr.mxu0 0.0
  %5531 = vmatpush1.msra.mxu0 0.0
  %5532 = vmatprep.subr.mxu0 0.0
  %5533 = vmatpush1.msra.mxu0 0.0
  %5534 = vmatprep.subr.mxu0 0.0
  %5535 = vmatpush1.msra.mxu0 0.0
  %5536 = vmatprep.subr.mxu0 0.0
  %5537 = vmatpush1.msra.mxu0 0.0
  %5538 = vmatprep.subr.mxu0 0.0
  %5539 = vmatpush1.msra.mxu0 0.0
  %5540 = vmatprep.subr.mxu0 0.0
  %5541 = vmatpush1.msra.mxu0 0.0
  %5542 = vmatprep.subr.mxu0 0.0
  %5543 = vmatpush1.msra.mxu0 0.0
  %5544 = vmatprep.subr.mxu0 0.0
  %5545 = vmatpush1.msra.mxu0 0.0
  %5546 = vmatprep.subr.mxu0 0.0
  %5547 = vmatpush1.msra.mxu0 0.0
  %5548 = vmatprep.subr.mxu0 0.0
  %5549 = vmatpush1.msra.mxu0 0.0
  %5550 = vmatprep.subr.mxu0 0.0
  %5551 = vmatpush1.msra.mxu0 0.0
  %5552 = vmatprep.subr.mxu0 0.0
  %5553 = vmatpush1.msra.mxu0 0.0
  %5554 = vmatprep.subr.mxu0 0.0
  %5555 = vmatpush1.msra.mxu0 0.0
  %5556 = vmatprep.subr.mxu0 0.0
  %5557 = vmatpush1.msra.mxu0 0.0
  %5558 = vmatprep.subr.mxu0 0.0
  %5559 = vmatpush1.msra.mxu0 0.0
  %5560 = vmatprep.subr.mxu0 0.0
  %5561 = vmatpush1.msra.mxu0 0.0
  %5562 = vmatprep.mubr.f32.mxu0 0.0
  %5563 = vmatmul.mubr.f32.gmra.mrb[0].mxu0 %v4531
  %v5564 = vpop.f32.mrb[0].mxu0
  %v5565 = vadd.f32 0.0, %v5564
  %v5566 = vpop.f32.mrb[0].mxu0
  %5567 = vmatprep.mubr.f32.mxu0 0.0
  %5568 = vmatmul.mubr.f32.gmra.mrb[0].mxu0 %v4534
  %v5569 = vpop.f32.mrb[0].mxu0
  %v5570 = vadd.f32 0.0, %v5569
  %v5571 = vpop.f32.mrb[0].mxu0
  %5572 = vmatprep.mubr.f32.mxu0 0.0
  %5573 = vmatmul.mubr.f32.gmra.mrb[0].mxu0 %v4537
  %v5574 = vpop.f32.mrb[0].mxu0
  %v5575 = vadd.f32 0.0, %v5574
  %v5576 = vpop.f32.mrb[0].mxu0
  %5577 = vmatprep.mubr.f32.mxu0 0.0
  %5578 = vmatmul.mubr.f32.gmra.mrb[0].mxu0 %v4540
  %v5579 = vpop.f32.mrb[0].mxu0
  %v5580 = vadd.f32 0.0, %v5579
  %v5581 = vpop.f32.mrb[0].mxu0
  %5582 = vmatprep.mubr.f32.mxu0 0.0
  %5583 = vmatmul.mubr.f32.gmra.mrb[0].mxu0 %v4543
  %v5584 = vpop.f32.mrb[0].mxu0
  %v5585 = vadd.f32 0.0, %v5584
  %v5586 = vpop.f32.mrb[0].mxu0
  %5587 = vmatprep.mubr.f32.mxu0 0.0
  %5588 = vmatmul.mubr.f32.gmra.mrb[0].mxu0 %v4546
  %v5589 = vpop.f32.mrb[0].mxu0
  %v5590 = vadd.f32 0.0, %v5589
  %v5591 = vpop.f32.mrb[0].mxu0
  %5592 = vmatprep.mubr.f32.mxu0 0.0
  %5593 = vmatmul.mubr.f32.gmra.mrb[0].mxu0 %v4549
  %v5594 = vpop.f32.mrb[0].mxu0
  %v5595 = vadd.f32 0.0, %v5594
  %v5596 = vpop.f32.mrb[0].mxu0
  %5597 = vmatprep.mubr.f32.mxu0 0.0
  %5598 = vmatmul.mubr.f32.gmra.mrb[0].mxu0 %v4552
  %v5599 = vpop.f32.mrb[0].mxu0
  %v5600 = vadd.f32 0.0, %v5599
  %v5601 = vpop.f32.mrb[0].mxu0
  %5602 = vdwg.mxu0
  %v5604 = vcombine.high %v5495, %v5495
  %v5606 = vunpack.c.l.s4 1966171168
  %v5607 = vunpack.c.0.s8 %v5606
  %v5608 = vlaneseq
  %v5609 = vshrl.u32 %v5608, 7
  %v5610 = vsub.s32 %v5607, %v5609
  %v5611 = vrot.slane %v5495, %v5610
  %v5613 = vunpack.c.l.s4 1966171168
  %v5614 = vunpack.c.0.s8 %v5613
  %v5615 = vlaneseq
  %v5616 = vshrl.u32 %v5615, 7
  %v5617 = vsub.s32 %v5614, %v5616
  %v5618 = vrot.slane %v5604, %v5617
  %v5619 = vcombine.high %v5611, %v5611
  %v5620 = vcombine.high %v5618, %v5618
  %v5622 = vunpack.c.l.s4 1966171168
  %v5623 = vunpack.c.0.s8 %v5622
  %v5624 = vlaneseq
  %v5625 = vshrl.u32 %v5624, 7
  %v5626 = vsub.s32 %v5623, %v5625
  %v5627 = vrot.slane %v5611, %v5626
  %v5629 = vunpack.c.l.s4 1966171168
  %v5630 = vunpack.c.0.s8 %v5629
  %v5631 = vlaneseq
  %v5632 = vshrl.u32 %v5631, 7
  %v5633 = vsub.s32 %v5630, %v5632
  %v5634 = vrot.slane %v5618, %v5633
  %v5636 = vunpack.c.l.s4 1966171168
  %v5637 = vunpack.c.0.s8 %v5636
  %v5638 = vlaneseq
  %v5639 = vshrl.u32 %v5638, 7
  %v5640 = vsub.s32 %v5637, %v5639
  %v5641 = vrot.slane %v5619, %v5640
  %v5643 = vunpack.c.l.s4 1966171168
  %v5644 = vunpack.c.0.s8 %v5643
  %v5645 = vlaneseq
  %v5646 = vshrl.u32 %v5645, 7
  %v5647 = vsub.s32 %v5644, %v5646
  %v5648 = vrot.slane %v5620, %v5647
  %v5649 = vcombine.high %v5627, %v5627
  %v5650 = vcombine.high %v5634, %v5634
  %v5651 = vcombine.high %v5641, %v5641
  %v5652 = vcombine.high %v5648, %v5648
  %v5653 = vlaneseq
  %v5654 = vshrl.u32 %v5653, 7
  %v5655 = vsub.s32 0, %v5654
  %v5656 = vrot.slane %v5627, %v5655
  %v5657 = vlaneseq
  %v5658 = vshrl.u32 %v5657, 7
  %v5659 = vsub.s32 0, %v5658
  %v5660 = vrot.slane %v5641, %v5659
  %v5661 = vlaneseq
  %v5662 = vshrl.u32 %v5661, 7
  %v5663 = vsub.s32 0, %v5662
  %v5664 = vrot.slane %v5649, %v5663
  %v5665 = vlaneseq
  %v5666 = vshrl.u32 %v5665, 7
  %v5667 = vsub.s32 0, %v5666
  %v5668 = vrot.slane %v5651, %v5667
  %v5669 = vlaneseq
  %v5670 = vshrl.u32 %v5669, 7
  %v5671 = vsub.s32 0, %v5670
  %v5672 = vrot.slane %v5634, %v5671
  %v5673 = vlaneseq
  %v5674 = vshrl.u32 %v5673, 7
  %v5675 = vsub.s32 0, %v5674
  %v5676 = vrot.slane %v5648, %v5675
  %v5677 = vlaneseq
  %v5678 = vshrl.u32 %v5677, 7
  %v5679 = vsub.s32 0, %v5678
  %v5680 = vrot.slane %v5650, %v5679
  %v5681 = vlaneseq
  %v5682 = vshrl.u32 %v5681, 7
  %v5683 = vsub.s32 0, %v5682
  %v5684 = vrot.slane %v5652, %v5683
  %5693 = vrot.lane.b32.xlu0 %v5495, 32
  %v5694 = vpop.permute.xlu0 %5693
  %v5696 = vadd.f32 %v5656, %v5694
  %v5697 = vadd.f32 %v5660, %v5694
  %v5698 = vadd.f32 %v5664, %v5694
  %v5699 = vadd.f32 %v5668, %v5694
  %v5700 = vadd.f32 %v5672, %v5694
  %v5701 = vadd.f32 %v5676, %v5694
  %v5702 = vadd.f32 %v5680, %v5694
  %v5703 = vadd.f32 %v5684, %v5694
  %5712 = vrot.lane.b32.xlu0 %v5565, 32
  %v5713 = vpop.permute.xlu0 %5712
  %5714 = vrot.lane.b32.xlu0 %v5570, 32
  %v5715 = vpop.permute.xlu0 %5714
  %5716 = vrot.lane.b32.xlu0 %v5575, 32
  %v5717 = vpop.permute.xlu0 %5716
  %5718 = vrot.lane.b32.xlu0 %v5580, 32
  %v5719 = vpop.permute.xlu0 %5718
  %5720 = vrot.lane.b32.xlu0 %v5585, 32
  %v5721 = vpop.permute.xlu0 %5720
  %5722 = vrot.lane.b32.xlu0 %v5590, 32
  %v5723 = vpop.permute.xlu0 %5722
  %5724 = vrot.lane.b32.xlu0 %v5595, 32
  %v5725 = vpop.permute.xlu0 %5724
  %5726 = vrot.lane.b32.xlu0 %v5600, 32
  %v5727 = vpop.permute.xlu0 %5726
  %v5736 = vadd.f32 %v5696, %v5713
  %v5737 = vadd.f32 %v5697, %v5715
  %v5738 = vadd.f32 %v5698, %v5717
  %v5739 = vadd.f32 %v5699, %v5719
  %v5740 = vadd.f32 %v5700, %v5721
  %v5741 = vadd.f32 %v5701, %v5723
  %v5742 = vadd.f32 %v5702, %v5725
  %v5743 = vadd.f32 %v5703, %v5727
  %v5744 = vmul.f32 %v5736, 0.2
  %v5745 = vmul.f32 %v5737, 0.2
  %v5746 = vmul.f32 %v5738, 0.2
  %v5747 = vmul.f32 %v5739, 0.2
  %v5748 = vmul.f32 %v5740, 0.2
  %v5749 = vmul.f32 %v5741, 0.2
  %v5750 = vmul.f32 %v5742, 0.2
  %v5751 = vmul.f32 %v5743, 0.2
  %v5752 = vmax.f32 %v5736, %v5744
  %v5753 = vmax.f32 %v5737, %v5745
  %v5754 = vmax.f32 %v5738, %v5746
  %v5755 = vmax.f32 %v5739, %v5747
  %v5756 = vmax.f32 %v5740, %v5748
  %v5757 = vmax.f32 %v5741, %v5749
  %v5758 = vmax.f32 %v5742, %v5750
  %v5759 = vmax.f32 %v5743, %v5751
  %5768 = vrot.lane.b32.xlu0 %v5752, 96
  %v5769 = vpop.permute.xlu0 %5768
  %5770 = vrot.lane.b32.xlu0 %v5753, 96
  %v5771 = vpop.permute.xlu0 %5770
  %5772 = vrot.lane.b32.xlu0 %v5754, 96
  %v5773 = vpop.permute.xlu0 %5772
  %5774 = vrot.lane.b32.xlu0 %v5755, 96
  %v5775 = vpop.permute.xlu0 %5774
  %5776 = vrot.lane.b32.xlu0 %v5756, 96
  %v5777 = vpop.permute.xlu0 %5776
  %5778 = vrot.lane.b32.xlu0 %v5757, 96
  %v5779 = vpop.permute.xlu0 %5778
  %5780 = vrot.lane.b32.xlu0 %v5758, 96
  %v5781 = vpop.permute.xlu0 %5780
  %5782 = vrot.lane.b32.xlu0 %v5759, 96
  %v5783 = vpop.permute.xlu0 %5782
  %v5784 = vsel %vm1009, %v5769, 0
  %v5786 = vsel %vm1009, %v5771, 0
  %v5788 = vsel %vm1009, %v5773, 0
  %v5790 = vsel %vm1009, %v5775, 0
  %v5792 = vsel %vm1009, %v5777, 0
  %v5794 = vsel %vm1009, %v5779, 0
  %v5796 = vsel %vm1009, %v5781, 0
  %v5798 = vsel %vm1009, %v5783, 0
  %5800 = vmatprep.subr.mxu0 0.0
  %5801 = vmatpush1.msra.mxu0 %v5413
  %5802 = vmatprep.subr.mxu0 0.0
  %5803 = vmatpush1.msra.mxu0 %v5414
  %5804 = vmatprep.subr.mxu0 0.0
  %5805 = vmatpush1.msra.mxu0 %v5415
  %5806 = vmatprep.subr.mxu0 0.0
  %5807 = vmatpush1.msra.mxu0 %v5416
  %5808 = vmatprep.subr.mxu0 0.0
  %5809 = vmatpush1.msra.mxu0 0.0
  %5810 = vmatprep.subr.mxu0 0.0
  %5811 = vmatpush1.msra.mxu0 0.0
  %5812 = vmatprep.subr.mxu0 0.0
  %5813 = vmatpush1.msra.mxu0 0.0
  %5814 = vmatprep.subr.mxu0 0.0
  %5815 = vmatpush1.msra.mxu0 0.0
  %5816 = vmatprep.subr.mxu0 0.0
  %5817 = vmatpush1.msra.mxu0 0.0
  %5818 = vmatprep.subr.mxu0 0.0
  %5819 = vmatpush1.msra.mxu0 0.0
  %5820 = vmatprep.subr.mxu0 0.0
  %5821 = vmatpush1.msra.mxu0 0.0
  %5822 = vmatprep.subr.mxu0 0.0
  %5823 = vmatpush1.msra.mxu0 0.0
  %5824 = vmatprep.subr.mxu0 0.0
  %5825 = vmatpush1.msra.mxu0 0.0
  %5826 = vmatprep.subr.mxu0 0.0
  %5827 = vmatpush1.msra.mxu0 0.0
  %5828 = vmatprep.subr.mxu0 0.0
  %5829 = vmatpush1.msra.mxu0 0.0
  %5830 = vmatprep.subr.mxu0 0.0
  %5831 = vmatpush1.msra.mxu0 0.0
  %5832 = vmatprep.subr.mxu0 0.0
  %5833 = vmatpush1.msra.mxu0 0.0
  %5834 = vmatprep.subr.mxu0 0.0
  %5835 = vmatpush1.msra.mxu0 0.0
  %5836 = vmatprep.subr.mxu0 0.0
  %5837 = vmatpush1.msra.mxu0 0.0
  %5838 = vmatprep.subr.mxu0 0.0
  %5839 = vmatpush1.msra.mxu0 0.0
  %5840 = vmatprep.subr.mxu0 0.0
  %5841 = vmatpush1.msra.mxu0 0.0
  %5842 = vmatprep.subr.mxu0 0.0
  %5843 = vmatpush1.msra.mxu0 0.0
  %5844 = vmatprep.subr.mxu0 0.0
  %5845 = vmatpush1.msra.mxu0 0.0
  %5846 = vmatprep.subr.mxu0 0.0
  %5847 = vmatpush1.msra.mxu0 0.0
  %5848 = vmatprep.subr.mxu0 0.0
  %5849 = vmatpush1.msra.mxu0 0.0
  %5850 = vmatprep.subr.mxu0 0.0
  %5851 = vmatpush1.msra.mxu0 0.0
  %5852 = vmatprep.subr.mxu0 0.0
  %5853 = vmatpush1.msra.mxu0 0.0
  %5854 = vmatprep.subr.mxu0 0.0
  %5855 = vmatpush1.msra.mxu0 0.0
  %5856 = vmatprep.subr.mxu0 0.0
  %5857 = vmatpush1.msra.mxu0 0.0
  %5858 = vmatprep.subr.mxu0 0.0
  %5859 = vmatpush1.msra.mxu0 0.0
  %5860 = vmatprep.subr.mxu0 0.0
  %5861 = vmatpush1.msra.mxu0 0.0
  %5862 = vmatprep.subr.mxu0 0.0
  %5863 = vmatpush1.msra.mxu0 0.0
  %5864 = vmatprep.mubr.f32.mxu0 0.0
  %5865 = vmatmul.mubr.f32.gmra.mrb[0].mxu0 %v5784
  %v5866 = vpop.f32.mrb[0].mxu0
  %v5867 = vadd.f32 0.0, %v5866
  %v5868 = vpop.f32.mrb[0].mxu0
  %5869 = vmatprep.mubr.f32.mxu0 0.0
  %5870 = vmatmul.mubr.f32.gmra.mrb[0].mxu0 %v5786
  %v5871 = vpop.f32.mrb[0].mxu0
  %v5872 = vadd.f32 0.0, %v5871
  %v5873 = vpop.f32.mrb[0].mxu0
  %5874 = vmatprep.mubr.f32.mxu0 0.0
  %5875 = vmatmul.mubr.f32.gmra.mrb[0].mxu0 %v5788
  %v5876 = vpop.f32.mrb[0].mxu0
  %v5877 = vadd.f32 0.0, %v5876
  %v5878 = vpop.f32.mrb[0].mxu0
  %5879 = vmatprep.mubr.f32.mxu0 0.0
  %5880 = vmatmul.mubr.f32.gmra.mrb[0].mxu0 %v5790
  %v5881 = vpop.f32.mrb[0].mxu0
  %v5882 = vadd.f32 0.0, %v5881
  %v5883 = vpop.f32.mrb[0].mxu0
  %5884 = vmatprep.mubr.f32.mxu0 0.0
  %5885 = vmatmul.mubr.f32.gmra.mrb[0].mxu0 %v5792
  %v5886 = vpop.f32.mrb[0].mxu0
  %v5887 = vadd.f32 0.0, %v5886
  %v5888 = vpop.f32.mrb[0].mxu0
  %5889 = vmatprep.mubr.f32.mxu0 0.0
  %5890 = vmatmul.mubr.f32.gmra.mrb[0].mxu0 %v5794
  %v5891 = vpop.f32.mrb[0].mxu0
  %v5892 = vadd.f32 0.0, %v5891
  %v5893 = vpop.f32.mrb[0].mxu0
  %5894 = vmatprep.mubr.f32.mxu0 0.0
  %5895 = vmatmul.mubr.f32.gmra.mrb[0].mxu0 %v5796
  %v5896 = vpop.f32.mrb[0].mxu0
  %v5897 = vadd.f32 0.0, %v5896
  %v5898 = vpop.f32.mrb[0].mxu0
  %5899 = vmatprep.mubr.f32.mxu0 0.0
  %5900 = vmatmul.mubr.f32.gmra.mrb[0].mxu0 %v5798
  %v5901 = vpop.f32.mrb[0].mxu0
  %v5902 = vadd.f32 0.0, %v5901
  %v5903 = vpop.f32.mrb[0].mxu0
  %5904 = vdwg.mxu0
  %v5905 = vadd.f32 %v5867, %v4967
  %v5906 = vadd.f32 %v5872, %v4974
  %v5907 = vadd.f32 %v5877, %v4981
  %v5908 = vadd.f32 %v5882, %v4988
  %v5909 = vadd.f32 %v5887, %v4995
  %v5910 = vadd.f32 %v5892, %v5002
  %v5911 = vadd.f32 %v5897, %v5009
  %v5912 = vadd.f32 %v5902, %v5016
  %v5913 = vsel %vm1009, %v5905, -inf
  %v5914 = vrot.slane %v5913, 4
  %v5915 = vmax.f32 %v5913, %v5914
  %v5916 = vrot.slane %v5915, 2
  %v5917 = vmax.f32 %v5915, %v5916
  %v5918 = vrot.slane %v5917, 1
  %v5919 = vmax.f32 %v5917, %v5918
  %v5920 = vsel %vm1009, %v5906, -inf
  %v5921 = vrot.slane %v5920, 4
  %v5922 = vmax.f32 %v5920, %v5921
  %v5923 = vrot.slane %v5922, 2
  %v5924 = vmax.f32 %v5922, %v5923
  %v5925 = vrot.slane %v5924, 1
  %v5926 = vmax.f32 %v5924, %v5925
  %v5927 = vsel %vm1009, %v5907, -inf
  %v5928 = vrot.slane %v5927, 4
  %v5929 = vmax.f32 %v5927, %v5928
  %v5930 = vrot.slane %v5929, 2
  %v5931 = vmax.f32 %v5929, %v5930
  %v5932 = vrot.slane %v5931, 1
  %v5933 = vmax.f32 %v5931, %v5932
  %v5934 = vsel %vm1009, %v5908, -inf
  %v5935 = vrot.slane %v5934, 4
  %v5936 = vmax.f32 %v5934, %v5935
  %v5937 = vrot.slane %v5936, 2
  %v5938 = vmax.f32 %v5936, %v5937
  %v5939 = vrot.slane %v5938, 1
  %v5940 = vmax.f32 %v5938, %v5939
  %v5941 = vsel %vm1009, %v5909, -inf
  %v5942 = vrot.slane %v5941, 4
  %v5943 = vmax.f32 %v5941, %v5942
  %v5944 = vrot.slane %v5943, 2
  %v5945 = vmax.f32 %v5943, %v5944
  %v5946 = vrot.slane %v5945, 1
  %v5947 = vmax.f32 %v5945, %v5946
  %v5948 = vsel %vm1009, %v5910, -inf
  %v5949 = vrot.slane %v5948, 4
  %v5950 = vmax.f32 %v5948, %v5949
  %v5951 = vrot.slane %v5950, 2
  %v5952 = vmax.f32 %v5950, %v5951
  %v5953 = vrot.slane %v5952, 1
  %v5954 = vmax.f32 %v5952, %v5953
  %v5955 = vsel %vm1009, %v5911, -inf
  %v5956 = vrot.slane %v5955, 4
  %v5957 = vmax.f32 %v5955, %v5956
  %v5958 = vrot.slane %v5957, 2
  %v5959 = vmax.f32 %v5957, %v5958
  %v5960 = vrot.slane %v5959, 1
  %v5961 = vmax.f32 %v5959, %v5960
  %v5962 = vsel %vm1009, %v5912, -inf
  %v5963 = vrot.slane %v5962, 4
  %v5964 = vmax.f32 %v5962, %v5963
  %v5965 = vrot.slane %v5964, 2
  %v5966 = vmax.f32 %v5964, %v5965
  %v5967 = vrot.slane %v5966, 1
  %v5968 = vmax.f32 %v5966, %v5967
  %v5969 = vsub.f32 %v5905, %v5919
  %v5970 = vsub.f32 %v5906, %v5926
  %v5971 = vsub.f32 %v5907, %v5933
  %v5972 = vsub.f32 %v5908, %v5940
  %v5973 = vsub.f32 %v5909, %v5947
  %v5974 = vsub.f32 %v5910, %v5954
  %v5975 = vsub.f32 %v5911, %v5961
  %v5976 = vsub.f32 %v5912, %v5968
  %v5977 = vmul.f32 %v5969, 1.442695
  %v5978 = vpow.pop %v5977
  %v5979 = vmul.f32 %v5970, 1.442695
  %v5980 = vpow.pop %v5979
  %v5981 = vmul.f32 %v5971, 1.442695
  %v5982 = vpow.pop %v5981
  %v5983 = vmul.f32 %v5972, 1.442695
  %v5984 = vpow.pop %v5983
  %v5985 = vmul.f32 %v5973, 1.442695
  %v5986 = vpow.pop %v5985
  %v5987 = vmul.f32 %v5974, 1.442695
  %v5988 = vpow.pop %v5987
  %v5989 = vmul.f32 %v5975, 1.442695
  %v5990 = vpow.pop %v5989
  %v5991 = vmul.f32 %v5976, 1.442695
  %v5992 = vpow.pop %v5991
  %v5993 = vsel %vm1009, %v5978, 0.0
  %v5994 = vrot.slane %v5993, 4
  %v5995 = vadd.f32 %v5993, %v5994
  %v5996 = vrot.slane %v5995, 2
  %v5997 = vadd.f32 %v5995, %v5996
  %v5998 = vrot.slane %v5997, 1
  %v5999 = vadd.f32 %v5997, %v5998
  %v6000 = vsel %vm1009, %v5980, 0.0
  %v6001 = vrot.slane %v6000, 4
  %v6002 = vadd.f32 %v6000, %v6001
  %v6003 = vrot.slane %v6002, 2
  %v6004 = vadd.f32 %v6002, %v6003
  %v6005 = vrot.slane %v6004, 1
  %v6006 = vadd.f32 %v6004, %v6005
  %v6007 = vsel %vm1009, %v5982, 0.0
  %v6008 = vrot.slane %v6007, 4
  %v6009 = vadd.f32 %v6007, %v6008
  %v6010 = vrot.slane %v6009, 2
  %v6011 = vadd.f32 %v6009, %v6010
  %v6012 = vrot.slane %v6011, 1
  %v6013 = vadd.f32 %v6011, %v6012
  %v6014 = vsel %vm1009, %v5984, 0.0
  %v6015 = vrot.slane %v6014, 4
  %v6016 = vadd.f32 %v6014, %v6015
  %v6017 = vrot.slane %v6016, 2
  %v6018 = vadd.f32 %v6016, %v6017
  %v6019 = vrot.slane %v6018, 1
  %v6020 = vadd.f32 %v6018, %v6019
  %v6021 = vsel %vm1009, %v5986, 0.0
  %v6022 = vrot.slane %v6021, 4
  %v6023 = vadd.f32 %v6021, %v6022
  %v6024 = vrot.slane %v6023, 2
  %v6025 = vadd.f32 %v6023, %v6024
  %v6026 = vrot.slane %v6025, 1
  %v6027 = vadd.f32 %v6025, %v6026
  %v6028 = vsel %vm1009, %v5988, 0.0
  %v6029 = vrot.slane %v6028, 4
  %v6030 = vadd.f32 %v6028, %v6029
  %v6031 = vrot.slane %v6030, 2
  %v6032 = vadd.f32 %v6030, %v6031
  %v6033 = vrot.slane %v6032, 1
  %v6034 = vadd.f32 %v6032, %v6033
  %v6035 = vsel %vm1009, %v5990, 0.0
  %v6036 = vrot.slane %v6035, 4
  %v6037 = vadd.f32 %v6035, %v6036
  %v6038 = vrot.slane %v6037, 2
  %v6039 = vadd.f32 %v6037, %v6038
  %v6040 = vrot.slane %v6039, 1
  %v6041 = vadd.f32 %v6039, %v6040
  %v6042 = vsel %vm1009, %v5992, 0.0
  %v6043 = vrot.slane %v6042, 4
  %v6044 = vadd.f32 %v6042, %v6043
  %v6045 = vrot.slane %v6044, 2
  %v6046 = vadd.f32 %v6044, %v6045
  %v6047 = vrot.slane %v6046, 1
  %v6048 = vadd.f32 %v6046, %v6047
  %v6049 = vrcp.pop %v5999
  %v6050 = vrcp.pop %v6006
  %v6051 = vrcp.pop %v6013
  %v6052 = vrcp.pop %v6020
  %v6053 = vrcp.pop %v6027
  %v6054 = vrcp.pop %v6034
  %v6055 = vrcp.pop %v6041
  %v6056 = vrcp.pop %v6048
  %v6057 = vmul.f32 %v5978, %v6049
  %v6058 = vmul.f32 %v5980, %v6050
  %v6059 = vmul.f32 %v5982, %v6051
  %v6060 = vmul.f32 %v5984, %v6052
  %v6061 = vmul.f32 %v5986, %v6053
  %v6062 = vmul.f32 %v5988, %v6054
  %v6063 = vmul.f32 %v5990, %v6055
  %v6064 = vmul.f32 %v5992, %v6056
  %v6065 = vmul.f32 %v6057, %v5495
  %v6066 = vmul.f32 %v6058, %v5495
  %v6067 = vmul.f32 %v6059, %v5495
  %v6068 = vmul.f32 %v6060, %v5495
  %v6069 = vmul.f32 %v6061, %v5495
  %v6070 = vmul.f32 %v6062, %v5495
  %v6071 = vmul.f32 %v6063, %v5495
  %v6072 = vmul.f32 %v6064, %v5495
  %v6073 = vsel %vm1009, %v6065, 0.0
  %v6074 = vrot.slane %v6073, 4
  %v6075 = vadd.f32 %v6073, %v6074
  %v6076 = vrot.slane %v6075, 2
  %v6077 = vadd.f32 %v6075, %v6076
  %v6078 = vrot.slane %v6077, 1
  %v6079 = vadd.f32 %v6077, %v6078
  %v6080 = vsel %vm1009, %v6066, 0.0
  %v6081 = vrot.slane %v6080, 4
  %v6082 = vadd.f32 %v6080, %v6081
  %v6083 = vrot.slane %v6082, 2
  %v6084 = vadd.f32 %v6082, %v6083
  %v6085 = vrot.slane %v6084, 1
  %v6086 = vadd.f32 %v6084, %v6085
  %v6087 = vsel %vm1009, %v6067, 0.0
  %v6088 = vrot.slane %v6087, 4
  %v6089 = vadd.f32 %v6087, %v6088
  %v6090 = vrot.slane %v6089, 2
  %v6091 = vadd.f32 %v6089, %v6090
  %v6092 = vrot.slane %v6091, 1
  %v6093 = vadd.f32 %v6091, %v6092
  %v6094 = vsel %vm1009, %v6068, 0.0
  %v6095 = vrot.slane %v6094, 4
  %v6096 = vadd.f32 %v6094, %v6095
  %v6097 = vrot.slane %v6096, 2
  %v6098 = vadd.f32 %v6096, %v6097
  %v6099 = vrot.slane %v6098, 1
  %v6100 = vadd.f32 %v6098, %v6099
  %v6101 = vsel %vm1009, %v6069, 0.0
  %v6102 = vrot.slane %v6101, 4
  %v6103 = vadd.f32 %v6101, %v6102
  %v6104 = vrot.slane %v6103, 2
  %v6105 = vadd.f32 %v6103, %v6104
  %v6106 = vrot.slane %v6105, 1
  %v6107 = vadd.f32 %v6105, %v6106
  %v6108 = vsel %vm1009, %v6070, 0.0
  %v6109 = vrot.slane %v6108, 4
  %v6110 = vadd.f32 %v6108, %v6109
  %v6111 = vrot.slane %v6110, 2
  %v6112 = vadd.f32 %v6110, %v6111
  %v6113 = vrot.slane %v6112, 1
  %v6114 = vadd.f32 %v6112, %v6113
  %v6115 = vsel %vm1009, %v6071, 0.0
  %v6116 = vrot.slane %v6115, 4
  %v6117 = vadd.f32 %v6115, %v6116
  %v6118 = vrot.slane %v6117, 2
  %v6119 = vadd.f32 %v6117, %v6118
  %v6120 = vrot.slane %v6119, 1
  %v6121 = vadd.f32 %v6119, %v6120
  %v6122 = vsel %vm1009, %v6072, 0.0
  %v6123 = vrot.slane %v6122, 4
  %v6124 = vadd.f32 %v6122, %v6123
  %v6125 = vrot.slane %v6124, 2
  %v6126 = vadd.f32 %v6124, %v6125
  %v6127 = vrot.slane %v6126, 1
  %v6128 = vadd.f32 %v6126, %v6127
  %v6129 = vlaneseq
  %v6130 = vshrl.u32 %v6129, 7
  %v6131 = vsub.s32 1, %v6130
  %v6132 = vrot.slane %v5410, %v6131
  %v6133 = vadd.f32 %v6079, %v6132
  %v6134 = vadd.f32 %v6086, %v6132
  %v6135 = vadd.f32 %v6093, %v6132
  %v6136 = vadd.f32 %v6100, %v6132
  %v6137 = vadd.f32 %v6107, %v6132
  %v6138 = vadd.f32 %v6114, %v6132
  %v6139 = vadd.f32 %v6121, %v6132
  %v6140 = vadd.f32 %v6128, %v6132
  %v6149 = vrot.slane %v6134, 7
  %v6150 = vsel %vm2152, %v6149, %v6133
  %v6151 = vrot.slane %v6135, 6
  %v6152 = vsel %vm2155, %v6151, %v6150
  %v6153 = vrot.slane %v6136, 5
  %v6154 = vsel %vm2158, %v6153, %v6152
  %v6155 = vrot.slane %v6137, 4
  %v6156 = vsel %vm2161, %v6155, %v6154
  %v6157 = vrot.slane %v6138, 3
  %v6158 = vsel %vm2164, %v6157, %v6156
  %v6159 = vrot.slane %v6139, 2
  %v6160 = vsel %vm2167, %v6159, %v6158
  %v6161 = vrot.slane %v6140, 1
  %v6162 = vsel %vm2170, %v6161, %v6160
  %6164 = vrot.lane.b32.xlu0 %v6132, 96
  %v6165 = vpop.permute.xlu0 %6164
  %v6167 = vsel %vm1009, %v6162, 0
  %6169 = vmatprep.subr.mxu0 0.0
  %6170 = vmatpush1.msra.mxu0 %v5417
  %6171 = vmatprep.subr.mxu0 0.0
  %6172 = vmatpush1.msra.mxu0 %v5418
  %6173 = vmatprep.subr.mxu0 0.0
  %6174 = vmatpush1.msra.mxu0 %v5419
  %6175 = vmatprep.subr.mxu0 0.0
  %6176 = vmatpush1.msra.mxu0 %v5420
  %6177 = vmatprep.subr.mxu0 0.0
  %6178 = vmatpush1.msra.mxu0 0.0
  %6179 = vmatprep.subr.mxu0 0.0
  %6180 = vmatpush1.msra.mxu0 0.0
  %6181 = vmatprep.subr.mxu0 0.0
  %6182 = vmatpush1.msra.mxu0 0.0
  %6183 = vmatprep.subr.mxu0 0.0
  %6184 = vmatpush1.msra.mxu0 0.0
  %6185 = vmatprep.subr.mxu0 0.0
  %6186 = vmatpush1.msra.mxu0 0.0
  %6187 = vmatprep.subr.mxu0 0.0
  %6188 = vmatpush1.msra.mxu0 0.0
  %6189 = vmatprep.subr.mxu0 0.0
  %6190 = vmatpush1.msra.mxu0 0.0
  %6191 = vmatprep.subr.mxu0 0.0
  %6192 = vmatpush1.msra.mxu0 0.0
  %6193 = vmatprep.subr.mxu0 0.0
  %6194 = vmatpush1.msra.mxu0 0.0
  %6195 = vmatprep.subr.mxu0 0.0
  %6196 = vmatpush1.msra.mxu0 0.0
  %6197 = vmatprep.subr.mxu0 0.0
  %6198 = vmatpush1.msra.mxu0 0.0
  %6199 = vmatprep.subr.mxu0 0.0
  %6200 = vmatpush1.msra.mxu0 0.0
  %6201 = vmatprep.subr.mxu0 0.0
  %6202 = vmatpush1.msra.mxu0 0.0
  %6203 = vmatprep.subr.mxu0 0.0
  %6204 = vmatpush1.msra.mxu0 0.0
  %6205 = vmatprep.subr.mxu0 0.0
  %6206 = vmatpush1.msra.mxu0 0.0
  %6207 = vmatprep.subr.mxu0 0.0
  %6208 = vmatpush1.msra.mxu0 0.0
  %6209 = vmatprep.subr.mxu0 0.0
  %6210 = vmatpush1.msra.mxu0 0.0
  %6211 = vmatprep.subr.mxu0 0.0
  %6212 = vmatpush1.msra.mxu0 0.0
  %6213 = vmatprep.subr.mxu0 0.0
  %6214 = vmatpush1.msra.mxu0 0.0
  %6215 = vmatprep.subr.mxu0 0.0
  %6216 = vmatpush1.msra.mxu0 0.0
  %6217 = vmatprep.subr.mxu0 0.0
  %6218 = vmatpush1.msra.mxu0 0.0
  %6219 = vmatprep.subr.mxu0 0.0
  %6220 = vmatpush1.msra.mxu0 0.0
  %6221 = vmatprep.subr.mxu0 0.0
  %6222 = vmatpush1.msra.mxu0 0.0
  %6223 = vmatprep.subr.mxu0 0.0
  %6224 = vmatpush1.msra.mxu0 0.0
  %6225 = vmatprep.subr.mxu0 0.0
  %6226 = vmatpush1.msra.mxu0 0.0
  %6227 = vmatprep.subr.mxu0 0.0
  %6228 = vmatpush1.msra.mxu0 0.0
  %6229 = vmatprep.subr.mxu0 0.0
  %6230 = vmatpush1.msra.mxu0 0.0
  %6231 = vmatprep.subr.mxu0 0.0
  %6232 = vmatpush1.msra.mxu0 0.0
  %6233 = vmatprep.mubr.f32.mxu0 0.0
  %6234 = vmatmul.mubr.f32.gmra.mrb[0].mxu0 %v6167
  %v6235 = vpop.f32.mrb[0].mxu0
  %v6236 = vadd.f32 %v6165, %v6235
  %v6237 = vpop.f32.mrb[0].mxu0
  %6238 = vdwg.mxu0
  %vm6239 = vcmp.gt.f32.partialorder %v6236, 0.0
  %v6240 = vmin.f32 %v6236, 0.0
  %v6241 = vmul.f32 %v6240, 1.442695
  %v6242 = vpow.pop %v6241
  %v6243 = vsub.f32 %v6242, 1.0
  %v6244 = vsel %vm6239, %v6236, %v6243
  %v6246 = vrot.slane %v6244, 1
  %v6247 = vrot.slane %v6244, 2
  %v6248 = vrot.slane %v6244, 3
  %v6249 = vrot.slane %v6244, 4
  %v6250 = vrot.slane %v6244, 5
  %v6251 = vrot.slane %v6244, 6
  %v6252 = vrot.slane %v6244, 7
  %v6261 = vadd.f32 %v6133, %v6244
  %v6262 = vadd.f32 %v6134, %v6246
  %v6263 = vadd.f32 %v6135, %v6247
  %v6264 = vadd.f32 %v6136, %v6248
  %v6265 = vadd.f32 %v6137, %v6249
  %v6266 = vadd.f32 %v6138, %v6250
  %v6267 = vadd.f32 %v6139, %v6251
  %v6268 = vadd.f32 %v6140, %v6252
  %v6277 = vrot.slane %v6262, 7
  %v6278 = vsel %vm2152, %v6277, %v6261
  %v6279 = vrot.slane %v6263, 6
  %v6280 = vsel %vm2155, %v6279, %v6278
  %v6281 = vrot.slane %v6264, 5
  %v6282 = vsel %vm2158, %v6281, %v6280
  %v6283 = vrot.slane %v6265, 4
  %v6284 = vsel %vm2161, %v6283, %v6282
  %v6285 = vrot.slane %v6266, 3
  %v6286 = vsel %vm2164, %v6285, %v6284
  %v6287 = vrot.slane %v6267, 2
  %v6288 = vsel %vm2167, %v6287, %v6286
  %v6289 = vrot.slane %v6268, 1
  %v6290 = vsel %vm2170, %v6289, %v6288
  %6292 = vst.msk [vmem:[#allocation3] sm:$0xff] %vm1009, %v6290
  %v6293 = vld [vmem:[#allocation3] sm:$0xff]
  %v6294 = vld [vmem:[%s0 + $0x120] sm:$0x3]
  %v6296 = vsel %vm68, %v6294, 0
  %6298 = vmatprep.subr.mxu0 0.0
  %6299 = vmatpush1.msra.mxu0 %v4426
  %6300 = vmatprep.subr.mxu0 0.0
  %6301 = vmatpush1.msra.mxu0 %v4427
  %6302 = vmatprep.subr.mxu0 0.0
  %6303 = vmatpush1.msra.mxu0 0.0
  %6304 = vmatprep.subr.mxu0 0.0
  %6305 = vmatpush1.msra.mxu0 0.0
  %6306 = vmatprep.subr.mxu0 0.0
  %6307 = vmatpush1.msra.mxu0 0.0
  %6308 = vmatprep.subr.mxu0 0.0
  %6309 = vmatpush1.msra.mxu0 0.0
  %6310 = vmatprep.subr.mxu0 0.0
  %6311 = vmatpush1.msra.mxu0 0.0
  %6312 = vmatprep.subr.mxu0 0.0
  %6313 = vmatpush1.msra.mxu0 0.0
  %6314 = vmatprep.subr.mxu0 0.0
  %6315 = vmatpush1.msra.mxu0 0.0
  %6316 = vmatprep.subr.mxu0 0.0
  %6317 = vmatpush1.msra.mxu0 0.0
  %6318 = vmatprep.subr.mxu0 0.0
  %6319 = vmatpush1.msra.mxu0 0.0
  %6320 = vmatprep.subr.mxu0 0.0
  %6321 = vmatpush1.msra.mxu0 0.0
  %6322 = vmatprep.subr.mxu0 0.0
  %6323 = vmatpush1.msra.mxu0 0.0
  %6324 = vmatprep.subr.mxu0 0.0
  %6325 = vmatpush1.msra.mxu0 0.0
  %6326 = vmatprep.subr.mxu0 0.0
  %6327 = vmatpush1.msra.mxu0 0.0
  %6328 = vmatprep.subr.mxu0 0.0
  %6329 = vmatpush1.msra.mxu0 0.0
  %6330 = vmatprep.subr.mxu0 0.0
  %6331 = vmatpush1.msra.mxu0 0.0
  %6332 = vmatprep.subr.mxu0 0.0
  %6333 = vmatpush1.msra.mxu0 0.0
  %6334 = vmatprep.subr.mxu0 0.0
  %6335 = vmatpush1.msra.mxu0 0.0
  %6336 = vmatprep.subr.mxu0 0.0
  %6337 = vmatpush1.msra.mxu0 0.0
  %6338 = vmatprep.subr.mxu0 0.0
  %6339 = vmatpush1.msra.mxu0 0.0
  %6340 = vmatprep.subr.mxu0 0.0
  %6341 = vmatpush1.msra.mxu0 0.0
  %6342 = vmatprep.subr.mxu0 0.0
  %6343 = vmatpush1.msra.mxu0 0.0
  %6344 = vmatprep.subr.mxu0 0.0
  %6345 = vmatpush1.msra.mxu0 0.0
  %6346 = vmatprep.subr.mxu0 0.0
  %6347 = vmatpush1.msra.mxu0 0.0
  %6348 = vmatprep.subr.mxu0 0.0
  %6349 = vmatpush1.msra.mxu0 0.0
  %6350 = vmatprep.subr.mxu0 0.0
  %6351 = vmatpush1.msra.mxu0 0.0
  %6352 = vmatprep.subr.mxu0 0.0
  %6353 = vmatpush1.msra.mxu0 0.0
  %6354 = vmatprep.subr.mxu0 0.0
  %6355 = vmatpush1.msra.mxu0 0.0
  %6356 = vmatprep.subr.mxu0 0.0
  %6357 = vmatpush1.msra.mxu0 0.0
  %6358 = vmatprep.subr.mxu0 0.0
  %6359 = vmatpush1.msra.mxu0 0.0
  %6360 = vmatprep.subr.mxu0 0.0
  %6361 = vmatpush1.msra.mxu0 0.0
  %6362 = vmatprep.mubr.f32.mxu0 0.0
  %6363 = vmatmul.mubr.f32.gmra.mrb[0].mxu0 %v6296
  %v6364 = vpop.f32.mrb[0].mxu0
  %v6365 = vadd.f32 0.0, %v6364
  %v6366 = vpop.f32.mrb[0].mxu0
  %6367 = vdwg.mxu0
  %v6368 = vld [vmem:[%s0 + $0x178] sm:$0x3]
  %vm6369 = vcmask 64512
  %v6371 = vsel %vm6369, %v6368, 0
  %6373 = vmatprep.subr.mxu0 0.0
  %6374 = vmatpush1.msra.mxu0 %v6293
  %6375 = vmatprep.subr.mxu0 0.0
  %6376 = vmatpush1.msra.mxu0 0.0
  %6377 = vmatprep.subr.mxu0 0.0
  %6378 = vmatpush1.msra.mxu0 0.0
  %6379 = vmatprep.subr.mxu0 0.0
  %6380 = vmatpush1.msra.mxu0 0.0
  %6381 = vmatprep.subr.mxu0 0.0
  %6382 = vmatpush1.msra.mxu0 0.0
  %6383 = vmatprep.subr.mxu0 0.0
  %6384 = vmatpush1.msra.mxu0 0.0
  %6385 = vmatprep.subr.mxu0 0.0
  %6386 = vmatpush1.msra.mxu0 0.0
  %6387 = vmatprep.subr.mxu0 0.0
  %6388 = vmatpush1.msra.mxu0 0.0
  %6389 = vmatprep.subr.mxu0 0.0
  %6390 = vmatpush1.msra.mxu0 0.0
  %6391 = vmatprep.subr.mxu0 0.0
  %6392 = vmatpush1.msra.mxu0 0.0
  %6393 = vmatprep.subr.mxu0 0.0
  %6394 = vmatpush1.msra.mxu0 0.0
  %6395 = vmatprep.subr.mxu0 0.0
  %6396 = vmatpush1.msra.mxu0 0.0
  %6397 = vmatprep.subr.mxu0 0.0
  %6398 = vmatpush1.msra.mxu0 0.0
  %6399 = vmatprep.subr.mxu0 0.0
  %6400 = vmatpush1.msra.mxu0 0.0
  %6401 = vmatprep.subr.mxu0 0.0
  %6402 = vmatpush1.msra.mxu0 0.0
  %6403 = vmatprep.subr.mxu0 0.0
  %6404 = vmatpush1.msra.mxu0 0.0
  %6405 = vmatprep.subr.mxu0 0.0
  %6406 = vmatpush1.msra.mxu0 0.0
  %6407 = vmatprep.subr.mxu0 0.0
  %6408 = vmatpush1.msra.mxu0 0.0
  %6409 = vmatprep.subr.mxu0 0.0
  %6410 = vmatpush1.msra.mxu0 0.0
  %6411 = vmatprep.subr.mxu0 0.0
  %6412 = vmatpush1.msra.mxu0 0.0
  %6413 = vmatprep.subr.mxu0 0.0
  %6414 = vmatpush1.msra.mxu0 0.0
  %6415 = vmatprep.subr.mxu0 0.0
  %6416 = vmatpush1.msra.mxu0 0.0
  %6417 = vmatprep.subr.mxu0 0.0
  %6418 = vmatpush1.msra.mxu0 0.0
  %6419 = vmatprep.subr.mxu0 0.0
  %6420 = vmatpush1.msra.mxu0 0.0
  %6421 = vmatprep.subr.mxu0 0.0
  %6422 = vmatpush1.msra.mxu0 0.0
  %6423 = vmatprep.subr.mxu0 0.0
  %6424 = vmatpush1.msra.mxu0 0.0
  %6425 = vmatprep.subr.mxu0 0.0
  %6426 = vmatpush1.msra.mxu0 0.0
  %6427 = vmatprep.subr.mxu0 0.0
  %6428 = vmatpush1.msra.mxu0 0.0
  %6429 = vmatprep.subr.mxu0 0.0
  %6430 = vmatpush1.msra.mxu0 0.0
  %6431 = vmatprep.subr.mxu0 0.0
  %6432 = vmatpush1.msra.mxu0 0.0
  %6433 = vmatprep.subr.mxu0 0.0
  %6434 = vmatpush1.msra.mxu0 0.0
  %6435 = vmatprep.subr.mxu0 0.0
  %6436 = vmatpush1.msra.mxu0 0.0
  %6437 = vmatprep.mubr.f32.mxu0 0.0
  %6438 = vmatmul.mubr.f32.gmra.mrb[0].mxu0 %v6371
  %v6439 = vpop.f32.mrb[0].mxu0
  %v6440 = vadd.f32 0.0, %v6439
  %v6441 = vpop.f32.mrb[0].mxu0
  %6442 = vdwg.mxu0
  %v6443 = vld [vmem:[%s1 + $0x200] sm:$0x3]
  %v6444 = vld [vmem:[%s1 + $0x1c0] sm:$0xff]
  %v6445 = vld [vmem:[%s1 + $0x1c8] sm:$0xff]
  %v6446 = vld [vmem:[%s1 + $0x1d0] sm:$0xff]
  %v6447 = vld [vmem:[%s1 + $0x1d8] sm:$0xff]
  %v6448 = vld [vmem:[%s1 + $0x1e0] sm:$0xff]
  %v6449 = vld [vmem:[%s1 + $0x1e8] sm:$0xff]
  %v6450 = vld [vmem:[%s1 + $0x1f0] sm:$0xff]
  %v6451 = vld [vmem:[%s1 + $0x1f8] sm:$0xff]
  %v6453 = vsel %vm1009, %v6440, 0
  %6455 = vmatprep.subr.mxu0 0.0
  %6456 = vmatpush1.msra.mxu0 %v6448
  %6457 = vmatprep.subr.mxu0 0.0
  %6458 = vmatpush1.msra.mxu0 %v6449
  %6459 = vmatprep.subr.mxu0 0.0
  %6460 = vmatpush1.msra.mxu0 %v6450
  %6461 = vmatprep.subr.mxu0 0.0
  %6462 = vmatpush1.msra.mxu0 %v6451
  %6463 = vmatprep.subr.mxu0 0.0
  %6464 = vmatpush1.msra.mxu0 0.0
  %6465 = vmatprep.subr.mxu0 0.0
  %6466 = vmatpush1.msra.mxu0 0.0
  %6467 = vmatprep.subr.mxu0 0.0
  %6468 = vmatpush1.msra.mxu0 0.0
  %6469 = vmatprep.subr.mxu0 0.0
  %6470 = vmatpush1.msra.mxu0 0.0
  %6471 = vmatprep.subr.mxu0 0.0
  %6472 = vmatpush1.msra.mxu0 0.0
  %6473 = vmatprep.subr.mxu0 0.0
  %6474 = vmatpush1.msra.mxu0 0.0
  %6475 = vmatprep.subr.mxu0 0.0
  %6476 = vmatpush1.msra.mxu0 0.0
  %6477 = vmatprep.subr.mxu0 0.0
  %6478 = vmatpush1.msra.mxu0 0.0
  %6479 = vmatprep.subr.mxu0 0.0
  %6480 = vmatpush1.msra.mxu0 0.0
  %6481 = vmatprep.subr.mxu0 0.0
  %6482 = vmatpush1.msra.mxu0 0.0
  %6483 = vmatprep.subr.mxu0 0.0
  %6484 = vmatpush1.msra.mxu0 0.0
  %6485 = vmatprep.subr.mxu0 0.0
  %6486 = vmatpush1.msra.mxu0 0.0
  %6487 = vmatprep.subr.mxu0 0.0
  %6488 = vmatpush1.msra.mxu0 0.0
  %6489 = vmatprep.subr.mxu0 0.0
  %6490 = vmatpush1.msra.mxu0 0.0
  %6491 = vmatprep.subr.mxu0 0.0
  %6492 = vmatpush1.msra.mxu0 0.0
  %6493 = vmatprep.subr.mxu0 0.0
  %6494 = vmatpush1.msra.mxu0 0.0
  %6495 = vmatprep.subr.mxu0 0.0
  %6496 = vmatpush1.msra.mxu0 0.0
  %6497 = vmatprep.subr.mxu0 0.0
  %6498 = vmatpush1.msra.mxu0 0.0
  %6499 = vmatprep.subr.mxu0 0.0
  %6500 = vmatpush1.msra.mxu0 0.0
  %6501 = vmatprep.subr.mxu0 0.0
  %6502 = vmatpush1.msra.mxu0 0.0
  %6503 = vmatprep.subr.mxu0 0.0
  %6504 = vmatpush1.msra.mxu0 0.0
  %6505 = vmatprep.subr.mxu0 0.0
  %6506 = vmatpush1.msra.mxu0 0.0
  %6507 = vmatprep.subr.mxu0 0.0
  %6508 = vmatpush1.msra.mxu0 0.0
  %6509 = vmatprep.subr.mxu0 0.0
  %6510 = vmatpush1.msra.mxu0 0.0
  %6511 = vmatprep.subr.mxu0 0.0
  %6512 = vmatpush1.msra.mxu0 0.0
  %6513 = vmatprep.subr.mxu0 0.0
  %6514 = vmatpush1.msra.mxu0 0.0
  %6515 = vmatprep.subr.mxu0 0.0
  %6516 = vmatpush1.msra.mxu0 0.0
  %6517 = vmatprep.subr.mxu0 0.0
  %6518 = vmatpush1.msra.mxu0 0.0
  %6519 = vmatprep.mubr.f32.mxu0 0.0
  %6520 = vmatmul.mubr.f32.gmra.mrb[0].mxu0 %v6453
  %v6521 = vpop.f32.mrb[0].mxu0
  %v6522 = vadd.f32 0.0, %v6521
  %v6523 = vpop.f32.mrb[0].mxu0
  %6524 = vdwg.mxu0
  %v6526 = vsel %vm1009, %v6365, 0
  %6528 = vmatprep.subr.mxu0 0.0
  %6529 = vmatpush1.msra.mxu0 %v6444
  %6530 = vmatprep.subr.mxu0 0.0
  %6531 = vmatpush1.msra.mxu0 %v6445
  %6532 = vmatprep.subr.mxu0 0.0
  %6533 = vmatpush1.msra.mxu0 %v6446
  %6534 = vmatprep.subr.mxu0 0.0
  %6535 = vmatpush1.msra.mxu0 %v6447
  %6536 = vmatprep.subr.mxu0 0.0
  %6537 = vmatpush1.msra.mxu0 0.0
  %6538 = vmatprep.subr.mxu0 0.0
  %6539 = vmatpush1.msra.mxu0 0.0
  %6540 = vmatprep.subr.mxu0 0.0
  %6541 = vmatpush1.msra.mxu0 0.0
  %6542 = vmatprep.subr.mxu0 0.0
  %6543 = vmatpush1.msra.mxu0 0.0
  %6544 = vmatprep.subr.mxu0 0.0
  %6545 = vmatpush1.msra.mxu0 0.0
  %6546 = vmatprep.subr.mxu0 0.0
  %6547 = vmatpush1.msra.mxu0 0.0
  %6548 = vmatprep.subr.mxu0 0.0
  %6549 = vmatpush1.msra.mxu0 0.0
  %6550 = vmatprep.subr.mxu0 0.0
  %6551 = vmatpush1.msra.mxu0 0.0
  %6552 = vmatprep.subr.mxu0 0.0
  %6553 = vmatpush1.msra.mxu0 0.0
  %6554 = vmatprep.subr.mxu0 0.0
  %6555 = vmatpush1.msra.mxu0 0.0
  %6556 = vmatprep.subr.mxu0 0.0
  %6557 = vmatpush1.msra.mxu0 0.0
  %6558 = vmatprep.subr.mxu0 0.0
  %6559 = vmatpush1.msra.mxu0 0.0
  %6560 = vmatprep.subr.mxu0 0.0
  %6561 = vmatpush1.msra.mxu0 0.0
  %6562 = vmatprep.subr.mxu0 0.0
  %6563 = vmatpush1.msra.mxu0 0.0
  %6564 = vmatprep.subr.mxu0 0.0
  %6565 = vmatpush1.msra.mxu0 0.0
  %6566 = vmatprep.subr.mxu0 0.0
  %6567 = vmatpush1.msra.mxu0 0.0
  %6568 = vmatprep.subr.mxu0 0.0
  %6569 = vmatpush1.msra.mxu0 0.0
  %6570 = vmatprep.subr.mxu0 0.0
  %6571 = vmatpush1.msra.mxu0 0.0
  %6572 = vmatprep.subr.mxu0 0.0
  %6573 = vmatpush1.msra.mxu0 0.0
  %6574 = vmatprep.subr.mxu0 0.0
  %6575 = vmatpush1.msra.mxu0 0.0
  %6576 = vmatprep.subr.mxu0 0.0
  %6577 = vmatpush1.msra.mxu0 0.0
  %6578 = vmatprep.subr.mxu0 0.0
  %6579 = vmatpush1.msra.mxu0 0.0
  %6580 = vmatprep.subr.mxu0 0.0
  %6581 = vmatpush1.msra.mxu0 0.0
  %6582 = vmatprep.subr.mxu0 0.0
  %6583 = vmatpush1.msra.mxu0 0.0
  %6584 = vmatprep.subr.mxu0 0.0
  %6585 = vmatpush1.msra.mxu0 0.0
  %6586 = vmatprep.subr.mxu0 0.0
  %6587 = vmatpush1.msra.mxu0 0.0
  %6588 = vmatprep.subr.mxu0 0.0
  %6589 = vmatpush1.msra.mxu0 0.0
  %6590 = vmatprep.subr.mxu0 0.0
  %6591 = vmatpush1.msra.mxu0 0.0
  %6592 = vmatprep.mubr.f32.mxu0 0.0
  %6593 = vmatmul.mubr.f32.gmra.mrb[0].mxu0 %v6526
  %v6594 = vpop.f32.mrb[0].mxu0
  %v6595 = vadd.f32 %v6522, %v6594
  %v6596 = vpop.f32.mrb[0].mxu0
  %6597 = vdwg.mxu0
  %v6598 = vlaneseq
  %v6599 = vshrl.u32 %v6598, 7
  %v6600 = vsub.s32 0, %v6599
  %v6601 = vrot.slane %v6443, %v6600
  %v6602 = vadd.f32 %v6595, %v6601
  %vm6603 = vcmp.gt.f32.partialorder %v6602, 0.0
  %v6604 = vmin.f32 %v6602, 0.0
  %v6605 = vmul.f32 %v6604, 1.442695
  %v6606 = vpow.pop %v6605
  %v6607 = vsub.f32 %v6606, 1.0
  %v6608 = vsel %vm6603, %v6602, %v6607
  %v6609 = vlaneseq
  %v6610 = vshrl.u32 %v6609, 7
  %v6611 = vsub.s32 1, %v6610
  %v6612 = vrot.slane %v6443, %v6611
  %v6613 = vmul.f32 %v6608, %v6612
  %vm6614 = vcmask 254976
  %v6615 = vsel %vm6614, %v6613, 0.0
  %6616 = vadd.xlane.f32.xlu0 %v6615
  %v6617 = vpop.xlane.xlu0 %6616
  %v6618 = vsub.f32 0.0, %v6617
  %v6619 = vmul.f32 %v6618, 1.442695
  %v6620 = vpow.pop %v6619
  %v6621 = vadd.f32 %v6620, 1.0
  %v6622 = vrcp.pop %v6621
  %v6623 = vmul.f32 1.0, %v6622
  %vm6624 = vcmask 1024
  %6625 = vst.msk [vmem:[%s2] sm:$0x3] %vm6624, %v6623
  // Predicated region
  $region10: #{tpu_custom_call.1} parent=0 // pred_check
    _
  $region11: #{tpu_custom_call.1} parent=0 // pred_check_branch
    %6627 = sbr.rel (0) target = $region13
  $region12: #{tpu_custom_call.1} parent=0 // pred_region
    _
  $region13: #{tpu_custom_call.1} parent=0 // pred_fallthru
    _
  // Predicated region
  $region14: #{tpu_custom_call.1} parent=0 // pred_check
    _
  $region15: #{tpu_custom_call.1} parent=0 // pred_check_branch
    %6629 = sbr.rel (0) target = $region17
  $region16: #{tpu_custom_call.1} parent=0 // pred_region
    _
  $region17: #{tpu_custom_call.1} parent=0 // pred_fallthru
    _

</llo_original>
